<compile_context>
chip_gen: v7x
topology: tpu7x:2x2x1
jax: 0.10.0
libtpu: 0.0.40
codegen_flags: <defaults>
</compile_context>

<pallas_src>
import math
import jax
import jax.numpy as jnp
from jax import lax
from jax.experimental import pallas as pl
from jax.experimental.pallas import tpu as pltpu


# ------------------------------ in-kernel helpers ------------------------------

def _layernorm(x, g, b):
    # eps = 1e-12 (BERT default); f32 math.
    mu = jnp.mean(x, axis=-1, keepdims=True)
    d = x - mu
    var = jnp.mean(d * d, axis=-1, keepdims=True)
    return d * lax.rsqrt(var + 1e-12) * g + b


def _gelu(x):
    # TODO(synk): tanh-approx GELU; HF BertModel default "gelu" is the exact erf form.
    return 0.5 * x * (1.0 + jnp.tanh(0.7978845608028654 * (x + 0.044715 * x * x * x)))


# ------------------------------ fused forward kernel ---------------------------

def _build_fused_kernel(cfg, B, S, training):
    H, nH, I, V, L = cfg['hidden'], cfg['heads'], cfg['inter'], cfg['vocab'], cfg['layers']
    dh = H // nH
    M = B * S
    scale = 1.0 / math.sqrt(dh)

    def kernel(*refs):
        it = iter(refs)
        ids_ref = next(it)                       # [M, 1] int32
        mask_ref = next(it)                      # [B, S] f32 (1 = attend)
        tgt_ref = next(it) if training else None  # [M, 1] int32
        word_ref, pt_ref, eg_ref, eb_ref = next(it), next(it), next(it), next(it)
        layer_refs = [tuple(next(it) for _ in range(12)) for _ in range(L)]
        clsw_ref, clsb_ref = next(it), next(it)
        out_ref = next(it)                       # [M, V] probs or [1, 1] loss
        ctx_ref = next(it)                       # VMEM scratch [M, H] f32

        # ---- hoisted invariants (reused across layers / head & CE one-hots) ----
        col = lax.broadcasted_iota(jnp.int32, (M, V), 1)                   # [M, V]
        neg = (1.0 - mask_ref[...]) * (-1e9)                               # [B, S]
        neg_rows = [neg[bb:bb + 1, :] for bb in range(B)]                  # B x [1, S]

        # ---- embeddings: one-hot gather on the MXU + pos/type add + LayerNorm ----
        onehot = (col == ids_ref[...]).astype(jnp.bfloat16)
        h = jnp.dot(onehot, word_ref[...], preferred_element_type=jnp.float32)
        h = _layernorm(h + pt_ref[...], eg_ref[...], eb_ref[...])          # [M, H] f32

        for lrefs in layer_refs:
            (wqkv, bqkv, wo, bo, g1, b1,
             wi, bi, wo2, bo2, g2, b2) = (r[...] for r in lrefs)

            # fused QKV projection: one [M,H] @ [H,3H] MXU pass
            qkv = jnp.dot(h.astype(jnp.bfloat16), wqkv,
                          preferred_element_type=jnp.float32) + bqkv       # [M, 3H]

            # attention, statically unrolled over (batch, head); head split is
            # pure slicing — nothing leaves VMEM.
            for bb in range(B):
                r0 = bb * S
                nb = neg_rows[bb]                                          # [1, S]
                for hh in range(nH):
                    c0 = hh * dh
                    qb = qkv[r0:r0 + S, c0:c0 + dh].astype(jnp.bfloat16)
                    kb = qkv[r0:r0 + S, H + c0:H + c0 + dh].astype(jnp.bfloat16)
                    vb = qkv[r0:r0 + S, 2 * H + c0:2 * H + c0 + dh].astype(jnp.bfloat16)
                    s = lax.dot_general(qb, kb, (((1,), (1,)), ((), ())),
                                        preferred_element_type=jnp.float32) * scale
                    s = s + nb
                    s = s - jnp.max(s, axis=-1, keepdims=True)
                    p = jnp.exp(s)
                    p = p * pl.reciprocal(jnp.sum(p, axis=-1, keepdims=True),
                                          approx=True)
                    ctx_ref[r0:r0 + S, c0:c0 + dh] = jnp.dot(
                        p.astype(jnp.bfloat16), vb,
                        preferred_element_type=jnp.float32)

            ctx = ctx_ref[...]
            attn = jnp.dot(ctx.astype(jnp.bfloat16), wo,
                           preferred_element_type=jnp.float32) + bo
            h = _layernorm(attn + h, g1, b1)
            inter = _gelu(jnp.dot(h.astype(jnp.bfloat16), wi,
                                  preferred_element_type=jnp.float32) + bi)
            ffn = jnp.dot(inter.astype(jnp.bfloat16), wo2,
                          preferred_element_type=jnp.float32) + bo2
            h = _layernorm(ffn + h, g2, b2)

        # ---- classification head fused with softmax / cross-entropy ----
        logits = jnp.dot(h.astype(jnp.bfloat16), clsw_ref[...],
                         preferred_element_type=jnp.float32) + clsb_ref[...]  # [M, V]

        if training:
            tgt = tgt_ref[...]                                             # [M, 1]
            m = jnp.max(logits, axis=-1, keepdims=True)
            lse = jnp.log(jnp.sum(jnp.exp(logits - m), axis=-1, keepdims=True)) + m
            tlogit = jnp.sum(logits * (col == tgt).astype(jnp.float32),
                             axis=-1, keepdims=True)
            valid = (tgt != -100).astype(jnp.float32)                      # ignore_index
            per = (lse - tlogit) * valid
            out_ref[...] = (jnp.sum(per, axis=0, keepdims=True) /
                            jnp.maximum(jnp.sum(valid, axis=0, keepdims=True), 1.0))
        else:
            z = logits - jnp.max(logits, axis=-1, keepdims=True)
            e = jnp.exp(z)
            out_ref[...] = e * pl.reciprocal(jnp.sum(e, axis=-1, keepdims=True),
                                             approx=True)

    return kernel


# ------------------------------ params + wrapper -------------------------------

def init_params(key, cfg):
    H, V, I = cfg['hidden'], cfg['vocab'], cfg['inter']
    keys = iter(jax.random.split(key, 8 + 12 * cfg['layers']))

    def nrm(shape, dtype=jnp.bfloat16):
        # MXU operands stored in bf16 (halves DMA bytes / VMEM footprint).
        return (0.02 * jax.random.normal(next(keys), shape, dtype=jnp.float32)).astype(dtype)

    params = dict(
        word_emb=nrm((V, H)),                                   # bf16 MXU operand
        pos_emb=nrm((cfg['max_pos'], H), jnp.float32),
        type_emb=nrm((cfg['type_vocab'], H), jnp.float32),
        emb_ln_g=jnp.ones((1, H), jnp.float32),
        emb_ln_b=jnp.zeros((1, H), jnp.float32),
        cls_w=nrm((H, V)),                                      # nn.Linear(H, V) as [in, out]
        cls_b=jnp.zeros((1, V), jnp.float32),
        layers=[],
    )
    for _ in range(cfg['layers']):
        params['layers'].append(dict(
            w_qkv=nrm((H, 3 * H)), b_qkv=jnp.zeros((1, 3 * H), jnp.float32),
            wo=nrm((H, H)), bo=jnp.zeros((1, H), jnp.float32),
            ln1_g=jnp.ones((1, H), jnp.float32), ln1_b=jnp.zeros((1, H), jnp.float32),
            wi=nrm((H, I)), bi=jnp.zeros((1, I), jnp.float32),
            wo2=nrm((I, H)), bo2=jnp.zeros((1, H), jnp.float32),
            ln2_g=jnp.ones((1, H), jnp.float32), ln2_b=jnp.zeros((1, H), jnp.float32),
        ))
    return params


def language_model_forward(params, x_ids, target=None, mask=None, cfg=None):
    B, S = x_ids.shape
    H, V = cfg['hidden'], cfg['vocab']
    training = target is not None
    if mask is None:
        mask = jnp.ones((B, S), dtype=jnp.float32)

    ids = x_ids.reshape(B * S, 1).astype(jnp.int32)
    # position + segment-0 embedding rows, precomputed once (param-only math).
    # TODO(synk): token_type_ids are assumed all-zero (the reference never passes them).
    pos_type = params['pos_emb'][:S] + params['type_emb'][0:1]             # [S, H]
    pos_type = jnp.tile(pos_type, (B, 1))                                  # [B*S, H]

    inputs = [ids, mask.astype(jnp.float32)]
    if training:
        inputs.append(target.reshape(B * S, 1).astype(jnp.int32))
    inputs += [params['word_emb'], pos_type, params['emb_ln_g'], params['emb_ln_b']]
    for lp in params['layers']:
        inputs += [lp['w_qkv'], lp['b_qkv'], lp['wo'], lp['bo'],
                   lp['ln1_g'], lp['ln1_b'], lp['wi'], lp['bi'],
                   lp['wo2'], lp['bo2'], lp['ln2_g'], lp['ln2_b']]
    inputs += [params['cls_w'], params['cls_b']]

    out_sh = (1, 1) if training else (B * S, V)
    kernel = _build_fused_kernel(cfg, B, S, training)

    out = pl.pallas_call(
        kernel,
        grid=(1,),
        in_specs=[pl.BlockSpec(a.shape, lambda i, n=a.ndim: (0,) * n) for a in inputs],
        out_specs=pl.BlockSpec(out_sh, lambda i: (0, 0)),
        out_shape=jax.ShapeDtypeStruct(out_sh, jnp.float32),
        scratch_shapes=[pltpu.VMEM((B * S, H), jnp.float32)],
        compiler_params=pltpu.CompilerParams(dimension_semantics=("arbitrary",)),
    )(*inputs)

    if training:
        return out[0, 0]
    return out.reshape(B, S, V)
    # TODO(synk): BERT pooler output and dropout are unused/inactive in
    # LanguageModel.forward and therefore omitted.


# ----------------------------------- main -----------------------------------

if __name__ == "__main__":
    cfg = dict(hidden=32, heads=2, layers=2, inter=64,
               vocab=128, max_pos=16, type_vocab=2)
    B, S = 2, 8

    root = jax.random.PRNGKey(0)
    kp, kx, kt = jax.random.split(root, 3)
    params = init_params(kp, cfg)
    x = jax.random.randint(kx, (B, S), 0, cfg['vocab'], dtype=jnp.int32)
    target = jax.random.randint(kt, (B, S), 0, cfg['vocab'], dtype=jnp.int32)
    mask = jnp.ones((B, S), dtype=jnp.float32)

    # Inference branch: softmax over vocab (single fused kernel).
    probs = language_model_forward(params, x, cfg=cfg)
    # Training branch: mean cross-entropy loss with attention mask (single fused kernel).
    loss = language_model_forward(params, x, target=target, mask=mask, cfg=cfg)

    jax.block_until_ready((probs, loss))
    assert probs.shape == (B, S, cfg['vocab'])
    assert loss.shape == ()
    assert bool(jnp.isfinite(loss))
    row_sums = jnp.sum(probs, axis=-1)
    assert bool(jnp.all(jnp.abs(row_sums - 1.0) < 1e-2))
    print("KERNEL_OK")
</pallas_src>

<mosaic_0001>
module attributes {stable_mosaic.version = 11 : i64} {
  func.func @kernel(%arg0: i32, %arg1: memref<16x1xi32, #tpu.memory_space<vmem>>, %arg2: memref<2x8xf32, #tpu.memory_space<vmem>>, %arg3: memref<128x32xbf16, #tpu.memory_space<vmem>>, %arg4: memref<16x32xf32, #tpu.memory_space<vmem>>, %arg5: memref<1x32xf32, #tpu.memory_space<vmem>>, %arg6: memref<1x32xf32, #tpu.memory_space<vmem>>, %arg7: memref<32x96xbf16, #tpu.memory_space<vmem>>, %arg8: memref<1x96xf32, #tpu.memory_space<vmem>>, %arg9: memref<32x32xbf16, #tpu.memory_space<vmem>>, %arg10: memref<1x32xf32, #tpu.memory_space<vmem>>, %arg11: memref<1x32xf32, #tpu.memory_space<vmem>>, %arg12: memref<1x32xf32, #tpu.memory_space<vmem>>, %arg13: memref<32x64xbf16, #tpu.memory_space<vmem>>, %arg14: memref<1x64xf32, #tpu.memory_space<vmem>>, %arg15: memref<64x32xbf16, #tpu.memory_space<vmem>>, %arg16: memref<1x32xf32, #tpu.memory_space<vmem>>, %arg17: memref<1x32xf32, #tpu.memory_space<vmem>>, %arg18: memref<1x32xf32, #tpu.memory_space<vmem>>, %arg19: memref<32x96xbf16, #tpu.memory_space<vmem>>, %arg20: memref<1x96xf32, #tpu.memory_space<vmem>>, %arg21: memref<32x32xbf16, #tpu.memory_space<vmem>>, %arg22: memref<1x32xf32, #tpu.memory_space<vmem>>, %arg23: memref<1x32xf32, #tpu.memory_space<vmem>>, %arg24: memref<1x32xf32, #tpu.memory_space<vmem>>, %arg25: memref<32x64xbf16, #tpu.memory_space<vmem>>, %arg26: memref<1x64xf32, #tpu.memory_space<vmem>>, %arg27: memref<64x32xbf16, #tpu.memory_space<vmem>>, %arg28: memref<1x32xf32, #tpu.memory_space<vmem>>, %arg29: memref<1x32xf32, #tpu.memory_space<vmem>>, %arg30: memref<1x32xf32, #tpu.memory_space<vmem>>, %arg31: memref<32x128xbf16, #tpu.memory_space<vmem>>, %arg32: memref<1x128xf32, #tpu.memory_space<vmem>>, %arg33: memref<16x128xf32, #tpu.memory_space<vmem>>, %arg34: memref<16x32xf32, #tpu.memory_space<vmem>>) attributes {dimension_semantics = [#tpu.dimension_semantics<arbitrary>], iteration_bounds = array<i64: 1>, scalar_prefetch = 0 : i64, scratch_operands = 1 : i64, tpu.core_type = #tpu.core_type<tc>, window_params = [{pipeline_mode = #tpu.pipeline_mode<synchronous>, transform_indices = @transform_0, window_bounds = array<i64: 16, 1>}, {pipeline_mode = #tpu.pipeline_mode<synchronous>, transform_indices = @transform_1, window_bounds = array<i64: 2, 8>}, {pipeline_mode = #tpu.pipeline_mode<synchronous>, transform_indices = @transform_2, window_bounds = array<i64: 128, 32>}, {pipeline_mode = #tpu.pipeline_mode<synchronous>, transform_indices = @transform_3, window_bounds = array<i64: 16, 32>}, {pipeline_mode = #tpu.pipeline_mode<synchronous>, transform_indices = @transform_4, window_bounds = array<i64: 1, 32>}, {pipeline_mode = #tpu.pipeline_mode<synchronous>, transform_indices = @transform_5, window_bounds = array<i64: 1, 32>}, {pipeline_mode = #tpu.pipeline_mode<synchronous>, transform_indices = @transform_6, window_bounds = array<i64: 32, 96>}, {pipeline_mode = #tpu.pipeline_mode<synchronous>, transform_indices = @transform_7, window_bounds = array<i64: 1, 96>}, {pipeline_mode = #tpu.pipeline_mode<synchronous>, transform_indices = @transform_8, window_bounds = array<i64: 32, 32>}, {pipeline_mode = #tpu.pipeline_mode<synchronous>, transform_indices = @transform_9, window_bounds = array<i64: 1, 32>}, {pipeline_mode = #tpu.pipeline_mode<synchronous>, transform_indices = @transform_10, window_bounds = array<i64: 1, 32>}, {pipeline_mode = #tpu.pipeline_mode<synchronous>, transform_indices = @transform_11, window_bounds = array<i64: 1, 32>}, {pipeline_mode = #tpu.pipeline_mode<synchronous>, transform_indices = @transform_12, window_bounds = array<i64: 32, 64>}, {pipeline_mode = #tpu.pipeline_mode<synchronous>, transform_indices = @transform_13, window_bounds = array<i64: 1, 64>}, {pipeline_mode = #tpu.pipeline_mode<synchronous>, transform_indices = @transform_14, window_bounds = array<i64: 64, 32>}, {pipeline_mode = #tpu.pipeline_mode<synchronous>, transform_indices = @transform_15, window_bounds = array<i64: 1, 32>}, {pipeline_mode = #tpu.pipeline_mode<synchronous>, transform_indices = @transform_16, window_bounds = array<i64: 1, 32>}, {pipeline_mode = #tpu.pipeline_mode<synchronous>, transform_indices = @transform_17, window_bounds = array<i64: 1, 32>}, {pipeline_mode = #tpu.pipeline_mode<synchronous>, transform_indices = @transform_18, window_bounds = array<i64: 32, 96>}, {pipeline_mode = #tpu.pipeline_mode<synchronous>, transform_indices = @transform_19, window_bounds = array<i64: 1, 96>}, {pipeline_mode = #tpu.pipeline_mode<synchronous>, transform_indices = @transform_20, window_bounds = array<i64: 32, 32>}, {pipeline_mode = #tpu.pipeline_mode<synchronous>, transform_indices = @transform_21, window_bounds = array<i64: 1, 32>}, {pipeline_mode = #tpu.pipeline_mode<synchronous>, transform_indices = @transform_22, window_bounds = array<i64: 1, 32>}, {pipeline_mode = #tpu.pipeline_mode<synchronous>, transform_indices = @transform_23, window_bounds = array<i64: 1, 32>}, {pipeline_mode = #tpu.pipeline_mode<synchronous>, transform_indices = @transform_24, window_bounds = array<i64: 32, 64>}, {pipeline_mode = #tpu.pipeline_mode<synchronous>, transform_indices = @transform_25, window_bounds = array<i64: 1, 64>}, {pipeline_mode = #tpu.pipeline_mode<synchronous>, transform_indices = @transform_26, window_bounds = array<i64: 64, 32>}, {pipeline_mode = #tpu.pipeline_mode<synchronous>, transform_indices = @transform_27, window_bounds = array<i64: 1, 32>}, {pipeline_mode = #tpu.pipeline_mode<synchronous>, transform_indices = @transform_28, window_bounds = array<i64: 1, 32>}, {pipeline_mode = #tpu.pipeline_mode<synchronous>, transform_indices = @transform_29, window_bounds = array<i64: 1, 32>}, {pipeline_mode = #tpu.pipeline_mode<synchronous>, transform_indices = @transform_30, window_bounds = array<i64: 32, 128>}, {pipeline_mode = #tpu.pipeline_mode<synchronous>, transform_indices = @transform_31, window_bounds = array<i64: 1, 128>}, {pipeline_mode = #tpu.pipeline_mode<synchronous>, transform_indices = @transform_32, window_bounds = array<i64: 16, 128>}]} {
    %0 = tpu.iota {dimensions = array<i32: 1>} : vector<16x128xi32>
    %c0 = arith.constant 0 : index
    %c0_0 = arith.constant 0 : index
    %1 = vector.load %arg2[%c0, %c0_0] : memref<2x8xf32, #tpu.memory_space<vmem>>, vector<2x8xf32>
    %cst = arith.constant 1.000000e+00 : f32
    %2 = vector.broadcast %cst : f32 to vector<2x8xf32>
    %3 = arith.subf %2, %1 : vector<2x8xf32>
    %cst_1 = arith.constant -1.000000e+09 : f32
    %4 = vector.broadcast %cst_1 : f32 to vector<2x8xf32>
    %5 = arith.mulf %3, %4 : vector<2x8xf32>
    %6 = vector.extract_strided_slice %5 {offsets = [0, 0], sizes = [1, 8], strides = [1, 1]} : vector<2x8xf32> to vector<1x8xf32>
    %7 = vector.extract_strided_slice %5 {offsets = [1, 0], sizes = [1, 8], strides = [1, 1]} : vector<2x8xf32> to vector<1x8xf32>
    %c0_2 = arith.constant 0 : index
    %c0_3 = arith.constant 0 : index
    %8 = vector.load %arg1[%c0_2, %c0_3] : memref<16x1xi32, #tpu.memory_space<vmem>>, vector<16x1xi32>
    %9 = vector.broadcast %8 : vector<16x1xi32> to vector<16x128xi32>
    %10 = arith.cmpi eq, %0, %9 : vector<16x128xi32>
    %11 = arith.extui %10 : vector<16x128xi1> to vector<16x128xi32>
    %12 = arith.sitofp %11 : vector<16x128xi32> to vector<16x128xf32>
    %13 = arith.truncf %12 : vector<16x128xf32> to vector<16x128xbf16>
    %c0_4 = arith.constant 0 : index
    %c0_5 = arith.constant 0 : index
    %14 = vector.load %arg3[%c0_4, %c0_5] : memref<128x32xbf16, #tpu.memory_space<vmem>>, vector<128x32xbf16>
    %cst_6 = arith.constant dense<0.000000e+00> : vector<16x32xf32>
    %15 = tpu.matmul %13, %14, %cst_6 {dimension_numbers = #tpu.dot_dimension_numbers<[1], [0], [0], [1], [0, 0, 1, 1], [], []>} : vector<16x128xbf16>, vector<128x32xbf16>, vector<16x32xf32> -> vector<16x32xf32>
    %c0_7 = arith.constant 0 : index
    %c0_8 = arith.constant 0 : index
    %16 = vector.load %arg4[%c0_7, %c0_8] : memref<16x32xf32, #tpu.memory_space<vmem>>, vector<16x32xf32>
    %17 = arith.addf %15, %16 : vector<16x32xf32>
    %c0_9 = arith.constant 0 : index
    %c0_10 = arith.constant 0 : index
    %18 = vector.load %arg5[%c0_9, %c0_10] : memref<1x32xf32, #tpu.memory_space<vmem>>, vector<1x32xf32>
    %c0_11 = arith.constant 0 : index
    %c0_12 = arith.constant 0 : index
    %19 = vector.load %arg6[%c0_11, %c0_12] : memref<1x32xf32, #tpu.memory_space<vmem>>, vector<1x32xf32>
    %cst_13 = arith.constant dense<0.000000e+00> : vector<16xf32>
    %20 = vector.multi_reduction <add>, %17, %cst_13 [1] : vector<16x32xf32> to vector<16xf32>
    %21 = vector.shape_cast %20 : vector<16xf32> to vector<16x1xf32>
    %cst_14 = arith.constant 3.200000e+01 : f32
    %22 = vector.broadcast %cst_14 : f32 to vector<16x1xf32>
    %23 = arith.divf %21, %22 : vector<16x1xf32>
    %24 = vector.broadcast %23 : vector<16x1xf32> to vector<16x32xf32>
    %25 = arith.subf %17, %24 : vector<16x32xf32>
    %26 = arith.mulf %25, %25 : vector<16x32xf32>
    %cst_15 = arith.constant dense<0.000000e+00> : vector<16xf32>
    %27 = vector.multi_reduction <add>, %26, %cst_15 [1] : vector<16x32xf32> to vector<16xf32>
    %28 = vector.shape_cast %27 : vector<16xf32> to vector<16x1xf32>
    %cst_16 = arith.constant 3.200000e+01 : f32
    %29 = vector.broadcast %cst_16 : f32 to vector<16x1xf32>
    %30 = arith.divf %28, %29 : vector<16x1xf32>
    %cst_17 = arith.constant 9.99999996E-13 : f32
    %31 = vector.broadcast %cst_17 : f32 to vector<16x1xf32>
    %32 = arith.addf %30, %31 : vector<16x1xf32>
    %33 = math.rsqrt %32 : vector<16x1xf32>
    %34 = vector.broadcast %33 : vector<16x1xf32> to vector<16x32xf32>
    %35 = arith.mulf %25, %34 : vector<16x32xf32>
    %36 = vector.broadcast %18 : vector<1x32xf32> to vector<16x32xf32>
    %37 = arith.mulf %35, %36 : vector<16x32xf32>
    %38 = vector.broadcast %19 : vector<1x32xf32> to vector<16x32xf32>
    %39 = arith.addf %37, %38 : vector<16x32xf32>
    %c0_18 = arith.constant 0 : index
    %c0_19 = arith.constant 0 : index
    %40 = vector.load %arg7[%c0_18, %c0_19] : memref<32x96xbf16, #tpu.memory_space<vmem>>, vector<32x96xbf16>
    %c0_20 = arith.constant 0 : index
    %c0_21 = arith.constant 0 : index
    %41 = vector.load %arg8[%c0_20, %c0_21] : memref<1x96xf32, #tpu.memory_space<vmem>>, vector<1x96xf32>
    %c0_22 = arith.constant 0 : index
    %c0_23 = arith.constant 0 : index
    %42 = vector.load %arg9[%c0_22, %c0_23] : memref<32x32xbf16, #tpu.memory_space<vmem>>, vector<32x32xbf16>
    %c0_24 = arith.constant 0 : index
    %c0_25 = arith.constant 0 : index
    %43 = vector.load %arg10[%c0_24, %c0_25] : memref<1x32xf32, #tpu.memory_space<vmem>>, vector<1x32xf32>
    %c0_26 = arith.constant 0 : index
    %c0_27 = arith.constant 0 : index
    %44 = vector.load %arg11[%c0_26, %c0_27] : memref<1x32xf32, #tpu.memory_space<vmem>>, vector<1x32xf32>
    %c0_28 = arith.constant 0 : index
    %c0_29 = arith.constant 0 : index
    %45 = vector.load %arg12[%c0_28, %c0_29] : memref<1x32xf32, #tpu.memory_space<vmem>>, vector<1x32xf32>
    %c0_30 = arith.constant 0 : index
    %c0_31 = arith.constant 0 : index
    %46 = vector.load %arg13[%c0_30, %c0_31] : memref<32x64xbf16, #tpu.memory_space<vmem>>, vector<32x64xbf16>
    %c0_32 = arith.constant 0 : index
    %c0_33 = arith.constant 0 : index
    %47 = vector.load %arg14[%c0_32, %c0_33] : memref<1x64xf32, #tpu.memory_space<vmem>>, vector<1x64xf32>
    %c0_34 = arith.constant 0 : index
    %c0_35 = arith.constant 0 : index
    %48 = vector.load %arg15[%c0_34, %c0_35] : memref<64x32xbf16, #tpu.memory_space<vmem>>, vector<64x32xbf16>
    %c0_36 = arith.constant 0 : index
    %c0_37 = arith.constant 0 : index
    %49 = vector.load %arg16[%c0_36, %c0_37] : memref<1x32xf32, #tpu.memory_space<vmem>>, vector<1x32xf32>
    %c0_38 = arith.constant 0 : index
    %c0_39 = arith.constant 0 : index
    %50 = vector.load %arg17[%c0_38, %c0_39] : memref<1x32xf32, #tpu.memory_space<vmem>>, vector<1x32xf32>
    %c0_40 = arith.constant 0 : index
    %c0_41 = arith.constant 0 : index
    %51 = vector.load %arg18[%c0_40, %c0_41] : memref<1x32xf32, #tpu.memory_space<vmem>>, vector<1x32xf32>
    %52 = arith.truncf %39 : vector<16x32xf32> to vector<16x32xbf16>
    %cst_42 = arith.constant dense<0.000000e+00> : vector<16x96xf32>
    %53 = tpu.matmul %52, %40, %cst_42 {dimension_numbers = #tpu.dot_dimension_numbers<[1], [0], [0], [1], [0, 0, 1, 1], [], []>} : vector<16x32xbf16>, vector<32x96xbf16>, vector<16x96xf32> -> vector<16x96xf32>
    %54 = vector.broadcast %41 : vector<1x96xf32> to vector<16x96xf32>
    %55 = arith.addf %53, %54 : vector<16x96xf32>
    %56 = vector.extract_strided_slice %55 {offsets = [0, 0], sizes = [8, 16], strides = [1, 1]} : vector<16x96xf32> to vector<8x16xf32>
    %57 = arith.truncf %56 : vector<8x16xf32> to vector<8x16xbf16>
    %58 = vector.extract_strided_slice %55 {offsets = [0, 32], sizes = [8, 16], strides = [1, 1]} : vector<16x96xf32> to vector<8x16xf32>
    %59 = arith.truncf %58 : vector<8x16xf32> to vector<8x16xbf16>
    %60 = vector.extract_strided_slice %55 {offsets = [0, 64], sizes = [8, 16], strides = [1, 1]} : vector<16x96xf32> to vector<8x16xf32>
    %61 = arith.truncf %60 : vector<8x16xf32> to vector<8x16xbf16>
    %cst_43 = arith.constant dense<0.000000e+00> : vector<8x8xf32>
    %62 = tpu.matmul %57, %59, %cst_43 {dimension_numbers = #tpu.dot_dimension_numbers<[1], [1], [0], [0], [0, 0, 1, 0], [], []>} : vector<8x16xbf16>, vector<8x16xbf16>, vector<8x8xf32> -> vector<8x8xf32>
    %cst_44 = arith.constant 2.500000e-01 : f32
    %63 = vector.broadcast %cst_44 : f32 to vector<8x8xf32>
    %64 = arith.mulf %62, %63 : vector<8x8xf32>
    %65 = vector.broadcast %6 : vector<1x8xf32> to vector<8x8xf32>
    %66 = arith.addf %64, %65 : vector<8x8xf32>
    %cst_45 = arith.constant dense<0xFF800000> : vector<8xf32>
    %67 = vector.multi_reduction <maximumf>, %66, %cst_45 [1] : vector<8x8xf32> to vector<8xf32>
    %68 = vector.shape_cast %67 : vector<8xf32> to vector<8x1xf32>
    %69 = vector.broadcast %68 : vector<8x1xf32> to vector<8x8xf32>
    %70 = arith.subf %66, %69 : vector<8x8xf32>
    %71 = math.exp %70 : vector<8x8xf32>
    %cst_46 = arith.constant dense<0.000000e+00> : vector<8xf32>
    %72 = vector.multi_reduction <add>, %71, %cst_46 [1] : vector<8x8xf32> to vector<8xf32>
    %73 = vector.shape_cast %72 : vector<8xf32> to vector<8x1xf32>
    %74 = tpu.reciprocal %73 {approx = true} : vector<8x1xf32> -> vector<8x1xf32>
    %75 = vector.broadcast %74 : vector<8x1xf32> to vector<8x8xf32>
    %76 = arith.mulf %71, %75 : vector<8x8xf32>
    %77 = arith.truncf %76 : vector<8x8xf32> to vector<8x8xbf16>
    %cst_47 = arith.constant dense<0.000000e+00> : vector<8x16xf32>
    %78 = tpu.matmul %77, %61, %cst_47 {dimension_numbers = #tpu.dot_dimension_numbers<[1], [0], [0], [1], [0, 0, 1, 1], [], []>} : vector<8x8xbf16>, vector<8x16xbf16>, vector<8x16xf32> -> vector<8x16xf32>
    %c0_48 = arith.constant 0 : index
    %c0_49 = arith.constant 0 : index
    %79 = vector.load %arg34[%c0_48, %c0_49] : memref<16x32xf32, #tpu.memory_space<vmem>>, vector<8x16xf32>
    tpu.vector_store %arg34[%c0_48, %c0_49], %78 {strides = array<i32>} : memref<16x32xf32, #tpu.memory_space<vmem>>, vector<8x16xf32>,
    %80 = vector.extract_strided_slice %55 {offsets = [0, 16], sizes = [8, 16], strides = [1, 1]} : vector<16x96xf32> to vector<8x16xf32>
    %81 = arith.truncf %80 : vector<8x16xf32> to vector<8x16xbf16>
    %82 = vector.extract_strided_slice %55 {offsets = [0, 48], sizes = [8, 16], strides = [1, 1]} : vector<16x96xf32> to vector<8x16xf32>
    %83 = arith.truncf %82 : vector<8x16xf32> to vector<8x16xbf16>
    %84 = vector.extract_strided_slice %55 {offsets = [0, 80], sizes = [8, 16], strides = [1, 1]} : vector<16x96xf32> to vector<8x16xf32>
    %85 = arith.truncf %84 : vector<8x16xf32> to vector<8x16xbf16>
    %cst_50 = arith.constant dense<0.000000e+00> : vector<8x8xf32>
    %86 = tpu.matmul %81, %83, %cst_50 {dimension_numbers = #tpu.dot_dimension_numbers<[1], [1], [0], [0], [0, 0, 1, 0], [], []>} : vector<8x16xbf16>, vector<8x16xbf16>, vector<8x8xf32> -> vector<8x8xf32>
    %cst_51 = arith.constant 2.500000e-01 : f32
    %87 = vector.broadcast %cst_51 : f32 to vector<8x8xf32>
    %88 = arith.mulf %86, %87 : vector<8x8xf32>
    %89 = vector.broadcast %6 : vector<1x8xf32> to vector<8x8xf32>
    %90 = arith.addf %88, %89 : vector<8x8xf32>
    %cst_52 = arith.constant dense<0xFF800000> : vector<8xf32>
    %91 = vector.multi_reduction <maximumf>, %90, %cst_52 [1] : vector<8x8xf32> to vector<8xf32>
    %92 = vector.shape_cast %91 : vector<8xf32> to vector<8x1xf32>
    %93 = vector.broadcast %92 : vector<8x1xf32> to vector<8x8xf32>
    %94 = arith.subf %90, %93 : vector<8x8xf32>
    %95 = math.exp %94 : vector<8x8xf32>
    %cst_53 = arith.constant dense<0.000000e+00> : vector<8xf32>
    %96 = vector.multi_reduction <add>, %95, %cst_53 [1] : vector<8x8xf32> to vector<8xf32>
    %97 = vector.shape_cast %96 : vector<8xf32> to vector<8x1xf32>
    %98 = tpu.reciprocal %97 {approx = true} : vector<8x1xf32> -> vector<8x1xf32>
    %99 = vector.broadcast %98 : vector<8x1xf32> to vector<8x8xf32>
    %100 = arith.mulf %95, %99 : vector<8x8xf32>
    %101 = arith.truncf %100 : vector<8x8xf32> to vector<8x8xbf16>
    %cst_54 = arith.constant dense<0.000000e+00> : vector<8x16xf32>
    %102 = tpu.matmul %101, %85, %cst_54 {dimension_numbers = #tpu.dot_dimension_numbers<[1], [0], [0], [1], [0, 0, 1, 1], [], []>} : vector<8x8xbf16>, vector<8x16xbf16>, vector<8x16xf32> -> vector<8x16xf32>
    %c0_55 = arith.constant 0 : index
    %c16 = arith.constant 16 : index
    %103 = vector.load %arg34[%c0_55, %c16] : memref<16x32xf32, #tpu.memory_space<vmem>>, vector<8x16xf32>
    tpu.vector_store %arg34[%c0_55, %c16], %102 {strides = array<i32>} : memref<16x32xf32, #tpu.memory_space<vmem>>, vector<8x16xf32>,
    %104 = vector.extract_strided_slice %55 {offsets = [8, 0], sizes = [8, 16], strides = [1, 1]} : vector<16x96xf32> to vector<8x16xf32>
    %105 = arith.truncf %104 : vector<8x16xf32> to vector<8x16xbf16>
    %106 = vector.extract_strided_slice %55 {offsets = [8, 32], sizes = [8, 16], strides = [1, 1]} : vector<16x96xf32> to vector<8x16xf32>
    %107 = arith.truncf %106 : vector<8x16xf32> to vector<8x16xbf16>
    %108 = vector.extract_strided_slice %55 {offsets = [8, 64], sizes = [8, 16], strides = [1, 1]} : vector<16x96xf32> to vector<8x16xf32>
    %109 = arith.truncf %108 : vector<8x16xf32> to vector<8x16xbf16>
    %cst_56 = arith.constant dense<0.000000e+00> : vector<8x8xf32>
    %110 = tpu.matmul %105, %107, %cst_56 {dimension_numbers = #tpu.dot_dimension_numbers<[1], [1], [0], [0], [0, 0, 1, 0], [], []>} : vector<8x16xbf16>, vector<8x16xbf16>, vector<8x8xf32> -> vector<8x8xf32>
    %cst_57 = arith.constant 2.500000e-01 : f32
    %111 = vector.broadcast %cst_57 : f32 to vector<8x8xf32>
    %112 = arith.mulf %110, %111 : vector<8x8xf32>
    %113 = vector.broadcast %7 : vector<1x8xf32> to vector<8x8xf32>
    %114 = arith.addf %112, %113 : vector<8x8xf32>
    %cst_58 = arith.constant dense<0xFF800000> : vector<8xf32>
    %115 = vector.multi_reduction <maximumf>, %114, %cst_58 [1] : vector<8x8xf32> to vector<8xf32>
    %116 = vector.shape_cast %115 : vector<8xf32> to vector<8x1xf32>
    %117 = vector.broadcast %116 : vector<8x1xf32> to vector<8x8xf32>
    %118 = arith.subf %114, %117 : vector<8x8xf32>
    %119 = math.exp %118 : vector<8x8xf32>
    %cst_59 = arith.constant dense<0.000000e+00> : vector<8xf32>
    %120 = vector.multi_reduction <add>, %119, %cst_59 [1] : vector<8x8xf32> to vector<8xf32>
    %121 = vector.shape_cast %120 : vector<8xf32> to vector<8x1xf32>
    %122 = tpu.reciprocal %121 {approx = true} : vector<8x1xf32> -> vector<8x1xf32>
    %123 = vector.broadcast %122 : vector<8x1xf32> to vector<8x8xf32>
    %124 = arith.mulf %119, %123 : vector<8x8xf32>
    %125 = arith.truncf %124 : vector<8x8xf32> to vector<8x8xbf16>
    %cst_60 = arith.constant dense<0.000000e+00> : vector<8x16xf32>
    %126 = tpu.matmul %125, %109, %cst_60 {dimension_numbers = #tpu.dot_dimension_numbers<[1], [0], [0], [1], [0, 0, 1, 1], [], []>} : vector<8x8xbf16>, vector<8x16xbf16>, vector<8x16xf32> -> vector<8x16xf32>
    %c8 = arith.constant 8 : index
    %c0_61 = arith.constant 0 : index
    %127 = vector.load %arg34[%c8, %c0_61] : memref<16x32xf32, #tpu.memory_space<vmem>>, vector<8x16xf32>
    tpu.vector_store %arg34[%c8, %c0_61], %126 {strides = array<i32>} : memref<16x32xf32, #tpu.memory_space<vmem>>, vector<8x16xf32>,
    %128 = vector.extract_strided_slice %55 {offsets = [8, 16], sizes = [8, 16], strides = [1, 1]} : vector<16x96xf32> to vector<8x16xf32>
    %129 = arith.truncf %128 : vector<8x16xf32> to vector<8x16xbf16>
    %130 = vector.extract_strided_slice %55 {offsets = [8, 48], sizes = [8, 16], strides = [1, 1]} : vector<16x96xf32> to vector<8x16xf32>
    %131 = arith.truncf %130 : vector<8x16xf32> to vector<8x16xbf16>
    %132 = vector.extract_strided_slice %55 {offsets = [8, 80], sizes = [8, 16], strides = [1, 1]} : vector<16x96xf32> to vector<8x16xf32>
    %133 = arith.truncf %132 : vector<8x16xf32> to vector<8x16xbf16>
    %cst_62 = arith.constant dense<0.000000e+00> : vector<8x8xf32>
    %134 = tpu.matmul %129, %131, %cst_62 {dimension_numbers = #tpu.dot_dimension_numbers<[1], [1], [0], [0], [0, 0, 1, 0], [], []>} : vector<8x16xbf16>, vector<8x16xbf16>, vector<8x8xf32> -> vector<8x8xf32>
    %cst_63 = arith.constant 2.500000e-01 : f32
    %135 = vector.broadcast %cst_63 : f32 to vector<8x8xf32>
    %136 = arith.mulf %134, %135 : vector<8x8xf32>
    %137 = vector.broadcast %7 : vector<1x8xf32> to vector<8x8xf32>
    %138 = arith.addf %136, %137 : vector<8x8xf32>
    %cst_64 = arith.constant dense<0xFF800000> : vector<8xf32>
    %139 = vector.multi_reduction <maximumf>, %138, %cst_64 [1] : vector<8x8xf32> to vector<8xf32>
    %140 = vector.shape_cast %139 : vector<8xf32> to vector<8x1xf32>
    %141 = vector.broadcast %140 : vector<8x1xf32> to vector<8x8xf32>
    %142 = arith.subf %138, %141 : vector<8x8xf32>
    %143 = math.exp %142 : vector<8x8xf32>
    %cst_65 = arith.constant dense<0.000000e+00> : vector<8xf32>
    %144 = vector.multi_reduction <add>, %143, %cst_65 [1] : vector<8x8xf32> to vector<8xf32>
    %145 = vector.shape_cast %144 : vector<8xf32> to vector<8x1xf32>
    %146 = tpu.reciprocal %145 {approx = true} : vector<8x1xf32> -> vector<8x1xf32>
    %147 = vector.broadcast %146 : vector<8x1xf32> to vector<8x8xf32>
    %148 = arith.mulf %143, %147 : vector<8x8xf32>
    %149 = arith.truncf %148 : vector<8x8xf32> to vector<8x8xbf16>
    %cst_66 = arith.constant dense<0.000000e+00> : vector<8x16xf32>
    %150 = tpu.matmul %149, %133, %cst_66 {dimension_numbers = #tpu.dot_dimension_numbers<[1], [0], [0], [1], [0, 0, 1, 1], [], []>} : vector<8x8xbf16>, vector<8x16xbf16>, vector<8x16xf32> -> vector<8x16xf32>
    %c8_67 = arith.constant 8 : index
    %c16_68 = arith.constant 16 : index
    %151 = vector.load %arg34[%c8_67, %c16_68] : memref<16x32xf32, #tpu.memory_space<vmem>>, vector<8x16xf32>
    tpu.vector_store %arg34[%c8_67, %c16_68], %150 {strides = array<i32>} : memref<16x32xf32, #tpu.memory_space<vmem>>, vector<8x16xf32>,
    %c0_69 = arith.constant 0 : index
    %c0_70 = arith.constant 0 : index
    %152 = vector.load %arg34[%c0_69, %c0_70] : memref<16x32xf32, #tpu.memory_space<vmem>>, vector<16x32xf32>
    %153 = arith.truncf %152 : vector<16x32xf32> to vector<16x32xbf16>
    %cst_71 = arith.constant dense<0.000000e+00> : vector<16x32xf32>
    %154 = tpu.matmul %153, %42, %cst_71 {dimension_numbers = #tpu.dot_dimension_numbers<[1], [0], [0], [1], [0, 0, 1, 1], [], []>} : vector<16x32xbf16>, vector<32x32xbf16>, vector<16x32xf32> -> vector<16x32xf32>
    %155 = vector.broadcast %43 : vector<1x32xf32> to vector<16x32xf32>
    %156 = arith.addf %154, %155 : vector<16x32xf32>
    %157 = arith.addf %156, %39 : vector<16x32xf32>
    %cst_72 = arith.constant dense<0.000000e+00> : vector<16xf32>
    %158 = vector.multi_reduction <add>, %157, %cst_72 [1] : vector<16x32xf32> to vector<16xf32>
    %159 = vector.shape_cast %158 : vector<16xf32> to vector<16x1xf32>
    %cst_73 = arith.constant 3.200000e+01 : f32
    %160 = vector.broadcast %cst_73 : f32 to vector<16x1xf32>
    %161 = arith.divf %159, %160 : vector<16x1xf32>
    %162 = vector.broadcast %161 : vector<16x1xf32> to vector<16x32xf32>
    %163 = arith.subf %157, %162 : vector<16x32xf32>
    %164 = arith.mulf %163, %163 : vector<16x32xf32>
    %cst_74 = arith.constant dense<0.000000e+00> : vector<16xf32>
    %165 = vector.multi_reduction <add>, %164, %cst_74 [1] : vector<16x32xf32> to vector<16xf32>
    %166 = vector.shape_cast %165 : vector<16xf32> to vector<16x1xf32>
    %cst_75 = arith.constant 3.200000e+01 : f32
    %167 = vector.broadcast %cst_75 : f32 to vector<16x1xf32>
    %168 = arith.divf %166, %167 : vector<16x1xf32>
    %cst_76 = arith.constant 9.99999996E-13 : f32
    %169 = vector.broadcast %cst_76 : f32 to vector<16x1xf32>
    %170 = arith.addf %168, %169 : vector<16x1xf32>
    %171 = math.rsqrt %170 : vector<16x1xf32>
    %172 = vector.broadcast %171 : vector<16x1xf32> to vector<16x32xf32>
    %173 = arith.mulf %163, %172 : vector<16x32xf32>
    %174 = vector.broadcast %44 : vector<1x32xf32> to vector<16x32xf32>
    %175 = arith.mulf %173, %174 : vector<16x32xf32>
    %176 = vector.broadcast %45 : vector<1x32xf32> to vector<16x32xf32>
    %177 = arith.addf %175, %176 : vector<16x32xf32>
    %178 = arith.truncf %177 : vector<16x32xf32> to vector<16x32xbf16>
    %cst_77 = arith.constant dense<0.000000e+00> : vector<16x64xf32>
    %179 = tpu.matmul %178, %46, %cst_77 {dimension_numbers = #tpu.dot_dimension_numbers<[1], [0], [0], [1], [0, 0, 1, 1], [], []>} : vector<16x32xbf16>, vector<32x64xbf16>, vector<16x64xf32> -> vector<16x64xf32>
    %180 = vector.broadcast %47 : vector<1x64xf32> to vector<16x64xf32>
    %181 = arith.addf %179, %180 : vector<16x64xf32>
    %cst_78 = arith.constant 5.000000e-01 : f32
    %182 = vector.broadcast %cst_78 : f32 to vector<16x64xf32>
    %183 = arith.mulf %182, %181 : vector<16x64xf32>
    %cst_79 = arith.constant 4.471500e-02 : f32
    %184 = vector.broadcast %cst_79 : f32 to vector<16x64xf32>
    %185 = arith.mulf %184, %181 : vector<16x64xf32>
    %186 = arith.mulf %185, %181 : vector<16x64xf32>
    %187 = arith.mulf %186, %181 : vector<16x64xf32>
    %188 = arith.addf %181, %187 : vector<16x64xf32>
    %cst_80 = arith.constant 0.797884583 : f32
    %189 = vector.broadcast %cst_80 : f32 to vector<16x64xf32>
    %190 = arith.mulf %189, %188 : vector<16x64xf32>
    %191 = math.tanh %190 : vector<16x64xf32>
    %cst_81 = arith.constant 1.000000e+00 : f32
    %192 = vector.broadcast %cst_81 : f32 to vector<16x64xf32>
    %193 = arith.addf %192, %191 : vector<16x64xf32>
    %194 = arith.mulf %183, %193 : vector<16x64xf32>
    %195 = arith.truncf %194 : vector<16x64xf32> to vector<16x64xbf16>
    %cst_82 = arith.constant dense<0.000000e+00> : vector<16x32xf32>
    %196 = tpu.matmul %195, %48, %cst_82 {dimension_numbers = #tpu.dot_dimension_numbers<[1], [0], [0], [1], [0, 0, 1, 1], [], []>} : vector<16x64xbf16>, vector<64x32xbf16>, vector<16x32xf32> -> vector<16x32xf32>
    %197 = vector.broadcast %49 : vector<1x32xf32> to vector<16x32xf32>
    %198 = arith.addf %196, %197 : vector<16x32xf32>
    %199 = arith.addf %198, %177 : vector<16x32xf32>
    %cst_83 = arith.constant dense<0.000000e+00> : vector<16xf32>
    %200 = vector.multi_reduction <add>, %199, %cst_83 [1] : vector<16x32xf32> to vector<16xf32>
    %201 = vector.shape_cast %200 : vector<16xf32> to vector<16x1xf32>
    %cst_84 = arith.constant 3.200000e+01 : f32
    %202 = vector.broadcast %cst_84 : f32 to vector<16x1xf32>
    %203 = arith.divf %201, %202 : vector<16x1xf32>
    %204 = vector.broadcast %203 : vector<16x1xf32> to vector<16x32xf32>
    %205 = arith.subf %199, %204 : vector<16x32xf32>
    %206 = arith.mulf %205, %205 : vector<16x32xf32>
    %cst_85 = arith.constant dense<0.000000e+00> : vector<16xf32>
    %207 = vector.multi_reduction <add>, %206, %cst_85 [1] : vector<16x32xf32> to vector<16xf32>
    %208 = vector.shape_cast %207 : vector<16xf32> to vector<16x1xf32>
    %cst_86 = arith.constant 3.200000e+01 : f32
    %209 = vector.broadcast %cst_86 : f32 to vector<16x1xf32>
    %210 = arith.divf %208, %209 : vector<16x1xf32>
    %cst_87 = arith.constant 9.99999996E-13 : f32
    %211 = vector.broadcast %cst_87 : f32 to vector<16x1xf32>
    %212 = arith.addf %210, %211 : vector<16x1xf32>
    %213 = math.rsqrt %212 : vector<16x1xf32>
    %214 = vector.broadcast %213 : vector<16x1xf32> to vector<16x32xf32>
    %215 = arith.mulf %205, %214 : vector<16x32xf32>
    %216 = vector.broadcast %50 : vector<1x32xf32> to vector<16x32xf32>
    %217 = arith.mulf %215, %216 : vector<16x32xf32>
    %218 = vector.broadcast %51 : vector<1x32xf32> to vector<16x32xf32>
    %219 = arith.addf %217, %218 : vector<16x32xf32>
    %c0_88 = arith.constant 0 : index
    %c0_89 = arith.constant 0 : index
    %220 = vector.load %arg19[%c0_88, %c0_89] : memref<32x96xbf16, #tpu.memory_space<vmem>>, vector<32x96xbf16>
    %c0_90 = arith.constant 0 : index
    %c0_91 = arith.constant 0 : index
    %221 = vector.load %arg20[%c0_90, %c0_91] : memref<1x96xf32, #tpu.memory_space<vmem>>, vector<1x96xf32>
    %c0_92 = arith.constant 0 : index
    %c0_93 = arith.constant 0 : index
    %222 = vector.load %arg21[%c0_92, %c0_93] : memref<32x32xbf16, #tpu.memory_space<vmem>>, vector<32x32xbf16>
    %c0_94 = arith.constant 0 : index
    %c0_95 = arith.constant 0 : index
    %223 = vector.load %arg22[%c0_94, %c0_95] : memref<1x32xf32, #tpu.memory_space<vmem>>, vector<1x32xf32>
    %c0_96 = arith.constant 0 : index
    %c0_97 = arith.constant 0 : index
    %224 = vector.load %arg23[%c0_96, %c0_97] : memref<1x32xf32, #tpu.memory_space<vmem>>, vector<1x32xf32>
    %c0_98 = arith.constant 0 : index
    %c0_99 = arith.constant 0 : index
    %225 = vector.load %arg24[%c0_98, %c0_99] : memref<1x32xf32, #tpu.memory_space<vmem>>, vector<1x32xf32>
    %c0_100 = arith.constant 0 : index
    %c0_101 = arith.constant 0 : index
    %226 = vector.load %arg25[%c0_100, %c0_101] : memref<32x64xbf16, #tpu.memory_space<vmem>>, vector<32x64xbf16>
    %c0_102 = arith.constant 0 : index
    %c0_103 = arith.constant 0 : index
    %227 = vector.load %arg26[%c0_102, %c0_103] : memref<1x64xf32, #tpu.memory_space<vmem>>, vector<1x64xf32>
    %c0_104 = arith.constant 0 : index
    %c0_105 = arith.constant 0 : index
    %228 = vector.load %arg27[%c0_104, %c0_105] : memref<64x32xbf16, #tpu.memory_space<vmem>>, vector<64x32xbf16>
    %c0_106 = arith.constant 0 : index
    %c0_107 = arith.constant 0 : index
    %229 = vector.load %arg28[%c0_106, %c0_107] : memref<1x32xf32, #tpu.memory_space<vmem>>, vector<1x32xf32>
    %c0_108 = arith.constant 0 : index
    %c0_109 = arith.constant 0 : index
    %230 = vector.load %arg29[%c0_108, %c0_109] : memref<1x32xf32, #tpu.memory_space<vmem>>, vector<1x32xf32>
    %c0_110 = arith.constant 0 : index
    %c0_111 = arith.constant 0 : index
    %231 = vector.load %arg30[%c0_110, %c0_111] : memref<1x32xf32, #tpu.memory_space<vmem>>, vector<1x32xf32>
    %232 = arith.truncf %219 : vector<16x32xf32> to vector<16x32xbf16>
    %cst_112 = arith.constant dense<0.000000e+00> : vector<16x96xf32>
    %233 = tpu.matmul %232, %220, %cst_112 {dimension_numbers = #tpu.dot_dimension_numbers<[1], [0], [0], [1], [0, 0, 1, 1], [], []>} : vector<16x32xbf16>, vector<32x96xbf16>, vector<16x96xf32> -> vector<16x96xf32>
    %234 = vector.broadcast %221 : vector<1x96xf32> to vector<16x96xf32>
    %235 = arith.addf %233, %234 : vector<16x96xf32>
    %236 = vector.extract_strided_slice %235 {offsets = [0, 0], sizes = [8, 16], strides = [1, 1]} : vector<16x96xf32> to vector<8x16xf32>
    %237 = arith.truncf %236 : vector<8x16xf32> to vector<8x16xbf16>
    %238 = vector.extract_strided_slice %235 {offsets = [0, 32], sizes = [8, 16], strides = [1, 1]} : vector<16x96xf32> to vector<8x16xf32>
    %239 = arith.truncf %238 : vector<8x16xf32> to vector<8x16xbf16>
    %240 = vector.extract_strided_slice %235 {offsets = [0, 64], sizes = [8, 16], strides = [1, 1]} : vector<16x96xf32> to vector<8x16xf32>
    %241 = arith.truncf %240 : vector<8x16xf32> to vector<8x16xbf16>
    %cst_113 = arith.constant dense<0.000000e+00> : vector<8x8xf32>
    %242 = tpu.matmul %237, %239, %cst_113 {dimension_numbers = #tpu.dot_dimension_numbers<[1], [1], [0], [0], [0, 0, 1, 0], [], []>} : vector<8x16xbf16>, vector<8x16xbf16>, vector<8x8xf32> -> vector<8x8xf32>
    %cst_114 = arith.constant 2.500000e-01 : f32
    %243 = vector.broadcast %cst_114 : f32 to vector<8x8xf32>
    %244 = arith.mulf %242, %243 : vector<8x8xf32>
    %245 = vector.broadcast %6 : vector<1x8xf32> to vector<8x8xf32>
    %246 = arith.addf %244, %245 : vector<8x8xf32>
    %cst_115 = arith.constant dense<0xFF800000> : vector<8xf32>
    %247 = vector.multi_reduction <maximumf>, %246, %cst_115 [1] : vector<8x8xf32> to vector<8xf32>
    %248 = vector.shape_cast %247 : vector<8xf32> to vector<8x1xf32>
    %249 = vector.broadcast %248 : vector<8x1xf32> to vector<8x8xf32>
    %250 = arith.subf %246, %249 : vector<8x8xf32>
    %251 = math.exp %250 : vector<8x8xf32>
    %cst_116 = arith.constant dense<0.000000e+00> : vector<8xf32>
    %252 = vector.multi_reduction <add>, %251, %cst_116 [1] : vector<8x8xf32> to vector<8xf32>
    %253 = vector.shape_cast %252 : vector<8xf32> to vector<8x1xf32>
    %254 = tpu.reciprocal %253 {approx = true} : vector<8x1xf32> -> vector<8x1xf32>
    %255 = vector.broadcast %254 : vector<8x1xf32> to vector<8x8xf32>
    %256 = arith.mulf %251, %255 : vector<8x8xf32>
    %257 = arith.truncf %256 : vector<8x8xf32> to vector<8x8xbf16>
    %cst_117 = arith.constant dense<0.000000e+00> : vector<8x16xf32>
    %258 = tpu.matmul %257, %241, %cst_117 {dimension_numbers = #tpu.dot_dimension_numbers<[1], [0], [0], [1], [0, 0, 1, 1], [], []>} : vector<8x8xbf16>, vector<8x16xbf16>, vector<8x16xf32> -> vector<8x16xf32>
    %c0_118 = arith.constant 0 : index
    %c0_119 = arith.constant 0 : index
    %259 = vector.load %arg34[%c0_118, %c0_119] : memref<16x32xf32, #tpu.memory_space<vmem>>, vector<8x16xf32>
    tpu.vector_store %arg34[%c0_118, %c0_119], %258 {strides = array<i32>} : memref<16x32xf32, #tpu.memory_space<vmem>>, vector<8x16xf32>,
    %260 = vector.extract_strided_slice %235 {offsets = [0, 16], sizes = [8, 16], strides = [1, 1]} : vector<16x96xf32> to vector<8x16xf32>
    %261 = arith.truncf %260 : vector<8x16xf32> to vector<8x16xbf16>
    %262 = vector.extract_strided_slice %235 {offsets = [0, 48], sizes = [8, 16], strides = [1, 1]} : vector<16x96xf32> to vector<8x16xf32>
    %263 = arith.truncf %262 : vector<8x16xf32> to vector<8x16xbf16>
    %264 = vector.extract_strided_slice %235 {offsets = [0, 80], sizes = [8, 16], strides = [1, 1]} : vector<16x96xf32> to vector<8x16xf32>
    %265 = arith.truncf %264 : vector<8x16xf32> to vector<8x16xbf16>
    %cst_120 = arith.constant dense<0.000000e+00> : vector<8x8xf32>
    %266 = tpu.matmul %261, %263, %cst_120 {dimension_numbers = #tpu.dot_dimension_numbers<[1], [1], [0], [0], [0, 0, 1, 0], [], []>} : vector<8x16xbf16>, vector<8x16xbf16>, vector<8x8xf32> -> vector<8x8xf32>
    %cst_121 = arith.constant 2.500000e-01 : f32
    %267 = vector.broadcast %cst_121 : f32 to vector<8x8xf32>
    %268 = arith.mulf %266, %267 : vector<8x8xf32>
    %269 = vector.broadcast %6 : vector<1x8xf32> to vector<8x8xf32>
    %270 = arith.addf %268, %269 : vector<8x8xf32>
    %cst_122 = arith.constant dense<0xFF800000> : vector<8xf32>
    %271 = vector.multi_reduction <maximumf>, %270, %cst_122 [1] : vector<8x8xf32> to vector<8xf32>
    %272 = vector.shape_cast %271 : vector<8xf32> to vector<8x1xf32>
    %273 = vector.broadcast %272 : vector<8x1xf32> to vector<8x8xf32>
    %274 = arith.subf %270, %273 : vector<8x8xf32>
    %275 = math.exp %274 : vector<8x8xf32>
    %cst_123 = arith.constant dense<0.000000e+00> : vector<8xf32>
    %276 = vector.multi_reduction <add>, %275, %cst_123 [1] : vector<8x8xf32> to vector<8xf32>
    %277 = vector.shape_cast %276 : vector<8xf32> to vector<8x1xf32>
    %278 = tpu.reciprocal %277 {approx = true} : vector<8x1xf32> -> vector<8x1xf32>
    %279 = vector.broadcast %278 : vector<8x1xf32> to vector<8x8xf32>
    %280 = arith.mulf %275, %279 : vector<8x8xf32>
    %281 = arith.truncf %280 : vector<8x8xf32> to vector<8x8xbf16>
    %cst_124 = arith.constant dense<0.000000e+00> : vector<8x16xf32>
    %282 = tpu.matmul %281, %265, %cst_124 {dimension_numbers = #tpu.dot_dimension_numbers<[1], [0], [0], [1], [0, 0, 1, 1], [], []>} : vector<8x8xbf16>, vector<8x16xbf16>, vector<8x16xf32> -> vector<8x16xf32>
    %c0_125 = arith.constant 0 : index
    %c16_126 = arith.constant 16 : index
    %283 = vector.load %arg34[%c0_125, %c16_126] : memref<16x32xf32, #tpu.memory_space<vmem>>, vector<8x16xf32>
    tpu.vector_store %arg34[%c0_125, %c16_126], %282 {strides = array<i32>} : memref<16x32xf32, #tpu.memory_space<vmem>>, vector<8x16xf32>,
    %284 = vector.extract_strided_slice %235 {offsets = [8, 0], sizes = [8, 16], strides = [1, 1]} : vector<16x96xf32> to vector<8x16xf32>
    %285 = arith.truncf %284 : vector<8x16xf32> to vector<8x16xbf16>
    %286 = vector.extract_strided_slice %235 {offsets = [8, 32], sizes = [8, 16], strides = [1, 1]} : vector<16x96xf32> to vector<8x16xf32>
    %287 = arith.truncf %286 : vector<8x16xf32> to vector<8x16xbf16>
    %288 = vector.extract_strided_slice %235 {offsets = [8, 64], sizes = [8, 16], strides = [1, 1]} : vector<16x96xf32> to vector<8x16xf32>
    %289 = arith.truncf %288 : vector<8x16xf32> to vector<8x16xbf16>
    %cst_127 = arith.constant dense<0.000000e+00> : vector<8x8xf32>
    %290 = tpu.matmul %285, %287, %cst_127 {dimension_numbers = #tpu.dot_dimension_numbers<[1], [1], [0], [0], [0, 0, 1, 0], [], []>} : vector<8x16xbf16>, vector<8x16xbf16>, vector<8x8xf32> -> vector<8x8xf32>
    %cst_128 = arith.constant 2.500000e-01 : f32
    %291 = vector.broadcast %cst_128 : f32 to vector<8x8xf32>
    %292 = arith.mulf %290, %291 : vector<8x8xf32>
    %293 = vector.broadcast %7 : vector<1x8xf32> to vector<8x8xf32>
    %294 = arith.addf %292, %293 : vector<8x8xf32>
    %cst_129 = arith.constant dense<0xFF800000> : vector<8xf32>
    %295 = vector.multi_reduction <maximumf>, %294, %cst_129 [1] : vector<8x8xf32> to vector<8xf32>
    %296 = vector.shape_cast %295 : vector<8xf32> to vector<8x1xf32>
    %297 = vector.broadcast %296 : vector<8x1xf32> to vector<8x8xf32>
    %298 = arith.subf %294, %297 : vector<8x8xf32>
    %299 = math.exp %298 : vector<8x8xf32>
    %cst_130 = arith.constant dense<0.000000e+00> : vector<8xf32>
    %300 = vector.multi_reduction <add>, %299, %cst_130 [1] : vector<8x8xf32> to vector<8xf32>
    %301 = vector.shape_cast %300 : vector<8xf32> to vector<8x1xf32>
    %302 = tpu.reciprocal %301 {approx = true} : vector<8x1xf32> -> vector<8x1xf32>
    %303 = vector.broadcast %302 : vector<8x1xf32> to vector<8x8xf32>
    %304 = arith.mulf %299, %303 : vector<8x8xf32>
    %305 = arith.truncf %304 : vector<8x8xf32> to vector<8x8xbf16>
    %cst_131 = arith.constant dense<0.000000e+00> : vector<8x16xf32>
    %306 = tpu.matmul %305, %289, %cst_131 {dimension_numbers = #tpu.dot_dimension_numbers<[1], [0], [0], [1], [0, 0, 1, 1], [], []>} : vector<8x8xbf16>, vector<8x16xbf16>, vector<8x16xf32> -> vector<8x16xf32>
    %c8_132 = arith.constant 8 : index
    %c0_133 = arith.constant 0 : index
    %307 = vector.load %arg34[%c8_132, %c0_133] : memref<16x32xf32, #tpu.memory_space<vmem>>, vector<8x16xf32>
    tpu.vector_store %arg34[%c8_132, %c0_133], %306 {strides = array<i32>} : memref<16x32xf32, #tpu.memory_space<vmem>>, vector<8x16xf32>,
    %308 = vector.extract_strided_slice %235 {offsets = [8, 16], sizes = [8, 16], strides = [1, 1]} : vector<16x96xf32> to vector<8x16xf32>
    %309 = arith.truncf %308 : vector<8x16xf32> to vector<8x16xbf16>
    %310 = vector.extract_strided_slice %235 {offsets = [8, 48], sizes = [8, 16], strides = [1, 1]} : vector<16x96xf32> to vector<8x16xf32>
    %311 = arith.truncf %310 : vector<8x16xf32> to vector<8x16xbf16>
    %312 = vector.extract_strided_slice %235 {offsets = [8, 80], sizes = [8, 16], strides = [1, 1]} : vector<16x96xf32> to vector<8x16xf32>
    %313 = arith.truncf %312 : vector<8x16xf32> to vector<8x16xbf16>
    %cst_134 = arith.constant dense<0.000000e+00> : vector<8x8xf32>
    %314 = tpu.matmul %309, %311, %cst_134 {dimension_numbers = #tpu.dot_dimension_numbers<[1], [1], [0], [0], [0, 0, 1, 0], [], []>} : vector<8x16xbf16>, vector<8x16xbf16>, vector<8x8xf32> -> vector<8x8xf32>
    %cst_135 = arith.constant 2.500000e-01 : f32
    %315 = vector.broadcast %cst_135 : f32 to vector<8x8xf32>
    %316 = arith.mulf %314, %315 : vector<8x8xf32>
    %317 = vector.broadcast %7 : vector<1x8xf32> to vector<8x8xf32>
    %318 = arith.addf %316, %317 : vector<8x8xf32>
    %cst_136 = arith.constant dense<0xFF800000> : vector<8xf32>
    %319 = vector.multi_reduction <maximumf>, %318, %cst_136 [1] : vector<8x8xf32> to vector<8xf32>
    %320 = vector.shape_cast %319 : vector<8xf32> to vector<8x1xf32>
    %321 = vector.broadcast %320 : vector<8x1xf32> to vector<8x8xf32>
    %322 = arith.subf %318, %321 : vector<8x8xf32>
    %323 = math.exp %322 : vector<8x8xf32>
    %cst_137 = arith.constant dense<0.000000e+00> : vector<8xf32>
    %324 = vector.multi_reduction <add>, %323, %cst_137 [1] : vector<8x8xf32> to vector<8xf32>
    %325 = vector.shape_cast %324 : vector<8xf32> to vector<8x1xf32>
    %326 = tpu.reciprocal %325 {approx = true} : vector<8x1xf32> -> vector<8x1xf32>
    %327 = vector.broadcast %326 : vector<8x1xf32> to vector<8x8xf32>
    %328 = arith.mulf %323, %327 : vector<8x8xf32>
    %329 = arith.truncf %328 : vector<8x8xf32> to vector<8x8xbf16>
    %cst_138 = arith.constant dense<0.000000e+00> : vector<8x16xf32>
    %330 = tpu.matmul %329, %313, %cst_138 {dimension_numbers = #tpu.dot_dimension_numbers<[1], [0], [0], [1], [0, 0, 1, 1], [], []>} : vector<8x8xbf16>, vector<8x16xbf16>, vector<8x16xf32> -> vector<8x16xf32>
    %c8_139 = arith.constant 8 : index
    %c16_140 = arith.constant 16 : index
    %331 = vector.load %arg34[%c8_139, %c16_140] : memref<16x32xf32, #tpu.memory_space<vmem>>, vector<8x16xf32>
    tpu.vector_store %arg34[%c8_139, %c16_140], %330 {strides = array<i32>} : memref<16x32xf32, #tpu.memory_space<vmem>>, vector<8x16xf32>,
    %c0_141 = arith.constant 0 : index
    %c0_142 = arith.constant 0 : index
    %332 = vector.load %arg34[%c0_141, %c0_142] : memref<16x32xf32, #tpu.memory_space<vmem>>, vector<16x32xf32>
    %333 = arith.truncf %332 : vector<16x32xf32> to vector<16x32xbf16>
    %cst_143 = arith.constant dense<0.000000e+00> : vector<16x32xf32>
    %334 = tpu.matmul %333, %222, %cst_143 {dimension_numbers = #tpu.dot_dimension_numbers<[1], [0], [0], [1], [0, 0, 1, 1], [], []>} : vector<16x32xbf16>, vector<32x32xbf16>, vector<16x32xf32> -> vector<16x32xf32>
    %335 = vector.broadcast %223 : vector<1x32xf32> to vector<16x32xf32>
    %336 = arith.addf %334, %335 : vector<16x32xf32>
    %337 = arith.addf %336, %219 : vector<16x32xf32>
    %cst_144 = arith.constant dense<0.000000e+00> : vector<16xf32>
    %338 = vector.multi_reduction <add>, %337, %cst_144 [1] : vector<16x32xf32> to vector<16xf32>
    %339 = vector.shape_cast %338 : vector<16xf32> to vector<16x1xf32>
    %cst_145 = arith.constant 3.200000e+01 : f32
    %340 = vector.broadcast %cst_145 : f32 to vector<16x1xf32>
    %341 = arith.divf %339, %340 : vector<16x1xf32>
    %342 = vector.broadcast %341 : vector<16x1xf32> to vector<16x32xf32>
    %343 = arith.subf %337, %342 : vector<16x32xf32>
    %344 = arith.mulf %343, %343 : vector<16x32xf32>
    %cst_146 = arith.constant dense<0.000000e+00> : vector<16xf32>
    %345 = vector.multi_reduction <add>, %344, %cst_146 [1] : vector<16x32xf32> to vector<16xf32>
    %346 = vector.shape_cast %345 : vector<16xf32> to vector<16x1xf32>
    %cst_147 = arith.constant 3.200000e+01 : f32
    %347 = vector.broadcast %cst_147 : f32 to vector<16x1xf32>
    %348 = arith.divf %346, %347 : vector<16x1xf32>
    %cst_148 = arith.constant 9.99999996E-13 : f32
    %349 = vector.broadcast %cst_148 : f32 to vector<16x1xf32>
    %350 = arith.addf %348, %349 : vector<16x1xf32>
    %351 = math.rsqrt %350 : vector<16x1xf32>
    %352 = vector.broadcast %351 : vector<16x1xf32> to vector<16x32xf32>
    %353 = arith.mulf %343, %352 : vector<16x32xf32>
    %354 = vector.broadcast %224 : vector<1x32xf32> to vector<16x32xf32>
    %355 = arith.mulf %353, %354 : vector<16x32xf32>
    %356 = vector.broadcast %225 : vector<1x32xf32> to vector<16x32xf32>
    %357 = arith.addf %355, %356 : vector<16x32xf32>
    %358 = arith.truncf %357 : vector<16x32xf32> to vector<16x32xbf16>
    %cst_149 = arith.constant dense<0.000000e+00> : vector<16x64xf32>
    %359 = tpu.matmul %358, %226, %cst_149 {dimension_numbers = #tpu.dot_dimension_numbers<[1], [0], [0], [1], [0, 0, 1, 1], [], []>} : vector<16x32xbf16>, vector<32x64xbf16>, vector<16x64xf32> -> vector<16x64xf32>
    %360 = vector.broadcast %227 : vector<1x64xf32> to vector<16x64xf32>
    %361 = arith.addf %359, %360 : vector<16x64xf32>
    %cst_150 = arith.constant 5.000000e-01 : f32
    %362 = vector.broadcast %cst_150 : f32 to vector<16x64xf32>
    %363 = arith.mulf %362, %361 : vector<16x64xf32>
    %cst_151 = arith.constant 4.471500e-02 : f32
    %364 = vector.broadcast %cst_151 : f32 to vector<16x64xf32>
    %365 = arith.mulf %364, %361 : vector<16x64xf32>
    %366 = arith.mulf %365, %361 : vector<16x64xf32>
    %367 = arith.mulf %366, %361 : vector<16x64xf32>
    %368 = arith.addf %361, %367 : vector<16x64xf32>
    %cst_152 = arith.constant 0.797884583 : f32
    %369 = vector.broadcast %cst_152 : f32 to vector<16x64xf32>
    %370 = arith.mulf %369, %368 : vector<16x64xf32>
    %371 = math.tanh %370 : vector<16x64xf32>
    %cst_153 = arith.constant 1.000000e+00 : f32
    %372 = vector.broadcast %cst_153 : f32 to vector<16x64xf32>
    %373 = arith.addf %372, %371 : vector<16x64xf32>
    %374 = arith.mulf %363, %373 : vector<16x64xf32>
    %375 = arith.truncf %374 : vector<16x64xf32> to vector<16x64xbf16>
    %cst_154 = arith.constant dense<0.000000e+00> : vector<16x32xf32>
    %376 = tpu.matmul %375, %228, %cst_154 {dimension_numbers = #tpu.dot_dimension_numbers<[1], [0], [0], [1], [0, 0, 1, 1], [], []>} : vector<16x64xbf16>, vector<64x32xbf16>, vector<16x32xf32> -> vector<16x32xf32>
    %377 = vector.broadcast %229 : vector<1x32xf32> to vector<16x32xf32>
    %378 = arith.addf %376, %377 : vector<16x32xf32>
    %379 = arith.addf %378, %357 : vector<16x32xf32>
    %cst_155 = arith.constant dense<0.000000e+00> : vector<16xf32>
    %380 = vector.multi_reduction <add>, %379, %cst_155 [1] : vector<16x32xf32> to vector<16xf32>
    %381 = vector.shape_cast %380 : vector<16xf32> to vector<16x1xf32>
    %cst_156 = arith.constant 3.200000e+01 : f32
    %382 = vector.broadcast %cst_156 : f32 to vector<16x1xf32>
    %383 = arith.divf %381, %382 : vector<16x1xf32>
    %384 = vector.broadcast %383 : vector<16x1xf32> to vector<16x32xf32>
    %385 = arith.subf %379, %384 : vector<16x32xf32>
    %386 = arith.mulf %385, %385 : vector<16x32xf32>
    %cst_157 = arith.constant dense<0.000000e+00> : vector<16xf32>
    %387 = vector.multi_reduction <add>, %386, %cst_157 [1] : vector<16x32xf32> to vector<16xf32>
    %388 = vector.shape_cast %387 : vector<16xf32> to vector<16x1xf32>
    %cst_158 = arith.constant 3.200000e+01 : f32
    %389 = vector.broadcast %cst_158 : f32 to vector<16x1xf32>
    %390 = arith.divf %388, %389 : vector<16x1xf32>
    %cst_159 = arith.constant 9.99999996E-13 : f32
    %391 = vector.broadcast %cst_159 : f32 to vector<16x1xf32>
    %392 = arith.addf %390, %391 : vector<16x1xf32>
    %393 = math.rsqrt %392 : vector<16x1xf32>
    %394 = vector.broadcast %393 : vector<16x1xf32> to vector<16x32xf32>
    %395 = arith.mulf %385, %394 : vector<16x32xf32>
    %396 = vector.broadcast %230 : vector<1x32xf32> to vector<16x32xf32>
    %397 = arith.mulf %395, %396 : vector<16x32xf32>
    %398 = vector.broadcast %231 : vector<1x32xf32> to vector<16x32xf32>
    %399 = arith.addf %397, %398 : vector<16x32xf32>
    %400 = arith.truncf %399 : vector<16x32xf32> to vector<16x32xbf16>
    %c0_160 = arith.constant 0 : index
    %c0_161 = arith.constant 0 : index
    %401 = vector.load %arg31[%c0_160, %c0_161] : memref<32x128xbf16, #tpu.memory_space<vmem>>, vector<32x128xbf16>
    %cst_162 = arith.constant dense<0.000000e+00> : vector<16x128xf32>
    %402 = tpu.matmul %400, %401, %cst_162 {dimension_numbers = #tpu.dot_dimension_numbers<[1], [0], [0], [1], [0, 0, 1, 1], [], []>} : vector<16x32xbf16>, vector<32x128xbf16>, vector<16x128xf32> -> vector<16x128xf32>
    %c0_163 = arith.constant 0 : index
    %c0_164 = arith.constant 0 : index
    %403 = vector.load %arg32[%c0_163, %c0_164] : memref<1x128xf32, #tpu.memory_space<vmem>>, vector<1x128xf32>
    %404 = vector.broadcast %403 : vector<1x128xf32> to vector<16x128xf32>
    %405 = arith.addf %402, %404 : vector<16x128xf32>
    %cst_165 = arith.constant dense<0xFF800000> : vector<16xf32>
    %406 = vector.multi_reduction <maximumf>, %405, %cst_165 [1] : vector<16x128xf32> to vector<16xf32>
    %407 = vector.shape_cast %406 : vector<16xf32> to vector<16x1xf32>
    %408 = vector.broadcast %407 : vector<16x1xf32> to vector<16x128xf32>
    %409 = arith.subf %405, %408 : vector<16x128xf32>
    %410 = math.exp %409 : vector<16x128xf32>
    %cst_166 = arith.constant dense<0.000000e+00> : vector<16xf32>
    %411 = vector.multi_reduction <add>, %410, %cst_166 [1] : vector<16x128xf32> to vector<16xf32>
    %412 = vector.shape_cast %411 : vector<16xf32> to vector<16x1xf32>
    %413 = tpu.reciprocal %412 {approx = true} : vector<16x1xf32> -> vector<16x1xf32>
    %414 = vector.broadcast %413 : vector<16x1xf32> to vector<16x128xf32>
    %415 = arith.mulf %410, %414 : vector<16x128xf32>
    %c0_167 = arith.constant 0 : index
    %c0_168 = arith.constant 0 : index
    %416 = vector.load %arg33[%c0_167, %c0_168] : memref<16x128xf32, #tpu.memory_space<vmem>>, vector<16x128xf32>
    tpu.vector_store %arg33[%c0_167, %c0_168], %415 {strides = array<i32>} : memref<16x128xf32, #tpu.memory_space<vmem>>, vector<16x128xf32>,
    return
  }
  func.func @transform_0(%arg0: i32) -> (i32, i32) {
    %c0_i32 = arith.constant 0 : i32
    %c0_i32_0 = arith.constant 0 : i32
    %c0_i32_1 = arith.constant 0 : i32
    return %c0_i32, %c0_i32_0 : i32, i32
  }
  func.func @transform_1(%arg0: i32) -> (i32, i32) {
    %c0_i32 = arith.constant 0 : i32
    %c0_i32_0 = arith.constant 0 : i32
    %c0_i32_1 = arith.constant 0 : i32
    return %c0_i32, %c0_i32_0 : i32, i32
  }
  func.func @transform_2(%arg0: i32) -> (i32, i32) {
    %c0_i32 = arith.constant 0 : i32
    %c0_i32_0 = arith.constant 0 : i32
    %c0_i32_1 = arith.constant 0 : i32
    return %c0_i32, %c0_i32_0 : i32, i32
  }
  func.func @transform_3(%arg0: i32) -> (i32, i32) {
    %c0_i32 = arith.constant 0 : i32
    %c0_i32_0 = arith.constant 0 : i32
    %c0_i32_1 = arith.constant 0 : i32
    return %c0_i32, %c0_i32_0 : i32, i32
  }
  func.func @transform_4(%arg0: i32) -> (i32, i32) {
    %c0_i32 = arith.constant 0 : i32
    %c0_i32_0 = arith.constant 0 : i32
    %c0_i32_1 = arith.constant 0 : i32
    return %c0_i32, %c0_i32_0 : i32, i32
  }
  func.func @transform_5(%arg0: i32) -> (i32, i32) {
    %c0_i32 = arith.constant 0 : i32
    %c0_i32_0 = arith.constant 0 : i32
    %c0_i32_1 = arith.constant 0 : i32
    return %c0_i32, %c0_i32_0 : i32, i32
  }
  func.func @transform_6(%arg0: i32) -> (i32, i32) {
    %c0_i32 = arith.constant 0 : i32
    %c0_i32_0 = arith.constant 0 : i32
    %c0_i32_1 = arith.constant 0 : i32
    return %c0_i32, %c0_i32_0 : i32, i32
  }
  func.func @transform_7(%arg0: i32) -> (i32, i32) {
    %c0_i32 = arith.constant 0 : i32
    %c0_i32_0 = arith.constant 0 : i32
    %c0_i32_1 = arith.constant 0 : i32
    return %c0_i32, %c0_i32_0 : i32, i32
  }
  func.func @transform_8(%arg0: i32) -> (i32, i32) {
    %c0_i32 = arith.constant 0 : i32
    %c0_i32_0 = arith.constant 0 : i32
    %c0_i32_1 = arith.constant 0 : i32
    return %c0_i32, %c0_i32_0 : i32, i32
  }
  func.func @transform_9(%arg0: i32) -> (i32, i32) {
    %c0_i32 = arith.constant 0 : i32
    %c0_i32_0 = arith.constant 0 : i32
    %c0_i32_1 = arith.constant 0 : i32
    return %c0_i32, %c0_i32_0 : i32, i32
  }
  func.func @transform_10(%arg0: i32) -> (i32, i32) {
    %c0_i32 = arith.constant 0 : i32
    %c0_i32_0 = arith.constant 0 : i32
    %c0_i32_1 = arith.constant 0 : i32
    return %c0_i32, %c0_i32_0 : i32, i32
  }
  func.func @transform_11(%arg0: i32) -> (i32, i32) {
    %c0_i32 = arith.constant 0 : i32
    %c0_i32_0 = arith.constant 0 : i32
    %c0_i32_1 = arith.constant 0 : i32
    return %c0_i32, %c0_i32_0 : i32, i32
  }
  func.func @transform_12(%arg0: i32) -> (i32, i32) {
    %c0_i32 = arith.constant 0 : i32
    %c0_i32_0 = arith.constant 0 : i32
    %c0_i32_1 = arith.constant 0 : i32
    return %c0_i32, %c0_i32_0 : i32, i32
  }
  func.func @transform_13(%arg0: i32) -> (i32, i32) {
    %c0_i32 = arith.constant 0 : i32
    %c0_i32_0 = arith.constant 0 : i32
    %c0_i32_1 = arith.constant 0 : i32
    return %c0_i32, %c0_i32_0 : i32, i32
  }
  func.func @transform_14(%arg0: i32) -> (i32, i32) {
    %c0_i32 = arith.constant 0 : i32
    %c0_i32_0 = arith.constant 0 : i32
    %c0_i32_1 = arith.constant 0 : i32
    return %c0_i32, %c0_i32_0 : i32, i32
  }
  func.func @transform_15(%arg0: i32) -> (i32, i32) {
    %c0_i32 = arith.constant 0 : i32
    %c0_i32_0 = arith.constant 0 : i32
    %c0_i32_1 = arith.constant 0 : i32
    return %c0_i32, %c0_i32_0 : i32, i32
  }
  func.func @transform_16(%arg0: i32) -> (i32, i32) {
    %c0_i32 = arith.constant 0 : i32
    %c0_i32_0 = arith.constant 0 : i32
    %c0_i32_1 = arith.constant 0 : i32
    return %c0_i32, %c0_i32_0 : i32, i32
  }
  func.func @transform_17(%arg0: i32) -> (i32, i32) {
    %c0_i32 = arith.constant 0 : i32
    %c0_i32_0 = arith.constant 0 : i32
    %c0_i32_1 = arith.constant 0 : i32
    return %c0_i32, %c0_i32_0 : i32, i32
  }
  func.func @transform_18(%arg0: i32) -> (i32, i32) {
    %c0_i32 = arith.constant 0 : i32
    %c0_i32_0 = arith.constant 0 : i32
    %c0_i32_1 = arith.constant 0 : i32
    return %c0_i32, %c0_i32_0 : i32, i32
  }
  func.func @transform_19(%arg0: i32) -> (i32, i32) {
    %c0_i32 = arith.constant 0 : i32
    %c0_i32_0 = arith.constant 0 : i32
    %c0_i32_1 = arith.constant 0 : i32
    return %c0_i32, %c0_i32_0 : i32, i32
  }
  func.func @transform_20(%arg0: i32) -> (i32, i32) {
    %c0_i32 = arith.constant 0 : i32
    %c0_i32_0 = arith.constant 0 : i32
    %c0_i32_1 = arith.constant 0 : i32
    return %c0_i32, %c0_i32_0 : i32, i32
  }
  func.func @transform_21(%arg0: i32) -> (i32, i32) {
    %c0_i32 = arith.constant 0 : i32
    %c0_i32_0 = arith.constant 0 : i32
    %c0_i32_1 = arith.constant 0 : i32
    return %c0_i32, %c0_i32_0 : i32, i32
  }
  func.func @transform_22(%arg0: i32) -> (i32, i32) {
    %c0_i32 = arith.constant 0 : i32
    %c0_i32_0 = arith.constant 0 : i32
    %c0_i32_1 = arith.constant 0 : i32
    return %c0_i32, %c0_i32_0 : i32, i32
  }
  func.func @transform_23(%arg0: i32) -> (i32, i32) {
    %c0_i32 = arith.constant 0 : i32
    %c0_i32_0 = arith.constant 0 : i32
    %c0_i32_1 = arith.constant 0 : i32
    return %c0_i32, %c0_i32_0 : i32, i32
  }
  func.func @transform_24(%arg0: i32) -> (i32, i32) {
    %c0_i32 = arith.constant 0 : i32
    %c0_i32_0 = arith.constant 0 : i32
    %c0_i32_1 = arith.constant 0 : i32
    return %c0_i32, %c0_i32_0 : i32, i32
  }
  func.func @transform_25(%arg0: i32) -> (i32, i32) {
    %c0_i32 = arith.constant 0 : i32
    %c0_i32_0 = arith.constant 0 : i32
    %c0_i32_1 = arith.constant 0 : i32
    return %c0_i32, %c0_i32_0 : i32, i32
  }
  func.func @transform_26(%arg0: i32) -> (i32, i32) {
    %c0_i32 = arith.constant 0 : i32
    %c0_i32_0 = arith.constant 0 : i32
    %c0_i32_1 = arith.constant 0 : i32
    return %c0_i32, %c0_i32_0 : i32, i32
  }
  func.func @transform_27(%arg0: i32) -> (i32, i32) {
    %c0_i32 = arith.constant 0 : i32
    %c0_i32_0 = arith.constant 0 : i32
    %c0_i32_1 = arith.constant 0 : i32
    return %c0_i32, %c0_i32_0 : i32, i32
  }
  func.func @transform_28(%arg0: i32) -> (i32, i32) {
    %c0_i32 = arith.constant 0 : i32
    %c0_i32_0 = arith.constant 0 : i32
    %c0_i32_1 = arith.constant 0 : i32
    return %c0_i32, %c0_i32_0 : i32, i32
  }
  func.func @transform_29(%arg0: i32) -> (i32, i32) {
    %c0_i32 = arith.constant 0 : i32
    %c0_i32_0 = arith.constant 0 : i32
    %c0_i32_1 = arith.constant 0 : i32
    return %c0_i32, %c0_i32_0 : i32, i32
  }
  func.func @transform_30(%arg0: i32) -> (i32, i32) {
    %c0_i32 = arith.constant 0 : i32
    %c0_i32_0 = arith.constant 0 : i32
    %c0_i32_1 = arith.constant 0 : i32
    return %c0_i32, %c0_i32_0 : i32, i32
  }
  func.func @transform_31(%arg0: i32) -> (i32, i32) {
    %c0_i32 = arith.constant 0 : i32
    %c0_i32_0 = arith.constant 0 : i32
    %c0_i32_1 = arith.constant 0 : i32
    return %c0_i32, %c0_i32_0 : i32, i32
  }
  func.func @transform_32(%arg0: i32) -> (i32, i32) {
    %c0_i32 = arith.constant 0 : i32
    %c0_i32_0 = arith.constant 0 : i32
    %c0_i32_1 = arith.constant 0 : i32
    return %c0_i32, %c0_i32_0 : i32, i32
  }
}

</mosaic_0001>

<llo_original>
// kernel: tpu_custom_call.1
$region0: #{tpu_custom_call.1}
  #allocation0 [shape = 'u32[]', space=smem, size = 0x4, offset = 0x4, fixed_abs, tag = 'smem constant byte address 0x4 - core index']
  #allocation1 [shape = 'u32[144,128]{1,0:T(1,128)}', space=vmem, size = 0x12000, scoped, tag = 'internal scratch']
  #allocation2 [shape = 'f32[16,32]{1,0:T(8,128)}', space=vmem, size = 0x2000, scoped, tag = 'scratch operand']
  %s0 = inlined_call_operand.smem [shape: u32[33], index: -1, kind: input, shape index: {}]
  %s1 = sld [smem:[%s0]]
  %s2 = scalar_lea.smem %s0, 1
  %s3 = sld [smem:[%s2]]
  %s4 = scalar_lea.smem %s0, 2
  %s5 = sld [smem:[%s4]]
  %s6 = scalar_lea.smem %s0, 3
  %s7 = sld [smem:[%s6]]
  %s8 = scalar_lea.smem %s0, 4
  %s9 = sld [smem:[%s8]]
  %s10 = scalar_lea.smem %s0, 5
  %s11 = sld [smem:[%s10]]
  %s12 = scalar_lea.smem %s0, 6
  %s13 = sld [smem:[%s12]]
  %s14 = scalar_lea.smem %s0, 7
  %s15 = sld [smem:[%s14]]
  %s16 = scalar_lea.smem %s0, 8
  %s17 = sld [smem:[%s16]]
  %s18 = scalar_lea.smem %s0, 9
  %s19 = sld [smem:[%s18]]
  %s20 = scalar_lea.smem %s0, 10
  %s21 = sld [smem:[%s20]]
  %s22 = scalar_lea.smem %s0, 11
  %s23 = sld [smem:[%s22]]
  %s24 = scalar_lea.smem %s0, 12
  %s25 = sld [smem:[%s24]]
  %s26 = scalar_lea.smem %s0, 13
  %s27 = sld [smem:[%s26]]
  %s28 = scalar_lea.smem %s0, 14
  %s29 = sld [smem:[%s28]]
  %s30 = scalar_lea.smem %s0, 15
  %s31 = sld [smem:[%s30]]
  %s32 = scalar_lea.smem %s0, 16
  %s33 = sld [smem:[%s32]]
  %s34 = scalar_lea.smem %s0, 17
  %s35 = sld [smem:[%s34]]
  %s36 = scalar_lea.smem %s0, 18
  %s37 = sld [smem:[%s36]]
  %s38 = scalar_lea.smem %s0, 19
  %s39 = sld [smem:[%s38]]
  %s40 = scalar_lea.smem %s0, 20
  %s41 = sld [smem:[%s40]]
  %s42 = scalar_lea.smem %s0, 21
  %s43 = sld [smem:[%s42]]
  %s44 = scalar_lea.smem %s0, 22
  %s45 = sld [smem:[%s44]]
  %s46 = scalar_lea.smem %s0, 23
  %s47 = sld [smem:[%s46]]
  %s48 = scalar_lea.smem %s0, 24
  %s49 = sld [smem:[%s48]]
  %s50 = scalar_lea.smem %s0, 25
  %s51 = sld [smem:[%s50]]
  %s52 = scalar_lea.smem %s0, 26
  %s53 = sld [smem:[%s52]]
  %s54 = scalar_lea.smem %s0, 27
  %s55 = sld [smem:[%s54]]
  %s56 = scalar_lea.smem %s0, 28
  %s57 = sld [smem:[%s56]]
  %s58 = scalar_lea.smem %s0, 29
  %s59 = sld [smem:[%s58]]
  %s60 = scalar_lea.smem %s0, 30
  %s61 = sld [smem:[%s60]]
  %s62 = scalar_lea.smem %s0, 31
  %s63 = sld [smem:[%s62]]
  %s64 = scalar_lea.smem %s0, 32
  %s65 = sld [smem:[%s64]]
  %s66 = sld [smem:[#allocation0]]
  $region138: #{tpu_custom_call.1} parent=0
    _
  %s68 = ssub.s32 1, %s66
  %s69 = scalar_select 0, %s68, %s66
  $region1: #{tpu_custom_call.1} parent=0
    #allocation3 [shape = 'u8[8192]{0}', space=vmem, size = 0x2000, scoped, tag = 'output window, operand 0, single buffered']
    #allocation4 [shape = 's32[1]{0}', space=sflag, size = 0x4, scoped, tag = 'scoped memory for tpu_custom_call.1']
    %70 = vsyncpa [#allocation4], 0
    // Predicated region
    $region2: #{tpu_custom_call.1} parent=1 // pred_check
      _
    $region3: #{tpu_custom_call.1} parent=1 // pred_check_branch
      %72 = sbr.rel (0) target = $region5
    $region4: #{tpu_custom_call.1} parent=1 // pred_region
      _
    $region5: #{tpu_custom_call.1} parent=1 // pred_fallthru
      _
    // Predicated region
    $region6: #{tpu_custom_call.1} parent=1 // pred_check
      _
    $region7: #{tpu_custom_call.1} parent=1 // pred_check_branch
      %74 = sbr.rel (0) target = $region9
    $region8: #{tpu_custom_call.1} parent=1 // pred_region
      _
    $region9: #{tpu_custom_call.1} parent=1 // pred_fallthru
      _
    // Predicated region
    $region10: #{tpu_custom_call.1} parent=1 // pred_check
      _
    $region11: #{tpu_custom_call.1} parent=1 // pred_check_branch
      %76 = sbr.rel (0) target = $region13
    $region12: #{tpu_custom_call.1} parent=1 // pred_region
      _
    $region13: #{tpu_custom_call.1} parent=1 // pred_fallthru
      _
    // Predicated region
    $region14: #{tpu_custom_call.1} parent=1 // pred_check
      _
    $region15: #{tpu_custom_call.1} parent=1 // pred_check_branch
      %78 = sbr.rel (0) target = $region17
    $region16: #{tpu_custom_call.1} parent=1 // pred_region
      _
    $region17: #{tpu_custom_call.1} parent=1 // pred_fallthru
      _
    // Predicated region
    $region18: #{tpu_custom_call.1} parent=1 // pred_check
      _
    $region19: #{tpu_custom_call.1} parent=1 // pred_check_branch
      %80 = sbr.rel (0) target = $region21
    $region20: #{tpu_custom_call.1} parent=1 // pred_region
      _
    $region21: #{tpu_custom_call.1} parent=1 // pred_fallthru
      _
    // Predicated region
    $region22: #{tpu_custom_call.1} parent=1 // pred_check
      _
    $region23: #{tpu_custom_call.1} parent=1 // pred_check_branch
      %82 = sbr.rel (0) target = $region25
    $region24: #{tpu_custom_call.1} parent=1 // pred_region
      _
    $region25: #{tpu_custom_call.1} parent=1 // pred_fallthru
      _
    // Predicated region
    $region26: #{tpu_custom_call.1} parent=1 // pred_check
      _
    $region27: #{tpu_custom_call.1} parent=1 // pred_check_branch
      %84 = sbr.rel (0) target = $region29
    $region28: #{tpu_custom_call.1} parent=1 // pred_region
      _
    $region29: #{tpu_custom_call.1} parent=1 // pred_fallthru
      _
    // Predicated region
    $region30: #{tpu_custom_call.1} parent=1 // pred_check
      _
    $region31: #{tpu_custom_call.1} parent=1 // pred_check_branch
      %86 = sbr.rel (0) target = $region33
    $region32: #{tpu_custom_call.1} parent=1 // pred_region
      _
    $region33: #{tpu_custom_call.1} parent=1 // pred_fallthru
      _
    // Predicated region
    $region34: #{tpu_custom_call.1} parent=1 // pred_check
      _
    $region35: #{tpu_custom_call.1} parent=1 // pred_check_branch
      %88 = sbr.rel (0) target = $region37
    $region36: #{tpu_custom_call.1} parent=1 // pred_region
      _
    $region37: #{tpu_custom_call.1} parent=1 // pred_fallthru
      _
    // Predicated region
    $region38: #{tpu_custom_call.1} parent=1 // pred_check
      _
    $region39: #{tpu_custom_call.1} parent=1 // pred_check_branch
      %90 = sbr.rel (0) target = $region41
    $region40: #{tpu_custom_call.1} parent=1 // pred_region
      _
    $region41: #{tpu_custom_call.1} parent=1 // pred_fallthru
      _
    // Predicated region
    $region42: #{tpu_custom_call.1} parent=1 // pred_check
      _
    $region43: #{tpu_custom_call.1} parent=1 // pred_check_branch
      %92 = sbr.rel (0) target = $region45
    $region44: #{tpu_custom_call.1} parent=1 // pred_region
      _
    $region45: #{tpu_custom_call.1} parent=1 // pred_fallthru
      _
    // Predicated region
    $region46: #{tpu_custom_call.1} parent=1 // pred_check
      _
    $region47: #{tpu_custom_call.1} parent=1 // pred_check_branch
      %94 = sbr.rel (0) target = $region49
    $region48: #{tpu_custom_call.1} parent=1 // pred_region
      _
    $region49: #{tpu_custom_call.1} parent=1 // pred_fallthru
      _
    // Predicated region
    $region50: #{tpu_custom_call.1} parent=1 // pred_check
      _
    $region51: #{tpu_custom_call.1} parent=1 // pred_check_branch
      %96 = sbr.rel (0) target = $region53
    $region52: #{tpu_custom_call.1} parent=1 // pred_region
      _
    $region53: #{tpu_custom_call.1} parent=1 // pred_fallthru
      _
    // Predicated region
    $region54: #{tpu_custom_call.1} parent=1 // pred_check
      _
    $region55: #{tpu_custom_call.1} parent=1 // pred_check_branch
      %98 = sbr.rel (0) target = $region57
    $region56: #{tpu_custom_call.1} parent=1 // pred_region
      _
    $region57: #{tpu_custom_call.1} parent=1 // pred_fallthru
      _
    // Predicated region
    $region58: #{tpu_custom_call.1} parent=1 // pred_check
      _
    $region59: #{tpu_custom_call.1} parent=1 // pred_check_branch
      %100 = sbr.rel (0) target = $region61
    $region60: #{tpu_custom_call.1} parent=1 // pred_region
      _
    $region61: #{tpu_custom_call.1} parent=1 // pred_fallthru
      _
    // Predicated region
    $region62: #{tpu_custom_call.1} parent=1 // pred_check
      _
    $region63: #{tpu_custom_call.1} parent=1 // pred_check_branch
      %102 = sbr.rel (0) target = $region65
    $region64: #{tpu_custom_call.1} parent=1 // pred_region
      _
    $region65: #{tpu_custom_call.1} parent=1 // pred_fallthru
      _
    // Predicated region
    $region66: #{tpu_custom_call.1} parent=1 // pred_check
      _
    $region67: #{tpu_custom_call.1} parent=1 // pred_check_branch
      %104 = sbr.rel (0) target = $region69
    $region68: #{tpu_custom_call.1} parent=1 // pred_region
      _
    $region69: #{tpu_custom_call.1} parent=1 // pred_fallthru
      _
    // Predicated region
    $region70: #{tpu_custom_call.1} parent=1 // pred_check
      _
    $region71: #{tpu_custom_call.1} parent=1 // pred_check_branch
      %106 = sbr.rel (0) target = $region73
    $region72: #{tpu_custom_call.1} parent=1 // pred_region
      _
    $region73: #{tpu_custom_call.1} parent=1 // pred_fallthru
      _
    // Predicated region
    $region74: #{tpu_custom_call.1} parent=1 // pred_check
      _
    $region75: #{tpu_custom_call.1} parent=1 // pred_check_branch
      %108 = sbr.rel (0) target = $region77
    $region76: #{tpu_custom_call.1} parent=1 // pred_region
      _
    $region77: #{tpu_custom_call.1} parent=1 // pred_fallthru
      _
    // Predicated region
    $region78: #{tpu_custom_call.1} parent=1 // pred_check
      _
    $region79: #{tpu_custom_call.1} parent=1 // pred_check_branch
      %110 = sbr.rel (0) target = $region81
    $region80: #{tpu_custom_call.1} parent=1 // pred_region
      _
    $region81: #{tpu_custom_call.1} parent=1 // pred_fallthru
      _
    // Predicated region
    $region82: #{tpu_custom_call.1} parent=1 // pred_check
      _
    $region83: #{tpu_custom_call.1} parent=1 // pred_check_branch
      %112 = sbr.rel (0) target = $region85
    $region84: #{tpu_custom_call.1} parent=1 // pred_region
      _
    $region85: #{tpu_custom_call.1} parent=1 // pred_fallthru
      _
    // Predicated region
    $region86: #{tpu_custom_call.1} parent=1 // pred_check
      _
    $region87: #{tpu_custom_call.1} parent=1 // pred_check_branch
      %114 = sbr.rel (0) target = $region89
    $region88: #{tpu_custom_call.1} parent=1 // pred_region
      _
    $region89: #{tpu_custom_call.1} parent=1 // pred_fallthru
      _
    // Predicated region
    $region90: #{tpu_custom_call.1} parent=1 // pred_check
      _
    $region91: #{tpu_custom_call.1} parent=1 // pred_check_branch
      %116 = sbr.rel (0) target = $region93
    $region92: #{tpu_custom_call.1} parent=1 // pred_region
      _
    $region93: #{tpu_custom_call.1} parent=1 // pred_fallthru
      _
    // Predicated region
    $region94: #{tpu_custom_call.1} parent=1 // pred_check
      _
    $region95: #{tpu_custom_call.1} parent=1 // pred_check_branch
      %118 = sbr.rel (0) target = $region97
    $region96: #{tpu_custom_call.1} parent=1 // pred_region
      _
    $region97: #{tpu_custom_call.1} parent=1 // pred_fallthru
      _
    // Predicated region
    $region98: #{tpu_custom_call.1} parent=1 // pred_check
      _
    $region99: #{tpu_custom_call.1} parent=1 // pred_check_branch
      %120 = sbr.rel (0) target = $region101
    $region100: #{tpu_custom_call.1} parent=1 // pred_region
      _
    $region101: #{tpu_custom_call.1} parent=1 // pred_fallthru
      _
    // Predicated region
    $region102: #{tpu_custom_call.1} parent=1 // pred_check
      _
    $region103: #{tpu_custom_call.1} parent=1 // pred_check_branch
      %122 = sbr.rel (0) target = $region105
    $region104: #{tpu_custom_call.1} parent=1 // pred_region
      _
    $region105: #{tpu_custom_call.1} parent=1 // pred_fallthru
      _
    // Predicated region
    $region106: #{tpu_custom_call.1} parent=1 // pred_check
      _
    $region107: #{tpu_custom_call.1} parent=1 // pred_check_branch
      %124 = sbr.rel (0) target = $region109
    $region108: #{tpu_custom_call.1} parent=1 // pred_region
      _
    $region109: #{tpu_custom_call.1} parent=1 // pred_fallthru
      _
    // Predicated region
    $region110: #{tpu_custom_call.1} parent=1 // pred_check
      _
    $region111: #{tpu_custom_call.1} parent=1 // pred_check_branch
      %126 = sbr.rel (0) target = $region113
    $region112: #{tpu_custom_call.1} parent=1 // pred_region
      _
    $region113: #{tpu_custom_call.1} parent=1 // pred_fallthru
      _
    // Predicated region
    $region114: #{tpu_custom_call.1} parent=1 // pred_check
      _
    $region115: #{tpu_custom_call.1} parent=1 // pred_check_branch
      %128 = sbr.rel (0) target = $region117
    $region116: #{tpu_custom_call.1} parent=1 // pred_region
      _
    $region117: #{tpu_custom_call.1} parent=1 // pred_fallthru
      _
    // Predicated region
    $region118: #{tpu_custom_call.1} parent=1 // pred_check
      _
    $region119: #{tpu_custom_call.1} parent=1 // pred_check_branch
      %130 = sbr.rel (0) target = $region121
    $region120: #{tpu_custom_call.1} parent=1 // pred_region
      _
    $region121: #{tpu_custom_call.1} parent=1 // pred_fallthru
      _
    // Predicated region
    $region122: #{tpu_custom_call.1} parent=1 // pred_check
      _
    $region123: #{tpu_custom_call.1} parent=1 // pred_check_branch
      %132 = sbr.rel (0) target = $region125
    $region124: #{tpu_custom_call.1} parent=1 // pred_region
      _
    $region125: #{tpu_custom_call.1} parent=1 // pred_fallthru
      _
    // Predicated region
    $region126: #{tpu_custom_call.1} parent=1 // pred_check
      _
    $region127: #{tpu_custom_call.1} parent=1 // pred_check_branch
      %134 = sbr.rel (0) target = $region129
    $region128: #{tpu_custom_call.1} parent=1 // pred_region
      _
    $region129: #{tpu_custom_call.1} parent=1 // pred_fallthru
      _
    %v136 = vlaneseq
    %v137 = vand.u32 %v136, 127
    %v138 = vld [vmem:[%s3] sm:$0x3]
    %v139 = vsub.f32 1.0, %v138
    %v140 = vmul.f32 %v139, -1e+09
    %v141 = vld [vmem:[%s1] sm:$0xff]
    %v142 = vld [vmem:[%s1 + $0x8] sm:$0xff]
    %143 = vset.pattern.permute.xlu0 0
    %144 = vperm.xlu0 %143, %v141
    %v145 = vpop.permute.xlu0 %144
    %146 = vset.pattern.permute.xlu0 0
    %147 = vperm.xlu0 %146, %v142
    %v148 = vpop.permute.xlu0 %147
    %vm149 = vcmp.eq.s32.totalorder %v137, %v145
    %vm150 = vcmp.eq.s32.totalorder %v137, %v148
    %v151 = vsel %vm149, 1, 0
    %v152 = vsel %vm150, 1, 0
    %v153 = vcvt.s32.f32 %v151
    %v154 = vcvt.s32.f32 %v152
    %v155 = vpack.c.bf16 %v154, %v153
    %v156 = vld [vmem:[%s5] sm:$0xf]
    %v157 = vld [vmem:[%s5 + $0x4] sm:$0xf]
    %v158 = vld [vmem:[%s5 + $0x8] sm:$0xf]
    %v159 = vld [vmem:[%s5 + $0xc] sm:$0xf]
    %v160 = vld [vmem:[%s5 + $0x10] sm:$0xf]
    %v161 = vld [vmem:[%s5 + $0x14] sm:$0xf]
    %v162 = vld [vmem:[%s5 + $0x18] sm:$0xf]
    %v163 = vld [vmem:[%s5 + $0x1c] sm:$0xf]
    %v164 = vld [vmem:[%s5 + $0x20] sm:$0xf]
    %v165 = vld [vmem:[%s5 + $0x24] sm:$0xf]
    %v166 = vld [vmem:[%s5 + $0x28] sm:$0xf]
    %v167 = vld [vmem:[%s5 + $0x2c] sm:$0xf]
    %v168 = vld [vmem:[%s5 + $0x30] sm:$0xf]
    %v169 = vld [vmem:[%s5 + $0x34] sm:$0xf]
    %v170 = vld [vmem:[%s5 + $0x38] sm:$0xf]
    %v171 = vld [vmem:[%s5 + $0x3c] sm:$0xf]
    %v172 = vld [vmem:[%s7] sm:$0xff]
    %v173 = vld [vmem:[%s7 + $0x8] sm:$0xff]
    %v190 = vunpack.c.l.b16 %v156
    %v191 = vunpack.c.l.b16 %v157
    %v192 = vunpack.c.l.b16 %v158
    %v193 = vunpack.c.l.b16 %v159
    %v194 = vunpack.c.l.b16 %v160
    %v195 = vunpack.c.l.b16 %v161
    %v196 = vunpack.c.l.b16 %v162
    %v197 = vunpack.c.l.b16 %v163
    %v198 = vunpack.c.l.b16 %v164
    %v199 = vunpack.c.l.b16 %v165
    %v200 = vunpack.c.l.b16 %v166
    %v201 = vunpack.c.l.b16 %v167
    %v202 = vunpack.c.l.b16 %v168
    %v203 = vunpack.c.l.b16 %v169
    %v204 = vunpack.c.l.b16 %v170
    %v205 = vunpack.c.l.b16 %v171
    %v206 = vpack.c.b16 %v191, %v190
    %v207 = vpack.c.b16 %v193, %v192
    %v208 = vpack.c.b16 %v195, %v194
    %v209 = vpack.c.b16 %v197, %v196
    %v210 = vpack.c.b16 %v199, %v198
    %v211 = vpack.c.b16 %v201, %v200
    %v212 = vpack.c.b16 %v203, %v202
    %v213 = vpack.c.b16 %v205, %v204
    %222 = vmatprep.subr.bf16.mxu0 0
    %223 = vmatpush1.bf16.msra.mxu0 %v206
    %224 = vmatprep.subr.bf16.mxu0 0
    %225 = vmatpush1.bf16.msra.mxu0 %v207
    %226 = vmatprep.subr.bf16.mxu0 0
    %227 = vmatpush1.bf16.msra.mxu0 %v208
    %228 = vmatprep.subr.bf16.mxu0 0
    %229 = vmatpush1.bf16.msra.mxu0 %v209
    %230 = vmatprep.subr.bf16.mxu0 0
    %231 = vmatpush1.bf16.msra.mxu0 %v210
    %232 = vmatprep.subr.bf16.mxu0 0
    %233 = vmatpush1.bf16.msra.mxu0 %v211
    %234 = vmatprep.subr.bf16.mxu0 0
    %235 = vmatpush1.bf16.msra.mxu0 %v212
    %236 = vmatprep.subr.bf16.mxu0 0
    %237 = vmatpush1.bf16.msra.mxu0 %v213
    %238 = vmatprep.subr.bf16.mxu0 0
    %239 = vmatpush1.bf16.msra.mxu0 0
    %240 = vmatprep.subr.bf16.mxu0 0
    %241 = vmatpush1.bf16.msra.mxu0 0
    %242 = vmatprep.subr.bf16.mxu0 0
    %243 = vmatpush1.bf16.msra.mxu0 0
    %244 = vmatprep.subr.bf16.mxu0 0
    %245 = vmatpush1.bf16.msra.mxu0 0
    %246 = vmatprep.subr.bf16.mxu0 0
    %247 = vmatpush1.bf16.msra.mxu0 0
    %248 = vmatprep.subr.bf16.mxu0 0
    %249 = vmatpush1.bf16.msra.mxu0 0
    %250 = vmatprep.subr.bf16.mxu0 0
    %251 = vmatpush1.bf16.msra.mxu0 0
    %252 = vmatprep.subr.bf16.mxu0 0
    %253 = vmatpush1.bf16.msra.mxu0 0
    %254 = vmatprep.mubr.bf16.mxu0 0
    %255 = vmatmul.mubr.bf16.gmra.mrb[0].mxu0 %v155
    %v256 = vpop.f32.mrb[0].mxu0
    %v257 = vadd.f32 %v172, %v256
    %v258 = vpop.f32.mrb[0].mxu0
    %v259 = vpop.f32.mrb[0].mxu0
    %v260 = vadd.f32 %v173, %v259
    %v261 = vpop.f32.mrb[0].mxu0
    %262 = vdwg.mxu0
    %v263 = vld [vmem:[%s9] sm:$0x1]
    %v264 = vld [vmem:[%s11] sm:$0x1]
    %vm265 = vcmask 261120
    %v266 = vsel %vm265, %v257, 0.0
    %267 = vadd.xlane.f32.xlu0 %v266
    %v268 = vpop.xlane.xlu0 %267
    %v269 = vsel %vm265, %v260, 0.0
    %270 = vadd.xlane.f32.xlu0 %v269
    %v271 = vpop.xlane.xlu0 %270
    %v272 = vrcp.pop 32.0
    %v273 = vmul.f32 %v268, %v272
    %v274 = vmul.f32 %v271, %v272
    %v275 = vsub.f32 %v257, %v273
    %v276 = vsub.f32 %v260, %v274
    %v277 = vmul.f32 %v275, %v275
    %v278 = vmul.f32 %v276, %v276
    %v279 = vsel %vm265, %v277, 0.0
    %280 = vadd.xlane.f32.xlu0 %v279
    %v281 = vpop.xlane.xlu0 %280
    %v282 = vsel %vm265, %v278, 0.0
    %283 = vadd.xlane.f32.xlu0 %v282
    %v284 = vpop.xlane.xlu0 %283
    %v285 = vmul.f32 %v281, %v272
    %v286 = vmul.f32 %v284, %v272
    %v287 = vadd.f32 %v285, 1e-12
    %v288 = vadd.f32 %v286, 1e-12
    %v289 = vrsqrt.pop %v287
    %v290 = vrsqrt.pop %v288
    %v291 = vmul.f32 %v275, %v289
    %v292 = vmul.f32 %v276, %v290
    %v294 = vlaneseq
    %v295 = vshrl.u32 %v294, 7
    %v296 = vsub.s32 0, %v295
    %v297 = vrot.slane %v263, %v296
    %v299 = vmul.f32 %v291, %v297
    %v300 = vmul.f32 %v292, %v297
    %v302 = vlaneseq
    %v303 = vshrl.u32 %v302, 7
    %v304 = vsub.s32 0, %v303
    %v305 = vrot.slane %v264, %v304
    %v307 = vadd.f32 %v299, %v305
    %v308 = vadd.f32 %v300, %v305
    %v309 = vld [vmem:[%s13] sm:$0xf]
    %v310 = vld [vmem:[%s13 + $0x4] sm:$0xf]
    %v311 = vld [vmem:[%s13 + $0x8] sm:$0xf]
    %v312 = vld [vmem:[%s13 + $0xc] sm:$0xf]
    %v313 = vld [vmem:[%s15] sm:$0x1]
    %v314 = vld [vmem:[%s17] sm:$0xf]
    %v315 = vld [vmem:[%s17 + $0x4] sm:$0xf]
    %v316 = vld [vmem:[%s17 + $0x8] sm:$0xf]
    %v317 = vld [vmem:[%s17 + $0xc] sm:$0xf]
    %v318 = vld [vmem:[%s19] sm:$0x1]
    %v319 = vld [vmem:[%s21] sm:$0x1]
    %v320 = vld [vmem:[%s23] sm:$0x1]
    %v321 = vld [vmem:[%s25] sm:$0xf]
    %v322 = vld [vmem:[%s25 + $0x4] sm:$0xf]
    %v323 = vld [vmem:[%s25 + $0x8] sm:$0xf]
    %v324 = vld [vmem:[%s25 + $0xc] sm:$0xf]
    %v325 = vld [vmem:[%s27] sm:$0x1]
    %v326 = vld [vmem:[%s29] sm:$0xf]
    %v327 = vld [vmem:[%s29 + $0x4] sm:$0xf]
    %v328 = vld [vmem:[%s29 + $0x8] sm:$0xf]
    %v329 = vld [vmem:[%s29 + $0xc] sm:$0xf]
    %v330 = vld [vmem:[%s29 + $0x10] sm:$0xf]
    %v331 = vld [vmem:[%s29 + $0x14] sm:$0xf]
    %v332 = vld [vmem:[%s29 + $0x18] sm:$0xf]
    %v333 = vld [vmem:[%s29 + $0x1c] sm:$0xf]
    %v334 = vld [vmem:[%s31] sm:$0x1]
    %v335 = vld [vmem:[%s33] sm:$0x1]
    %v336 = vld [vmem:[%s35] sm:$0x1]
    %v337 = vpack.c.bf16 %v308, %v307
    %v339 = vlaneseq
    %v340 = vshrl.u32 %v339, 7
    %v341 = vsub.s32 0, %v340
    %v342 = vrot.slane %v313, %v341
    %v348 = vunpack.c.l.b16 %v309
    %v349 = vunpack.c.l.b16 %v310
    %v350 = vunpack.c.l.b16 %v311
    %v351 = vunpack.c.l.b16 %v312
    %v352 = vpack.c.b16 %v349, %v348
    %v353 = vpack.c.b16 %v351, %v350
    %v357 = vsel %vm265, %v337, 0
    %359 = vmatprep.subr.bf16.mxu0 0
    %360 = vmatpush1.bf16.msra.mxu0 %v352
    %361 = vmatprep.subr.bf16.mxu0 0
    %362 = vmatpush1.bf16.msra.mxu0 %v353
    %363 = vmatprep.subr.bf16.mxu0 0
    %364 = vmatpush1.bf16.msra.mxu0 0
    %365 = vmatprep.subr.bf16.mxu0 0
    %366 = vmatpush1.bf16.msra.mxu0 0
    %367 = vmatprep.subr.bf16.mxu0 0
    %368 = vmatpush1.bf16.msra.mxu0 0
    %369 = vmatprep.subr.bf16.mxu0 0
    %370 = vmatpush1.bf16.msra.mxu0 0
    %371 = vmatprep.subr.bf16.mxu0 0
    %372 = vmatpush1.bf16.msra.mxu0 0
    %373 = vmatprep.subr.bf16.mxu0 0
    %374 = vmatpush1.bf16.msra.mxu0 0
    %375 = vmatprep.subr.bf16.mxu0 0
    %376 = vmatpush1.bf16.msra.mxu0 0
    %377 = vmatprep.subr.bf16.mxu0 0
    %378 = vmatpush1.bf16.msra.mxu0 0
    %379 = vmatprep.subr.bf16.mxu0 0
    %380 = vmatpush1.bf16.msra.mxu0 0
    %381 = vmatprep.subr.bf16.mxu0 0
    %382 = vmatpush1.bf16.msra.mxu0 0
    %383 = vmatprep.subr.bf16.mxu0 0
    %384 = vmatpush1.bf16.msra.mxu0 0
    %385 = vmatprep.subr.bf16.mxu0 0
    %386 = vmatpush1.bf16.msra.mxu0 0
    %387 = vmatprep.subr.bf16.mxu0 0
    %388 = vmatpush1.bf16.msra.mxu0 0
    %389 = vmatprep.subr.bf16.mxu0 0
    %390 = vmatpush1.bf16.msra.mxu0 0
    %391 = vmatprep.mubr.bf16.mxu0 0
    %392 = vmatmul.mubr.bf16.gmra.mrb[0].mxu0 %v357
    %v393 = vpop.f32.mrb[0].mxu0
    %v394 = vadd.f32 %v342, %v393
    %v395 = vpop.f32.mrb[0].mxu0
    %v396 = vpop.f32.mrb[0].mxu0
    %v397 = vadd.f32 %v342, %v396
    %v398 = vpop.f32.mrb[0].mxu0
    %399 = vdwg.mxu0
    %v400 = vpack.c.bf16 %v394, %v394
    %402 = vrot.lane.b32.xlu0 %v400, 96
    %v403 = vpop.permute.xlu0 %402
    %vm404 = vcmask 130048
    %v406 = vsel %vm404, %v400, 0
    %v409 = vsel %vm404, %v403, 0
    %411 = vmatprep.subr.bf16.mxu0 0
    %412 = vmatpush1.bf16.xpose.msra.mxu0 %v409
    %413 = vmatprep.subr.bf16.mxu0 0
    %414 = vmatpush1.bf16.xpose.msra.mxu0 0
    %415 = vmatprep.subr.bf16.mxu0 0
    %416 = vmatpush1.bf16.xpose.msra.mxu0 0
    %417 = vmatprep.subr.bf16.mxu0 0
    %418 = vmatpush1.bf16.xpose.msra.mxu0 0
    %419 = vmatprep.subr.bf16.mxu0 0
    %420 = vmatpush1.bf16.xpose.msra.mxu0 0
    %421 = vmatprep.subr.bf16.mxu0 0
    %422 = vmatpush1.bf16.xpose.msra.mxu0 0
    %423 = vmatprep.subr.bf16.mxu0 0
    %424 = vmatpush1.bf16.xpose.msra.mxu0 0
    %425 = vmatprep.subr.bf16.mxu0 0
    %426 = vmatpush1.bf16.xpose.msra.mxu0 0
    %427 = vmatprep.subr.bf16.mxu0 0
    %428 = vmatpush1.bf16.xpose.msra.mxu0 0
    %429 = vmatprep.subr.bf16.mxu0 0
    %430 = vmatpush1.bf16.xpose.msra.mxu0 0
    %431 = vmatprep.subr.bf16.mxu0 0
    %432 = vmatpush1.bf16.xpose.msra.mxu0 0
    %433 = vmatprep.subr.bf16.mxu0 0
    %434 = vmatpush1.bf16.xpose.msra.mxu0 0
    %435 = vmatprep.subr.bf16.mxu0 0
    %436 = vmatpush1.bf16.xpose.msra.mxu0 0
    %437 = vmatprep.subr.bf16.mxu0 0
    %438 = vmatpush1.bf16.xpose.msra.mxu0 0
    %439 = vmatprep.subr.bf16.mxu0 0
    %440 = vmatpush1.bf16.xpose.msra.mxu0 0
    %441 = vmatprep.subr.bf16.mxu0 0
    %442 = vmatpush1.bf16.xpose.msra.mxu0 0
    %443 = vmatprep.mubr.bf16.mxu0 0
    %444 = vmatmul.mubr.bf16.gmra.mrb[0].mxu0 %v406
    %v445 = vpop.f32.mrb[0].mxu0
    %v446 = vadd.f32 0.0, %v445
    %v447 = vpop.f32.mrb[0].mxu0
    %v448 = vpop.f32.mrb[0].mxu0
    %v449 = vpop.f32.mrb[0].mxu0
    %450 = vdwg.mxu0
    %v451 = vmul.f32 %v446, 0.25
    %v452 = vlaneseq
    %v453 = vshrl.u32 %v452, 7
    %v454 = vsub.s32 0, %v453
    %v455 = vrot.slane %v140, %v454
    %v456 = vadd.f32 %v451, %v455
    %vm457 = vcmask 64512
    %v458 = vsel %vm457, %v456, -inf
    %459 = vmax.xlane.f32.xlu0 %v458
    %v460 = vpop.xlane.xlu0 %459
    %v461 = vsub.f32 %v456, %v460
    %v462 = vmul.f32 %v461, 1.442695
    %v463 = vpow.pop %v462
    %v464 = vsel %vm457, %v463, 0.0
    %465 = vadd.xlane.f32.xlu0 %v464
    %v466 = vpop.xlane.xlu0 %465
    %v467 = vrcp.pop %v466
    %v468 = vmul.f32 %v463, %v467
    %v469 = vpack.c.bf16 %v468, %v468
    %470 = vrot.lane.b32.xlu0 %v400, 64
    %v471 = vpop.permute.xlu0 %470
    %v473 = vsel %vm457, %v469, 0
    %vm475 = vcmask 1043456
    %v477 = vsel %vm475, %v471, 0
    %479 = vmatprep.subr.bf16.mxu0 0
    %480 = vmatpush1.bf16.msra.mxu0 %v477
    %481 = vmatprep.subr.bf16.mxu0 0
    %482 = vmatpush1.bf16.msra.mxu0 0
    %483 = vmatprep.subr.bf16.mxu0 0
    %484 = vmatpush1.bf16.msra.mxu0 0
    %485 = vmatprep.subr.bf16.mxu0 0
    %486 = vmatpush1.bf16.msra.mxu0 0
    %487 = vmatprep.subr.bf16.mxu0 0
    %488 = vmatpush1.bf16.msra.mxu0 0
    %489 = vmatprep.subr.bf16.mxu0 0
    %490 = vmatpush1.bf16.msra.mxu0 0
    %491 = vmatprep.subr.bf16.mxu0 0
    %492 = vmatpush1.bf16.msra.mxu0 0
    %493 = vmatprep.subr.bf16.mxu0 0
    %494 = vmatpush1.bf16.msra.mxu0 0
    %495 = vmatprep.subr.bf16.mxu0 0
    %496 = vmatpush1.bf16.msra.mxu0 0
    %497 = vmatprep.subr.bf16.mxu0 0
    %498 = vmatpush1.bf16.msra.mxu0 0
    %499 = vmatprep.subr.bf16.mxu0 0
    %500 = vmatpush1.bf16.msra.mxu0 0
    %501 = vmatprep.subr.bf16.mxu0 0
    %502 = vmatpush1.bf16.msra.mxu0 0
    %503 = vmatprep.subr.bf16.mxu0 0
    %504 = vmatpush1.bf16.msra.mxu0 0
    %505 = vmatprep.subr.bf16.mxu0 0
    %506 = vmatpush1.bf16.msra.mxu0 0
    %507 = vmatprep.subr.bf16.mxu0 0
    %508 = vmatpush1.bf16.msra.mxu0 0
    %509 = vmatprep.subr.bf16.mxu0 0
    %510 = vmatpush1.bf16.msra.mxu0 0
    %511 = vmatprep.mubr.bf16.mxu0 0
    %512 = vmatmul.mubr.bf16.gmra.mrb[0].mxu0 %v473
    %v513 = vpop.f32.mrb[0].mxu0
    %v514 = vadd.f32 0.0, %v513
    %v515 = vpop.f32.mrb[0].mxu0
    %v516 = vpop.f32.mrb[0].mxu0
    %v517 = vpop.f32.mrb[0].mxu0
    %518 = vdwg.mxu0
    %519 = vst.msk [vmem:[#allocation2] sm:$0xff] %vm404, %v514
    %520 = vrot.lane.b32.xlu0 %v400, 112
    %v521 = vpop.permute.xlu0 %520
    %522 = vrot.lane.b32.xlu0 %v400, 80
    %v523 = vpop.permute.xlu0 %522
    %v525 = vsel %vm404, %v521, 0
    %v528 = vsel %vm404, %v523, 0
    %530 = vmatprep.subr.bf16.mxu0 0
    %531 = vmatpush1.bf16.xpose.msra.mxu0 %v528
    %532 = vmatprep.subr.bf16.mxu0 0
    %533 = vmatpush1.bf16.xpose.msra.mxu0 0
    %534 = vmatprep.subr.bf16.mxu0 0
    %535 = vmatpush1.bf16.xpose.msra.mxu0 0
    %536 = vmatprep.subr.bf16.mxu0 0
    %537 = vmatpush1.bf16.xpose.msra.mxu0 0
    %538 = vmatprep.subr.bf16.mxu0 0
    %539 = vmatpush1.bf16.xpose.msra.mxu0 0
    %540 = vmatprep.subr.bf16.mxu0 0
    %541 = vmatpush1.bf16.xpose.msra.mxu0 0
    %542 = vmatprep.subr.bf16.mxu0 0
    %543 = vmatpush1.bf16.xpose.msra.mxu0 0
    %544 = vmatprep.subr.bf16.mxu0 0
    %545 = vmatpush1.bf16.xpose.msra.mxu0 0
    %546 = vmatprep.subr.bf16.mxu0 0
    %547 = vmatpush1.bf16.xpose.msra.mxu0 0
    %548 = vmatprep.subr.bf16.mxu0 0
    %549 = vmatpush1.bf16.xpose.msra.mxu0 0
    %550 = vmatprep.subr.bf16.mxu0 0
    %551 = vmatpush1.bf16.xpose.msra.mxu0 0
    %552 = vmatprep.subr.bf16.mxu0 0
    %553 = vmatpush1.bf16.xpose.msra.mxu0 0
    %554 = vmatprep.subr.bf16.mxu0 0
    %555 = vmatpush1.bf16.xpose.msra.mxu0 0
    %556 = vmatprep.subr.bf16.mxu0 0
    %557 = vmatpush1.bf16.xpose.msra.mxu0 0
    %558 = vmatprep.subr.bf16.mxu0 0
    %559 = vmatpush1.bf16.xpose.msra.mxu0 0
    %560 = vmatprep.subr.bf16.mxu0 0
    %561 = vmatpush1.bf16.xpose.msra.mxu0 0
    %562 = vmatprep.mubr.bf16.mxu0 0
    %563 = vmatmul.mubr.bf16.gmra.mrb[0].mxu0 %v525
    %v564 = vpop.f32.mrb[0].mxu0
    %v565 = vadd.f32 0.0, %v564
    %v566 = vpop.f32.mrb[0].mxu0
    %v567 = vpop.f32.mrb[0].mxu0
    %v568 = vpop.f32.mrb[0].mxu0
    %569 = vdwg.mxu0
    %v570 = vmul.f32 %v565, 0.25
    %v571 = vadd.f32 %v570, %v455
    %v572 = vsel %vm457, %v571, -inf
    %573 = vmax.xlane.f32.xlu0 %v572
    %v574 = vpop.xlane.xlu0 %573
    %v575 = vsub.f32 %v571, %v574
    %v576 = vmul.f32 %v575, 1.442695
    %v577 = vpow.pop %v576
    %v578 = vsel %vm457, %v577, 0.0
    %579 = vadd.xlane.f32.xlu0 %v578
    %v580 = vpop.xlane.xlu0 %579
    %v581 = vrcp.pop %v580
    %v582 = vmul.f32 %v577, %v581
    %v583 = vpack.c.bf16 %v582, %v582
    %584 = vrot.lane.b32.xlu0 %v400, 48
    %v585 = vpop.permute.xlu0 %584
    %v587 = vsel %vm457, %v583, 0
    %v590 = vsel %vm475, %v585, 0
    %592 = vmatprep.subr.bf16.mxu0 0
    %593 = vmatpush1.bf16.msra.mxu0 %v590
    %594 = vmatprep.subr.bf16.mxu0 0
    %595 = vmatpush1.bf16.msra.mxu0 0
    %596 = vmatprep.subr.bf16.mxu0 0
    %597 = vmatpush1.bf16.msra.mxu0 0
    %598 = vmatprep.subr.bf16.mxu0 0
    %599 = vmatpush1.bf16.msra.mxu0 0
    %600 = vmatprep.subr.bf16.mxu0 0
    %601 = vmatpush1.bf16.msra.mxu0 0
    %602 = vmatprep.subr.bf16.mxu0 0
    %603 = vmatpush1.bf16.msra.mxu0 0
    %604 = vmatprep.subr.bf16.mxu0 0
    %605 = vmatpush1.bf16.msra.mxu0 0
    %606 = vmatprep.subr.bf16.mxu0 0
    %607 = vmatpush1.bf16.msra.mxu0 0
    %608 = vmatprep.subr.bf16.mxu0 0
    %609 = vmatpush1.bf16.msra.mxu0 0
    %610 = vmatprep.subr.bf16.mxu0 0
    %611 = vmatpush1.bf16.msra.mxu0 0
    %612 = vmatprep.subr.bf16.mxu0 0
    %613 = vmatpush1.bf16.msra.mxu0 0
    %614 = vmatprep.subr.bf16.mxu0 0
    %615 = vmatpush1.bf16.msra.mxu0 0
    %616 = vmatprep.subr.bf16.mxu0 0
    %617 = vmatpush1.bf16.msra.mxu0 0
    %618 = vmatprep.subr.bf16.mxu0 0
    %619 = vmatpush1.bf16.msra.mxu0 0
    %620 = vmatprep.subr.bf16.mxu0 0
    %621 = vmatpush1.bf16.msra.mxu0 0
    %622 = vmatprep.subr.bf16.mxu0 0
    %623 = vmatpush1.bf16.msra.mxu0 0
    %624 = vmatprep.mubr.bf16.mxu0 0
    %625 = vmatmul.mubr.bf16.gmra.mrb[0].mxu0 %v587
    %v626 = vpop.f32.mrb[0].mxu0
    %v627 = vadd.f32 0.0, %v626
    %v628 = vpop.f32.mrb[0].mxu0
    %v629 = vpop.f32.mrb[0].mxu0
    %v630 = vpop.f32.mrb[0].mxu0
    %631 = vdwg.mxu0
    %633 = vrot.lane.b32.xlu0 %v627, 16
    %v634 = vpop.permute.xlu0 %633
    %vm636 = vcmask 261248
    %637 = vst.msk [vmem:[#allocation2] sm:$0xff] %vm636, %v634
    %v638 = vpack.c.bf16 %v397, %v397
    %640 = vrot.lane.b32.xlu0 %v638, 96
    %v641 = vpop.permute.xlu0 %640
    %v643 = vsel %vm404, %v638, 0
    %v646 = vsel %vm404, %v641, 0
    %648 = vmatprep.subr.bf16.mxu0 0
    %649 = vmatpush1.bf16.xpose.msra.mxu0 %v646
    %650 = vmatprep.subr.bf16.mxu0 0
    %651 = vmatpush1.bf16.xpose.msra.mxu0 0
    %652 = vmatprep.subr.bf16.mxu0 0
    %653 = vmatpush1.bf16.xpose.msra.mxu0 0
    %654 = vmatprep.subr.bf16.mxu0 0
    %655 = vmatpush1.bf16.xpose.msra.mxu0 0
    %656 = vmatprep.subr.bf16.mxu0 0
    %657 = vmatpush1.bf16.xpose.msra.mxu0 0
    %658 = vmatprep.subr.bf16.mxu0 0
    %659 = vmatpush1.bf16.xpose.msra.mxu0 0
    %660 = vmatprep.subr.bf16.mxu0 0
    %661 = vmatpush1.bf16.xpose.msra.mxu0 0
    %662 = vmatprep.subr.bf16.mxu0 0
    %663 = vmatpush1.bf16.xpose.msra.mxu0 0
    %664 = vmatprep.subr.bf16.mxu0 0
    %665 = vmatpush1.bf16.xpose.msra.mxu0 0
    %666 = vmatprep.subr.bf16.mxu0 0
    %667 = vmatpush1.bf16.xpose.msra.mxu0 0
    %668 = vmatprep.subr.bf16.mxu0 0
    %669 = vmatpush1.bf16.xpose.msra.mxu0 0
    %670 = vmatprep.subr.bf16.mxu0 0
    %671 = vmatpush1.bf16.xpose.msra.mxu0 0
    %672 = vmatprep.subr.bf16.mxu0 0
    %673 = vmatpush1.bf16.xpose.msra.mxu0 0
    %674 = vmatprep.subr.bf16.mxu0 0
    %675 = vmatpush1.bf16.xpose.msra.mxu0 0
    %676 = vmatprep.subr.bf16.mxu0 0
    %677 = vmatpush1.bf16.xpose.msra.mxu0 0
    %678 = vmatprep.subr.bf16.mxu0 0
    %679 = vmatpush1.bf16.xpose.msra.mxu0 0
    %680 = vmatprep.mubr.bf16.mxu0 0
    %681 = vmatmul.mubr.bf16.gmra.mrb[0].mxu0 %v643
    %v682 = vpop.f32.mrb[0].mxu0
    %v683 = vadd.f32 0.0, %v682
    %v684 = vpop.f32.mrb[0].mxu0
    %v685 = vpop.f32.mrb[0].mxu0
    %v686 = vpop.f32.mrb[0].mxu0
    %687 = vdwg.mxu0
    %v688 = vmul.f32 %v683, 0.25
    %v689 = vlaneseq
    %v690 = vshrl.u32 %v689, 7
    %v691 = vsub.s32 1, %v690
    %v692 = vrot.slane %v140, %v691
    %v693 = vadd.f32 %v688, %v692
    %v694 = vsel %vm457, %v693, -inf
    %695 = vmax.xlane.f32.xlu0 %v694
    %v696 = vpop.xlane.xlu0 %695
    %v697 = vsub.f32 %v693, %v696
    %v698 = vmul.f32 %v697, 1.442695
    %v699 = vpow.pop %v698
    %v700 = vsel %vm457, %v699, 0.0
    %701 = vadd.xlane.f32.xlu0 %v700
    %v702 = vpop.xlane.xlu0 %701
    %v703 = vrcp.pop %v702
    %v704 = vmul.f32 %v699, %v703
    %v705 = vpack.c.bf16 %v704, %v704
    %706 = vrot.lane.b32.xlu0 %v638, 64
    %v707 = vpop.permute.xlu0 %706
    %v709 = vsel %vm457, %v705, 0
    %v712 = vsel %vm475, %v707, 0
    %714 = vmatprep.subr.bf16.mxu0 0
    %715 = vmatpush1.bf16.msra.mxu0 %v712
    %716 = vmatprep.subr.bf16.mxu0 0
    %717 = vmatpush1.bf16.msra.mxu0 0
    %718 = vmatprep.subr.bf16.mxu0 0
    %719 = vmatpush1.bf16.msra.mxu0 0
    %720 = vmatprep.subr.bf16.mxu0 0
    %721 = vmatpush1.bf16.msra.mxu0 0
    %722 = vmatprep.subr.bf16.mxu0 0
    %723 = vmatpush1.bf16.msra.mxu0 0
    %724 = vmatprep.subr.bf16.mxu0 0
    %725 = vmatpush1.bf16.msra.mxu0 0
    %726 = vmatprep.subr.bf16.mxu0 0
    %727 = vmatpush1.bf16.msra.mxu0 0
    %728 = vmatprep.subr.bf16.mxu0 0
    %729 = vmatpush1.bf16.msra.mxu0 0
    %730 = vmatprep.subr.bf16.mxu0 0
    %731 = vmatpush1.bf16.msra.mxu0 0
    %732 = vmatprep.subr.bf16.mxu0 0
    %733 = vmatpush1.bf16.msra.mxu0 0
    %734 = vmatprep.subr.bf16.mxu0 0
    %735 = vmatpush1.bf16.msra.mxu0 0
    %736 = vmatprep.subr.bf16.mxu0 0
    %737 = vmatpush1.bf16.msra.mxu0 0
    %738 = vmatprep.subr.bf16.mxu0 0
    %739 = vmatpush1.bf16.msra.mxu0 0
    %740 = vmatprep.subr.bf16.mxu0 0
    %741 = vmatpush1.bf16.msra.mxu0 0
    %742 = vmatprep.subr.bf16.mxu0 0
    %743 = vmatpush1.bf16.msra.mxu0 0
    %744 = vmatprep.subr.bf16.mxu0 0
    %745 = vmatpush1.bf16.msra.mxu0 0
    %746 = vmatprep.mubr.bf16.mxu0 0
    %747 = vmatmul.mubr.bf16.gmra.mrb[0].mxu0 %v709
    %v748 = vpop.f32.mrb[0].mxu0
    %v749 = vadd.f32 0.0, %v748
    %v750 = vpop.f32.mrb[0].mxu0
    %v751 = vpop.f32.mrb[0].mxu0
    %v752 = vpop.f32.mrb[0].mxu0
    %753 = vdwg.mxu0
    %754 = vst.msk [vmem:[#allocation2 + $0x8] sm:$0xff] %vm404, %v749
    %755 = vrot.lane.b32.xlu0 %v638, 112
    %v756 = vpop.permute.xlu0 %755
    %757 = vrot.lane.b32.xlu0 %v638, 80
    %v758 = vpop.permute.xlu0 %757
    %v760 = vsel %vm404, %v756, 0
    %v763 = vsel %vm404, %v758, 0
    %765 = vmatprep.subr.bf16.mxu0 0
    %766 = vmatpush1.bf16.xpose.msra.mxu0 %v763
    %767 = vmatprep.subr.bf16.mxu0 0
    %768 = vmatpush1.bf16.xpose.msra.mxu0 0
    %769 = vmatprep.subr.bf16.mxu0 0
    %770 = vmatpush1.bf16.xpose.msra.mxu0 0
    %771 = vmatprep.subr.bf16.mxu0 0
    %772 = vmatpush1.bf16.xpose.msra.mxu0 0
    %773 = vmatprep.subr.bf16.mxu0 0
    %774 = vmatpush1.bf16.xpose.msra.mxu0 0
    %775 = vmatprep.subr.bf16.mxu0 0
    %776 = vmatpush1.bf16.xpose.msra.mxu0 0
    %777 = vmatprep.subr.bf16.mxu0 0
    %778 = vmatpush1.bf16.xpose.msra.mxu0 0
    %779 = vmatprep.subr.bf16.mxu0 0
    %780 = vmatpush1.bf16.xpose.msra.mxu0 0
    %781 = vmatprep.subr.bf16.mxu0 0
    %782 = vmatpush1.bf16.xpose.msra.mxu0 0
    %783 = vmatprep.subr.bf16.mxu0 0
    %784 = vmatpush1.bf16.xpose.msra.mxu0 0
    %785 = vmatprep.subr.bf16.mxu0 0
    %786 = vmatpush1.bf16.xpose.msra.mxu0 0
    %787 = vmatprep.subr.bf16.mxu0 0
    %788 = vmatpush1.bf16.xpose.msra.mxu0 0
    %789 = vmatprep.subr.bf16.mxu0 0
    %790 = vmatpush1.bf16.xpose.msra.mxu0 0
    %791 = vmatprep.subr.bf16.mxu0 0
    %792 = vmatpush1.bf16.xpose.msra.mxu0 0
    %793 = vmatprep.subr.bf16.mxu0 0
    %794 = vmatpush1.bf16.xpose.msra.mxu0 0
    %795 = vmatprep.subr.bf16.mxu0 0
    %796 = vmatpush1.bf16.xpose.msra.mxu0 0
    %797 = vmatprep.mubr.bf16.mxu0 0
    %798 = vmatmul.mubr.bf16.gmra.mrb[0].mxu0 %v760
    %v799 = vpop.f32.mrb[0].mxu0
    %v800 = vadd.f32 0.0, %v799
    %v801 = vpop.f32.mrb[0].mxu0
    %v802 = vpop.f32.mrb[0].mxu0
    %v803 = vpop.f32.mrb[0].mxu0
    %804 = vdwg.mxu0
    %v805 = vmul.f32 %v800, 0.25
    %v806 = vadd.f32 %v805, %v692
    %v807 = vsel %vm457, %v806, -inf
    %808 = vmax.xlane.f32.xlu0 %v807
    %v809 = vpop.xlane.xlu0 %808
    %v810 = vsub.f32 %v806, %v809
    %v811 = vmul.f32 %v810, 1.442695
    %v812 = vpow.pop %v811
    %v813 = vsel %vm457, %v812, 0.0
    %814 = vadd.xlane.f32.xlu0 %v813
    %v815 = vpop.xlane.xlu0 %814
    %v816 = vrcp.pop %v815
    %v817 = vmul.f32 %v812, %v816
    %v818 = vpack.c.bf16 %v817, %v817
    %819 = vrot.lane.b32.xlu0 %v638, 48
    %v820 = vpop.permute.xlu0 %819
    %v822 = vsel %vm457, %v818, 0
    %v825 = vsel %vm475, %v820, 0
    %827 = vmatprep.subr.bf16.mxu0 0
    %828 = vmatpush1.bf16.msra.mxu0 %v825
    %829 = vmatprep.subr.bf16.mxu0 0
    %830 = vmatpush1.bf16.msra.mxu0 0
    %831 = vmatprep.subr.bf16.mxu0 0
    %832 = vmatpush1.bf16.msra.mxu0 0
    %833 = vmatprep.subr.bf16.mxu0 0
    %834 = vmatpush1.bf16.msra.mxu0 0
    %835 = vmatprep.subr.bf16.mxu0 0
    %836 = vmatpush1.bf16.msra.mxu0 0
    %837 = vmatprep.subr.bf16.mxu0 0
    %838 = vmatpush1.bf16.msra.mxu0 0
    %839 = vmatprep.subr.bf16.mxu0 0
    %840 = vmatpush1.bf16.msra.mxu0 0
    %841 = vmatprep.subr.bf16.mxu0 0
    %842 = vmatpush1.bf16.msra.mxu0 0
    %843 = vmatprep.subr.bf16.mxu0 0
    %844 = vmatpush1.bf16.msra.mxu0 0
    %845 = vmatprep.subr.bf16.mxu0 0
    %846 = vmatpush1.bf16.msra.mxu0 0
    %847 = vmatprep.subr.bf16.mxu0 0
    %848 = vmatpush1.bf16.msra.mxu0 0
    %849 = vmatprep.subr.bf16.mxu0 0
    %850 = vmatpush1.bf16.msra.mxu0 0
    %851 = vmatprep.subr.bf16.mxu0 0
    %852 = vmatpush1.bf16.msra.mxu0 0
    %853 = vmatprep.subr.bf16.mxu0 0
    %854 = vmatpush1.bf16.msra.mxu0 0
    %855 = vmatprep.subr.bf16.mxu0 0
    %856 = vmatpush1.bf16.msra.mxu0 0
    %857 = vmatprep.subr.bf16.mxu0 0
    %858 = vmatpush1.bf16.msra.mxu0 0
    %859 = vmatprep.mubr.bf16.mxu0 0
    %860 = vmatmul.mubr.bf16.gmra.mrb[0].mxu0 %v822
    %v861 = vpop.f32.mrb[0].mxu0
    %v862 = vadd.f32 0.0, %v861
    %v863 = vpop.f32.mrb[0].mxu0
    %v864 = vpop.f32.mrb[0].mxu0
    %v865 = vpop.f32.mrb[0].mxu0
    %866 = vdwg.mxu0
    %868 = vrot.lane.b32.xlu0 %v862, 16
    %v869 = vpop.permute.xlu0 %868
    %871 = vst.msk [vmem:[#allocation2 + $0x8] sm:$0xff] %vm636, %v869
    %v872 = vld [vmem:[#allocation2] sm:$0xff]
    %v873 = vld [vmem:[#allocation2 + $0x8] sm:$0xff]
    %v874 = vpack.c.bf16 %v873, %v872
    %v876 = vlaneseq
    %v877 = vshrl.u32 %v876, 7
    %v878 = vsub.s32 0, %v877
    %v879 = vrot.slane %v318, %v878
    %v885 = vunpack.c.l.b16 %v314
    %v886 = vunpack.c.l.b16 %v315
    %v887 = vunpack.c.l.b16 %v316
    %v888 = vunpack.c.l.b16 %v317
    %v889 = vpack.c.b16 %v886, %v885
    %v890 = vpack.c.b16 %v888, %v887
    %v894 = vsel %vm265, %v874, 0
    %896 = vmatprep.subr.bf16.mxu0 0
    %897 = vmatpush1.bf16.msra.mxu0 %v889
    %898 = vmatprep.subr.bf16.mxu0 0
    %899 = vmatpush1.bf16.msra.mxu0 %v890
    %900 = vmatprep.subr.bf16.mxu0 0
    %901 = vmatpush1.bf16.msra.mxu0 0
    %902 = vmatprep.subr.bf16.mxu0 0
    %903 = vmatpush1.bf16.msra.mxu0 0
    %904 = vmatprep.subr.bf16.mxu0 0
    %905 = vmatpush1.bf16.msra.mxu0 0
    %906 = vmatprep.subr.bf16.mxu0 0
    %907 = vmatpush1.bf16.msra.mxu0 0
    %908 = vmatprep.subr.bf16.mxu0 0
    %909 = vmatpush1.bf16.msra.mxu0 0
    %910 = vmatprep.subr.bf16.mxu0 0
    %911 = vmatpush1.bf16.msra.mxu0 0
    %912 = vmatprep.subr.bf16.mxu0 0
    %913 = vmatpush1.bf16.msra.mxu0 0
    %914 = vmatprep.subr.bf16.mxu0 0
    %915 = vmatpush1.bf16.msra.mxu0 0
    %916 = vmatprep.subr.bf16.mxu0 0
    %917 = vmatpush1.bf16.msra.mxu0 0
    %918 = vmatprep.subr.bf16.mxu0 0
    %919 = vmatpush1.bf16.msra.mxu0 0
    %920 = vmatprep.subr.bf16.mxu0 0
    %921 = vmatpush1.bf16.msra.mxu0 0
    %922 = vmatprep.subr.bf16.mxu0 0
    %923 = vmatpush1.bf16.msra.mxu0 0
    %924 = vmatprep.subr.bf16.mxu0 0
    %925 = vmatpush1.bf16.msra.mxu0 0
    %926 = vmatprep.subr.bf16.mxu0 0
    %927 = vmatpush1.bf16.msra.mxu0 0
    %928 = vmatprep.mubr.bf16.mxu0 0
    %929 = vmatmul.mubr.bf16.gmra.mrb[0].mxu0 %v894
    %v930 = vpop.f32.mrb[0].mxu0
    %v931 = vadd.f32 %v879, %v930
    %v932 = vpop.f32.mrb[0].mxu0
    %v933 = vpop.f32.mrb[0].mxu0
    %v934 = vadd.f32 %v879, %v933
    %v935 = vpop.f32.mrb[0].mxu0
    %936 = vdwg.mxu0
    %v937 = vadd.f32 %v931, %v307
    %v938 = vadd.f32 %v934, %v308
    %v939 = vsel %vm265, %v937, 0.0
    %940 = vadd.xlane.f32.xlu0 %v939
    %v941 = vpop.xlane.xlu0 %940
    %v942 = vsel %vm265, %v938, 0.0
    %943 = vadd.xlane.f32.xlu0 %v942
    %v944 = vpop.xlane.xlu0 %943
    %v945 = vmul.f32 %v941, %v272
    %v946 = vmul.f32 %v944, %v272
    %v947 = vsub.f32 %v937, %v945
    %v948 = vsub.f32 %v938, %v946
    %v949 = vmul.f32 %v947, %v947
    %v950 = vmul.f32 %v948, %v948
    %v951 = vsel %vm265, %v949, 0.0
    %952 = vadd.xlane.f32.xlu0 %v951
    %v953 = vpop.xlane.xlu0 %952
    %v954 = vsel %vm265, %v950, 0.0
    %955 = vadd.xlane.f32.xlu0 %v954
    %v956 = vpop.xlane.xlu0 %955
    %v957 = vmul.f32 %v953, %v272
    %v958 = vmul.f32 %v956, %v272
    %v959 = vadd.f32 %v957, 1e-12
    %v960 = vadd.f32 %v958, 1e-12
    %v961 = vrsqrt.pop %v959
    %v962 = vrsqrt.pop %v960
    %v963 = vmul.f32 %v947, %v961
    %v964 = vmul.f32 %v948, %v962
    %v966 = vlaneseq
    %v967 = vshrl.u32 %v966, 7
    %v968 = vsub.s32 0, %v967
    %v969 = vrot.slane %v319, %v968
    %v971 = vmul.f32 %v963, %v969
    %v972 = vmul.f32 %v964, %v969
    %v974 = vlaneseq
    %v975 = vshrl.u32 %v974, 7
    %v976 = vsub.s32 0, %v975
    %v977 = vrot.slane %v320, %v976
    %v979 = vadd.f32 %v971, %v977
    %v980 = vadd.f32 %v972, %v977
    %v981 = vpack.c.bf16 %v980, %v979
    %v983 = vlaneseq
    %v984 = vshrl.u32 %v983, 7
    %v985 = vsub.s32 0, %v984
    %v986 = vrot.slane %v325, %v985
    %v992 = vunpack.c.l.b16 %v321
    %v993 = vunpack.c.l.b16 %v322
    %v994 = vunpack.c.l.b16 %v323
    %v995 = vunpack.c.l.b16 %v324
    %v996 = vpack.c.b16 %v993, %v992
    %v997 = vpack.c.b16 %v995, %v994
    %v1001 = vsel %vm265, %v981, 0
    %1003 = vmatprep.subr.bf16.mxu0 0
    %1004 = vmatpush1.bf16.msra.mxu0 %v996
    %1005 = vmatprep.subr.bf16.mxu0 0
    %1006 = vmatpush1.bf16.msra.mxu0 %v997
    %1007 = vmatprep.subr.bf16.mxu0 0
    %1008 = vmatpush1.bf16.msra.mxu0 0
    %1009 = vmatprep.subr.bf16.mxu0 0
    %1010 = vmatpush1.bf16.msra.mxu0 0
    %1011 = vmatprep.subr.bf16.mxu0 0
    %1012 = vmatpush1.bf16.msra.mxu0 0
    %1013 = vmatprep.subr.bf16.mxu0 0
    %1014 = vmatpush1.bf16.msra.mxu0 0
    %1015 = vmatprep.subr.bf16.mxu0 0
    %1016 = vmatpush1.bf16.msra.mxu0 0
    %1017 = vmatprep.subr.bf16.mxu0 0
    %1018 = vmatpush1.bf16.msra.mxu0 0
    %1019 = vmatprep.subr.bf16.mxu0 0
    %1020 = vmatpush1.bf16.msra.mxu0 0
    %1021 = vmatprep.subr.bf16.mxu0 0
    %1022 = vmatpush1.bf16.msra.mxu0 0
    %1023 = vmatprep.subr.bf16.mxu0 0
    %1024 = vmatpush1.bf16.msra.mxu0 0
    %1025 = vmatprep.subr.bf16.mxu0 0
    %1026 = vmatpush1.bf16.msra.mxu0 0
    %1027 = vmatprep.subr.bf16.mxu0 0
    %1028 = vmatpush1.bf16.msra.mxu0 0
    %1029 = vmatprep.subr.bf16.mxu0 0
    %1030 = vmatpush1.bf16.msra.mxu0 0
    %1031 = vmatprep.subr.bf16.mxu0 0
    %1032 = vmatpush1.bf16.msra.mxu0 0
    %1033 = vmatprep.subr.bf16.mxu0 0
    %1034 = vmatpush1.bf16.msra.mxu0 0
    %1035 = vmatprep.mubr.bf16.mxu0 0
    %1036 = vmatmul.mubr.bf16.gmra.mrb[0].mxu0 %v1001
    %v1037 = vpop.f32.mrb[0].mxu0
    %v1038 = vadd.f32 %v986, %v1037
    %v1039 = vpop.f32.mrb[0].mxu0
    %v1040 = vpop.f32.mrb[0].mxu0
    %v1041 = vadd.f32 %v986, %v1040
    %v1042 = vpop.f32.mrb[0].mxu0
    %1043 = vdwg.mxu0
    %v1044 = vmul.f32 %v1038, 0.5
    %v1045 = vmul.f32 %v1041, 0.5
    %v1046 = vmul.f32 %v1038, 0.044715
    %v1047 = vmul.f32 %v1041, 0.044715
    %v1048 = vmul.f32 %v1046, %v1038
    %v1049 = vmul.f32 %v1047, %v1041
    %v1050 = vmul.f32 %v1048, %v1038
    %v1051 = vmul.f32 %v1049, %v1041
    %v1052 = vadd.f32 %v1038, %v1050
    %v1053 = vadd.f32 %v1041, %v1051
    %v1054 = vmul.f32 %v1052, 0.7978846
    %v1055 = vmul.f32 %v1053, 0.7978846
    %v1056 = vtanh.pop %v1054
    %v1057 = vtanh.pop %v1055
    %v1058 = vadd.f32 %v1056, 1.0
    %v1059 = vadd.f32 %v1057, 1.0
    %v1060 = vmul.f32 %v1044, %v1058
    %v1061 = vmul.f32 %v1045, %v1059
    %v1062 = vpack.c.bf16 %v1061, %v1060
    %v1064 = vlaneseq
    %v1065 = vshrl.u32 %v1064, 7
    %v1066 = vsub.s32 0, %v1065
    %v1067 = vrot.slane %v334, %v1066
    %v1077 = vunpack.c.l.b16 %v326
    %v1078 = vunpack.c.l.b16 %v327
    %v1079 = vunpack.c.l.b16 %v328
    %v1080 = vunpack.c.l.b16 %v329
    %v1081 = vunpack.c.l.b16 %v330
    %v1082 = vunpack.c.l.b16 %v331
    %v1083 = vunpack.c.l.b16 %v332
    %v1084 = vunpack.c.l.b16 %v333
    %v1085 = vpack.c.b16 %v1078, %v1077
    %v1086 = vpack.c.b16 %v1080, %v1079
    %v1087 = vpack.c.b16 %v1082, %v1081
    %v1088 = vpack.c.b16 %v1084, %v1083
    %vm1093 = vcmask 523264
    %v1095 = vsel %vm1093, %v1062, 0
    %1097 = vmatprep.subr.bf16.mxu0 0
    %1098 = vmatpush1.bf16.msra.mxu0 %v1085
    %1099 = vmatprep.subr.bf16.mxu0 0
    %1100 = vmatpush1.bf16.msra.mxu0 %v1086
    %1101 = vmatprep.subr.bf16.mxu0 0
    %1102 = vmatpush1.bf16.msra.mxu0 %v1087
    %1103 = vmatprep.subr.bf16.mxu0 0
    %1104 = vmatpush1.bf16.msra.mxu0 %v1088
    %1105 = vmatprep.subr.bf16.mxu0 0
    %1106 = vmatpush1.bf16.msra.mxu0 0
    %1107 = vmatprep.subr.bf16.mxu0 0
    %1108 = vmatpush1.bf16.msra.mxu0 0
    %1109 = vmatprep.subr.bf16.mxu0 0
    %1110 = vmatpush1.bf16.msra.mxu0 0
    %1111 = vmatprep.subr.bf16.mxu0 0
    %1112 = vmatpush1.bf16.msra.mxu0 0
    %1113 = vmatprep.subr.bf16.mxu0 0
    %1114 = vmatpush1.bf16.msra.mxu0 0
    %1115 = vmatprep.subr.bf16.mxu0 0
    %1116 = vmatpush1.bf16.msra.mxu0 0
    %1117 = vmatprep.subr.bf16.mxu0 0
    %1118 = vmatpush1.bf16.msra.mxu0 0
    %1119 = vmatprep.subr.bf16.mxu0 0
    %1120 = vmatpush1.bf16.msra.mxu0 0
    %1121 = vmatprep.subr.bf16.mxu0 0
    %1122 = vmatpush1.bf16.msra.mxu0 0
    %1123 = vmatprep.subr.bf16.mxu0 0
    %1124 = vmatpush1.bf16.msra.mxu0 0
    %1125 = vmatprep.subr.bf16.mxu0 0
    %1126 = vmatpush1.bf16.msra.mxu0 0
    %1127 = vmatprep.subr.bf16.mxu0 0
    %1128 = vmatpush1.bf16.msra.mxu0 0
    %1129 = vmatprep.mubr.bf16.mxu0 0
    %1130 = vmatmul.mubr.bf16.gmra.mrb[0].mxu0 %v1095
    %v1131 = vpop.f32.mrb[0].mxu0
    %v1132 = vadd.f32 %v1067, %v1131
    %v1133 = vpop.f32.mrb[0].mxu0
    %v1134 = vpop.f32.mrb[0].mxu0
    %v1135 = vadd.f32 %v1067, %v1134
    %v1136 = vpop.f32.mrb[0].mxu0
    %1137 = vdwg.mxu0
    %v1138 = vadd.f32 %v1132, %v979
    %v1139 = vadd.f32 %v1135, %v980
    %v1140 = vsel %vm265, %v1138, 0.0
    %1141 = vadd.xlane.f32.xlu0 %v1140
    %v1142 = vpop.xlane.xlu0 %1141
    %v1143 = vsel %vm265, %v1139, 0.0
    %1144 = vadd.xlane.f32.xlu0 %v1143
    %v1145 = vpop.xlane.xlu0 %1144
    %v1146 = vmul.f32 %v1142, %v272
    %v1147 = vmul.f32 %v1145, %v272
    %v1148 = vsub.f32 %v1138, %v1146
    %v1149 = vsub.f32 %v1139, %v1147
    %v1150 = vmul.f32 %v1148, %v1148
    %v1151 = vmul.f32 %v1149, %v1149
    %v1152 = vsel %vm265, %v1150, 0.0
    %1153 = vadd.xlane.f32.xlu0 %v1152
    %v1154 = vpop.xlane.xlu0 %1153
    %v1155 = vsel %vm265, %v1151, 0.0
    %1156 = vadd.xlane.f32.xlu0 %v1155
    %v1157 = vpop.xlane.xlu0 %1156
    %v1158 = vmul.f32 %v1154, %v272
    %v1159 = vmul.f32 %v1157, %v272
    %v1160 = vadd.f32 %v1158, 1e-12
    %v1161 = vadd.f32 %v1159, 1e-12
    %v1162 = vrsqrt.pop %v1160
    %v1163 = vrsqrt.pop %v1161
    %v1164 = vmul.f32 %v1148, %v1162
    %v1165 = vmul.f32 %v1149, %v1163
    %v1167 = vlaneseq
    %v1168 = vshrl.u32 %v1167, 7
    %v1169 = vsub.s32 0, %v1168
    %v1170 = vrot.slane %v335, %v1169
    %v1172 = vmul.f32 %v1164, %v1170
    %v1173 = vmul.f32 %v1165, %v1170
    %v1175 = vlaneseq
    %v1176 = vshrl.u32 %v1175, 7
    %v1177 = vsub.s32 0, %v1176
    %v1178 = vrot.slane %v336, %v1177
    %v1180 = vadd.f32 %v1172, %v1178
    %v1181 = vadd.f32 %v1173, %v1178
    %v1182 = vld [vmem:[%s37] sm:$0xf]
    %v1183 = vld [vmem:[%s37 + $0x4] sm:$0xf]
    %v1184 = vld [vmem:[%s37 + $0x8] sm:$0xf]
    %v1185 = vld [vmem:[%s37 + $0xc] sm:$0xf]
    %v1186 = vld [vmem:[%s39] sm:$0x1]
    %v1187 = vld [vmem:[%s41] sm:$0xf]
    %v1188 = vld [vmem:[%s41 + $0x4] sm:$0xf]
    %v1189 = vld [vmem:[%s41 + $0x8] sm:$0xf]
    %v1190 = vld [vmem:[%s41 + $0xc] sm:$0xf]
    %v1191 = vld [vmem:[%s43] sm:$0x1]
    %v1192 = vld [vmem:[%s45] sm:$0x1]
    %v1193 = vld [vmem:[%s47] sm:$0x1]
    %v1194 = vld [vmem:[%s49] sm:$0xf]
    %v1195 = vld [vmem:[%s49 + $0x4] sm:$0xf]
    %v1196 = vld [vmem:[%s49 + $0x8] sm:$0xf]
    %v1197 = vld [vmem:[%s49 + $0xc] sm:$0xf]
    %v1198 = vld [vmem:[%s51] sm:$0x1]
    %v1199 = vld [vmem:[%s53] sm:$0xf]
    %v1200 = vld [vmem:[%s53 + $0x4] sm:$0xf]
    %v1201 = vld [vmem:[%s53 + $0x8] sm:$0xf]
    %v1202 = vld [vmem:[%s53 + $0xc] sm:$0xf]
    %v1203 = vld [vmem:[%s53 + $0x10] sm:$0xf]
    %v1204 = vld [vmem:[%s53 + $0x14] sm:$0xf]
    %v1205 = vld [vmem:[%s53 + $0x18] sm:$0xf]
    %v1206 = vld [vmem:[%s53 + $0x1c] sm:$0xf]
    %v1207 = vld [vmem:[%s55] sm:$0x1]
    %v1208 = vld [vmem:[%s57] sm:$0x1]
    %v1209 = vld [vmem:[%s59] sm:$0x1]
    %v1210 = vpack.c.bf16 %v1181, %v1180
    %v1212 = vlaneseq
    %v1213 = vshrl.u32 %v1212, 7
    %v1214 = vsub.s32 0, %v1213
    %v1215 = vrot.slane %v1186, %v1214
    %v1221 = vunpack.c.l.b16 %v1182
    %v1222 = vunpack.c.l.b16 %v1183
    %v1223 = vunpack.c.l.b16 %v1184
    %v1224 = vunpack.c.l.b16 %v1185
    %v1225 = vpack.c.b16 %v1222, %v1221
    %v1226 = vpack.c.b16 %v1224, %v1223
    %v1230 = vsel %vm265, %v1210, 0
    %1232 = vmatprep.subr.bf16.mxu0 0
    %1233 = vmatpush1.bf16.msra.mxu0 %v1225
    %1234 = vmatprep.subr.bf16.mxu0 0
    %1235 = vmatpush1.bf16.msra.mxu0 %v1226
    %1236 = vmatprep.subr.bf16.mxu0 0
    %1237 = vmatpush1.bf16.msra.mxu0 0
    %1238 = vmatprep.subr.bf16.mxu0 0
    %1239 = vmatpush1.bf16.msra.mxu0 0
    %1240 = vmatprep.subr.bf16.mxu0 0
    %1241 = vmatpush1.bf16.msra.mxu0 0
    %1242 = vmatprep.subr.bf16.mxu0 0
    %1243 = vmatpush1.bf16.msra.mxu0 0
    %1244 = vmatprep.subr.bf16.mxu0 0
    %1245 = vmatpush1.bf16.msra.mxu0 0
    %1246 = vmatprep.subr.bf16.mxu0 0
    %1247 = vmatpush1.bf16.msra.mxu0 0
    %1248 = vmatprep.subr.bf16.mxu0 0
    %1249 = vmatpush1.bf16.msra.mxu0 0
    %1250 = vmatprep.subr.bf16.mxu0 0
    %1251 = vmatpush1.bf16.msra.mxu0 0
    %1252 = vmatprep.subr.bf16.mxu0 0
    %1253 = vmatpush1.bf16.msra.mxu0 0
    %1254 = vmatprep.subr.bf16.mxu0 0
    %1255 = vmatpush1.bf16.msra.mxu0 0
    %1256 = vmatprep.subr.bf16.mxu0 0
    %1257 = vmatpush1.bf16.msra.mxu0 0
    %1258 = vmatprep.subr.bf16.mxu0 0
    %1259 = vmatpush1.bf16.msra.mxu0 0
    %1260 = vmatprep.subr.bf16.mxu0 0
    %1261 = vmatpush1.bf16.msra.mxu0 0
    %1262 = vmatprep.subr.bf16.mxu0 0
    %1263 = vmatpush1.bf16.msra.mxu0 0
    %1264 = vmatprep.mubr.bf16.mxu0 0
    %1265 = vmatmul.mubr.bf16.gmra.mrb[0].mxu0 %v1230
    %v1266 = vpop.f32.mrb[0].mxu0
    %v1267 = vadd.f32 %v1215, %v1266
    %v1268 = vpop.f32.mrb[0].mxu0
    %v1269 = vpop.f32.mrb[0].mxu0
    %v1270 = vadd.f32 %v1215, %v1269
    %v1271 = vpop.f32.mrb[0].mxu0
    %1272 = vdwg.mxu0
    %v1273 = vpack.c.bf16 %v1267, %v1267
    %1275 = vrot.lane.b32.xlu0 %v1273, 96
    %v1276 = vpop.permute.xlu0 %1275
    %v1278 = vsel %vm404, %v1273, 0
    %v1281 = vsel %vm404, %v1276, 0
    %1283 = vmatprep.subr.bf16.mxu0 0
    %1284 = vmatpush1.bf16.xpose.msra.mxu0 %v1281
    %1285 = vmatprep.subr.bf16.mxu0 0
    %1286 = vmatpush1.bf16.xpose.msra.mxu0 0
    %1287 = vmatprep.subr.bf16.mxu0 0
    %1288 = vmatpush1.bf16.xpose.msra.mxu0 0
    %1289 = vmatprep.subr.bf16.mxu0 0
    %1290 = vmatpush1.bf16.xpose.msra.mxu0 0
    %1291 = vmatprep.subr.bf16.mxu0 0
    %1292 = vmatpush1.bf16.xpose.msra.mxu0 0
    %1293 = vmatprep.subr.bf16.mxu0 0
    %1294 = vmatpush1.bf16.xpose.msra.mxu0 0
    %1295 = vmatprep.subr.bf16.mxu0 0
    %1296 = vmatpush1.bf16.xpose.msra.mxu0 0
    %1297 = vmatprep.subr.bf16.mxu0 0
    %1298 = vmatpush1.bf16.xpose.msra.mxu0 0
    %1299 = vmatprep.subr.bf16.mxu0 0
    %1300 = vmatpush1.bf16.xpose.msra.mxu0 0
    %1301 = vmatprep.subr.bf16.mxu0 0
    %1302 = vmatpush1.bf16.xpose.msra.mxu0 0
    %1303 = vmatprep.subr.bf16.mxu0 0
    %1304 = vmatpush1.bf16.xpose.msra.mxu0 0
    %1305 = vmatprep.subr.bf16.mxu0 0
    %1306 = vmatpush1.bf16.xpose.msra.mxu0 0
    %1307 = vmatprep.subr.bf16.mxu0 0
    %1308 = vmatpush1.bf16.xpose.msra.mxu0 0
    %1309 = vmatprep.subr.bf16.mxu0 0
    %1310 = vmatpush1.bf16.xpose.msra.mxu0 0
    %1311 = vmatprep.subr.bf16.mxu0 0
    %1312 = vmatpush1.bf16.xpose.msra.mxu0 0
    %1313 = vmatprep.subr.bf16.mxu0 0
    %1314 = vmatpush1.bf16.xpose.msra.mxu0 0
    %1315 = vmatprep.mubr.bf16.mxu0 0
    %1316 = vmatmul.mubr.bf16.gmra.mrb[0].mxu0 %v1278
    %v1317 = vpop.f32.mrb[0].mxu0
    %v1318 = vadd.f32 0.0, %v1317
    %v1319 = vpop.f32.mrb[0].mxu0
    %v1320 = vpop.f32.mrb[0].mxu0
    %v1321 = vpop.f32.mrb[0].mxu0
    %1322 = vdwg.mxu0
    %v1323 = vmul.f32 %v1318, 0.25
    %v1324 = vadd.f32 %v1323, %v455
    %v1325 = vsel %vm457, %v1324, -inf
    %1326 = vmax.xlane.f32.xlu0 %v1325
    %v1327 = vpop.xlane.xlu0 %1326
    %v1328 = vsub.f32 %v1324, %v1327
    %v1329 = vmul.f32 %v1328, 1.442695
    %v1330 = vpow.pop %v1329
    %v1331 = vsel %vm457, %v1330, 0.0
    %1332 = vadd.xlane.f32.xlu0 %v1331
    %v1333 = vpop.xlane.xlu0 %1332
    %v1334 = vrcp.pop %v1333
    %v1335 = vmul.f32 %v1330, %v1334
    %v1336 = vpack.c.bf16 %v1335, %v1335
    %1337 = vrot.lane.b32.xlu0 %v1273, 64
    %v1338 = vpop.permute.xlu0 %1337
    %v1340 = vsel %vm457, %v1336, 0
    %v1343 = vsel %vm475, %v1338, 0
    %1345 = vmatprep.subr.bf16.mxu0 0
    %1346 = vmatpush1.bf16.msra.mxu0 %v1343
    %1347 = vmatprep.subr.bf16.mxu0 0
    %1348 = vmatpush1.bf16.msra.mxu0 0
    %1349 = vmatprep.subr.bf16.mxu0 0
    %1350 = vmatpush1.bf16.msra.mxu0 0
    %1351 = vmatprep.subr.bf16.mxu0 0
    %1352 = vmatpush1.bf16.msra.mxu0 0
    %1353 = vmatprep.subr.bf16.mxu0 0
    %1354 = vmatpush1.bf16.msra.mxu0 0
    %1355 = vmatprep.subr.bf16.mxu0 0
    %1356 = vmatpush1.bf16.msra.mxu0 0
    %1357 = vmatprep.subr.bf16.mxu0 0
    %1358 = vmatpush1.bf16.msra.mxu0 0
    %1359 = vmatprep.subr.bf16.mxu0 0
    %1360 = vmatpush1.bf16.msra.mxu0 0
    %1361 = vmatprep.subr.bf16.mxu0 0
    %1362 = vmatpush1.bf16.msra.mxu0 0
    %1363 = vmatprep.subr.bf16.mxu0 0
    %1364 = vmatpush1.bf16.msra.mxu0 0
    %1365 = vmatprep.subr.bf16.mxu0 0
    %1366 = vmatpush1.bf16.msra.mxu0 0
    %1367 = vmatprep.subr.bf16.mxu0 0
    %1368 = vmatpush1.bf16.msra.mxu0 0
    %1369 = vmatprep.subr.bf16.mxu0 0
    %1370 = vmatpush1.bf16.msra.mxu0 0
    %1371 = vmatprep.subr.bf16.mxu0 0
    %1372 = vmatpush1.bf16.msra.mxu0 0
    %1373 = vmatprep.subr.bf16.mxu0 0
    %1374 = vmatpush1.bf16.msra.mxu0 0
    %1375 = vmatprep.subr.bf16.mxu0 0
    %1376 = vmatpush1.bf16.msra.mxu0 0
    %1377 = vmatprep.mubr.bf16.mxu0 0
    %1378 = vmatmul.mubr.bf16.gmra.mrb[0].mxu0 %v1340
    %v1379 = vpop.f32.mrb[0].mxu0
    %v1380 = vadd.f32 0.0, %v1379
    %v1381 = vpop.f32.mrb[0].mxu0
    %v1382 = vpop.f32.mrb[0].mxu0
    %v1383 = vpop.f32.mrb[0].mxu0
    %1384 = vdwg.mxu0
    %1385 = vst.msk [vmem:[#allocation2] sm:$0xff] %vm404, %v1380
    %1386 = vrot.lane.b32.xlu0 %v1273, 112
    %v1387 = vpop.permute.xlu0 %1386
    %1388 = vrot.lane.b32.xlu0 %v1273, 80
    %v1389 = vpop.permute.xlu0 %1388
    %v1391 = vsel %vm404, %v1387, 0
    %v1394 = vsel %vm404, %v1389, 0
    %1396 = vmatprep.subr.bf16.mxu0 0
    %1397 = vmatpush1.bf16.xpose.msra.mxu0 %v1394
    %1398 = vmatprep.subr.bf16.mxu0 0
    %1399 = vmatpush1.bf16.xpose.msra.mxu0 0
    %1400 = vmatprep.subr.bf16.mxu0 0
    %1401 = vmatpush1.bf16.xpose.msra.mxu0 0
    %1402 = vmatprep.subr.bf16.mxu0 0
    %1403 = vmatpush1.bf16.xpose.msra.mxu0 0
    %1404 = vmatprep.subr.bf16.mxu0 0
    %1405 = vmatpush1.bf16.xpose.msra.mxu0 0
    %1406 = vmatprep.subr.bf16.mxu0 0
    %1407 = vmatpush1.bf16.xpose.msra.mxu0 0
    %1408 = vmatprep.subr.bf16.mxu0 0
    %1409 = vmatpush1.bf16.xpose.msra.mxu0 0
    %1410 = vmatprep.subr.bf16.mxu0 0
    %1411 = vmatpush1.bf16.xpose.msra.mxu0 0
    %1412 = vmatprep.subr.bf16.mxu0 0
    %1413 = vmatpush1.bf16.xpose.msra.mxu0 0
    %1414 = vmatprep.subr.bf16.mxu0 0
    %1415 = vmatpush1.bf16.xpose.msra.mxu0 0
    %1416 = vmatprep.subr.bf16.mxu0 0
    %1417 = vmatpush1.bf16.xpose.msra.mxu0 0
    %1418 = vmatprep.subr.bf16.mxu0 0
    %1419 = vmatpush1.bf16.xpose.msra.mxu0 0
    %1420 = vmatprep.subr.bf16.mxu0 0
    %1421 = vmatpush1.bf16.xpose.msra.mxu0 0
    %1422 = vmatprep.subr.bf16.mxu0 0
    %1423 = vmatpush1.bf16.xpose.msra.mxu0 0
    %1424 = vmatprep.subr.bf16.mxu0 0
    %1425 = vmatpush1.bf16.xpose.msra.mxu0 0
    %1426 = vmatprep.subr.bf16.mxu0 0
    %1427 = vmatpush1.bf16.xpose.msra.mxu0 0
    %1428 = vmatprep.mubr.bf16.mxu0 0
    %1429 = vmatmul.mubr.bf16.gmra.mrb[0].mxu0 %v1391
    %v1430 = vpop.f32.mrb[0].mxu0
    %v1431 = vadd.f32 0.0, %v1430
    %v1432 = vpop.f32.mrb[0].mxu0
    %v1433 = vpop.f32.mrb[0].mxu0
    %v1434 = vpop.f32.mrb[0].mxu0
    %1435 = vdwg.mxu0
    %v1436 = vmul.f32 %v1431, 0.25
    %v1437 = vadd.f32 %v1436, %v455
    %v1438 = vsel %vm457, %v1437, -inf
    %1439 = vmax.xlane.f32.xlu0 %v1438
    %v1440 = vpop.xlane.xlu0 %1439
    %v1441 = vsub.f32 %v1437, %v1440
    %v1442 = vmul.f32 %v1441, 1.442695
    %v1443 = vpow.pop %v1442
    %v1444 = vsel %vm457, %v1443, 0.0
    %1445 = vadd.xlane.f32.xlu0 %v1444
    %v1446 = vpop.xlane.xlu0 %1445
    %v1447 = vrcp.pop %v1446
    %v1448 = vmul.f32 %v1443, %v1447
    %v1449 = vpack.c.bf16 %v1448, %v1448
    %1450 = vrot.lane.b32.xlu0 %v1273, 48
    %v1451 = vpop.permute.xlu0 %1450
    %v1453 = vsel %vm457, %v1449, 0
    %v1456 = vsel %vm475, %v1451, 0
    %1458 = vmatprep.subr.bf16.mxu0 0
    %1459 = vmatpush1.bf16.msra.mxu0 %v1456
    %1460 = vmatprep.subr.bf16.mxu0 0
    %1461 = vmatpush1.bf16.msra.mxu0 0
    %1462 = vmatprep.subr.bf16.mxu0 0
    %1463 = vmatpush1.bf16.msra.mxu0 0
    %1464 = vmatprep.subr.bf16.mxu0 0
    %1465 = vmatpush1.bf16.msra.mxu0 0
    %1466 = vmatprep.subr.bf16.mxu0 0
    %1467 = vmatpush1.bf16.msra.mxu0 0
    %1468 = vmatprep.subr.bf16.mxu0 0
    %1469 = vmatpush1.bf16.msra.mxu0 0
    %1470 = vmatprep.subr.bf16.mxu0 0
    %1471 = vmatpush1.bf16.msra.mxu0 0
    %1472 = vmatprep.subr.bf16.mxu0 0
    %1473 = vmatpush1.bf16.msra.mxu0 0
    %1474 = vmatprep.subr.bf16.mxu0 0
    %1475 = vmatpush1.bf16.msra.mxu0 0
    %1476 = vmatprep.subr.bf16.mxu0 0
    %1477 = vmatpush1.bf16.msra.mxu0 0
    %1478 = vmatprep.subr.bf16.mxu0 0
    %1479 = vmatpush1.bf16.msra.mxu0 0
    %1480 = vmatprep.subr.bf16.mxu0 0
    %1481 = vmatpush1.bf16.msra.mxu0 0
    %1482 = vmatprep.subr.bf16.mxu0 0
    %1483 = vmatpush1.bf16.msra.mxu0 0
    %1484 = vmatprep.subr.bf16.mxu0 0
    %1485 = vmatpush1.bf16.msra.mxu0 0
    %1486 = vmatprep.subr.bf16.mxu0 0
    %1487 = vmatpush1.bf16.msra.mxu0 0
    %1488 = vmatprep.subr.bf16.mxu0 0
    %1489 = vmatpush1.bf16.msra.mxu0 0
    %1490 = vmatprep.mubr.bf16.mxu0 0
    %1491 = vmatmul.mubr.bf16.gmra.mrb[0].mxu0 %v1453
    %v1492 = vpop.f32.mrb[0].mxu0
    %v1493 = vadd.f32 0.0, %v1492
    %v1494 = vpop.f32.mrb[0].mxu0
    %v1495 = vpop.f32.mrb[0].mxu0
    %v1496 = vpop.f32.mrb[0].mxu0
    %1497 = vdwg.mxu0
    %1499 = vrot.lane.b32.xlu0 %v1493, 16
    %v1500 = vpop.permute.xlu0 %1499
    %1502 = vst.msk [vmem:[#allocation2] sm:$0xff] %vm636, %v1500
    %v1503 = vpack.c.bf16 %v1270, %v1270
    %1505 = vrot.lane.b32.xlu0 %v1503, 96
    %v1506 = vpop.permute.xlu0 %1505
    %v1508 = vsel %vm404, %v1503, 0
    %v1511 = vsel %vm404, %v1506, 0
    %1513 = vmatprep.subr.bf16.mxu0 0
    %1514 = vmatpush1.bf16.xpose.msra.mxu0 %v1511
    %1515 = vmatprep.subr.bf16.mxu0 0
    %1516 = vmatpush1.bf16.xpose.msra.mxu0 0
    %1517 = vmatprep.subr.bf16.mxu0 0
    %1518 = vmatpush1.bf16.xpose.msra.mxu0 0
    %1519 = vmatprep.subr.bf16.mxu0 0
    %1520 = vmatpush1.bf16.xpose.msra.mxu0 0
    %1521 = vmatprep.subr.bf16.mxu0 0
    %1522 = vmatpush1.bf16.xpose.msra.mxu0 0
    %1523 = vmatprep.subr.bf16.mxu0 0
    %1524 = vmatpush1.bf16.xpose.msra.mxu0 0
    %1525 = vmatprep.subr.bf16.mxu0 0
    %1526 = vmatpush1.bf16.xpose.msra.mxu0 0
    %1527 = vmatprep.subr.bf16.mxu0 0
    %1528 = vmatpush1.bf16.xpose.msra.mxu0 0
    %1529 = vmatprep.subr.bf16.mxu0 0
    %1530 = vmatpush1.bf16.xpose.msra.mxu0 0
    %1531 = vmatprep.subr.bf16.mxu0 0
    %1532 = vmatpush1.bf16.xpose.msra.mxu0 0
    %1533 = vmatprep.subr.bf16.mxu0 0
    %1534 = vmatpush1.bf16.xpose.msra.mxu0 0
    %1535 = vmatprep.subr.bf16.mxu0 0
    %1536 = vmatpush1.bf16.xpose.msra.mxu0 0
    %1537 = vmatprep.subr.bf16.mxu0 0
    %1538 = vmatpush1.bf16.xpose.msra.mxu0 0
    %1539 = vmatprep.subr.bf16.mxu0 0
    %1540 = vmatpush1.bf16.xpose.msra.mxu0 0
    %1541 = vmatprep.subr.bf16.mxu0 0
    %1542 = vmatpush1.bf16.xpose.msra.mxu0 0
    %1543 = vmatprep.subr.bf16.mxu0 0
    %1544 = vmatpush1.bf16.xpose.msra.mxu0 0
    %1545 = vmatprep.mubr.bf16.mxu0 0
    %1546 = vmatmul.mubr.bf16.gmra.mrb[0].mxu0 %v1508
    %v1547 = vpop.f32.mrb[0].mxu0
    %v1548 = vadd.f32 0.0, %v1547
    %v1549 = vpop.f32.mrb[0].mxu0
    %v1550 = vpop.f32.mrb[0].mxu0
    %v1551 = vpop.f32.mrb[0].mxu0
    %1552 = vdwg.mxu0
    %v1553 = vmul.f32 %v1548, 0.25
    %v1554 = vadd.f32 %v1553, %v692
    %v1555 = vsel %vm457, %v1554, -inf
    %1556 = vmax.xlane.f32.xlu0 %v1555
    %v1557 = vpop.xlane.xlu0 %1556
    %v1558 = vsub.f32 %v1554, %v1557
    %v1559 = vmul.f32 %v1558, 1.442695
    %v1560 = vpow.pop %v1559
    %v1561 = vsel %vm457, %v1560, 0.0
    %1562 = vadd.xlane.f32.xlu0 %v1561
    %v1563 = vpop.xlane.xlu0 %1562
    %v1564 = vrcp.pop %v1563
    %v1565 = vmul.f32 %v1560, %v1564
    %v1566 = vpack.c.bf16 %v1565, %v1565
    %1567 = vrot.lane.b32.xlu0 %v1503, 64
    %v1568 = vpop.permute.xlu0 %1567
    %v1570 = vsel %vm457, %v1566, 0
    %v1573 = vsel %vm475, %v1568, 0
    %1575 = vmatprep.subr.bf16.mxu0 0
    %1576 = vmatpush1.bf16.msra.mxu0 %v1573
    %1577 = vmatprep.subr.bf16.mxu0 0
    %1578 = vmatpush1.bf16.msra.mxu0 0
    %1579 = vmatprep.subr.bf16.mxu0 0
    %1580 = vmatpush1.bf16.msra.mxu0 0
    %1581 = vmatprep.subr.bf16.mxu0 0
    %1582 = vmatpush1.bf16.msra.mxu0 0
    %1583 = vmatprep.subr.bf16.mxu0 0
    %1584 = vmatpush1.bf16.msra.mxu0 0
    %1585 = vmatprep.subr.bf16.mxu0 0
    %1586 = vmatpush1.bf16.msra.mxu0 0
    %1587 = vmatprep.subr.bf16.mxu0 0
    %1588 = vmatpush1.bf16.msra.mxu0 0
    %1589 = vmatprep.subr.bf16.mxu0 0
    %1590 = vmatpush1.bf16.msra.mxu0 0
    %1591 = vmatprep.subr.bf16.mxu0 0
    %1592 = vmatpush1.bf16.msra.mxu0 0
    %1593 = vmatprep.subr.bf16.mxu0 0
    %1594 = vmatpush1.bf16.msra.mxu0 0
    %1595 = vmatprep.subr.bf16.mxu0 0
    %1596 = vmatpush1.bf16.msra.mxu0 0
    %1597 = vmatprep.subr.bf16.mxu0 0
    %1598 = vmatpush1.bf16.msra.mxu0 0
    %1599 = vmatprep.subr.bf16.mxu0 0
    %1600 = vmatpush1.bf16.msra.mxu0 0
    %1601 = vmatprep.subr.bf16.mxu0 0
    %1602 = vmatpush1.bf16.msra.mxu0 0
    %1603 = vmatprep.subr.bf16.mxu0 0
    %1604 = vmatpush1.bf16.msra.mxu0 0
    %1605 = vmatprep.subr.bf16.mxu0 0
    %1606 = vmatpush1.bf16.msra.mxu0 0
    %1607 = vmatprep.mubr.bf16.mxu0 0
    %1608 = vmatmul.mubr.bf16.gmra.mrb[0].mxu0 %v1570
    %v1609 = vpop.f32.mrb[0].mxu0
    %v1610 = vadd.f32 0.0, %v1609
    %v1611 = vpop.f32.mrb[0].mxu0
    %v1612 = vpop.f32.mrb[0].mxu0
    %v1613 = vpop.f32.mrb[0].mxu0
    %1614 = vdwg.mxu0
    %1615 = vst.msk [vmem:[#allocation2 + $0x8] sm:$0xff] %vm404, %v1610
    %1616 = vrot.lane.b32.xlu0 %v1503, 112
    %v1617 = vpop.permute.xlu0 %1616
    %1618 = vrot.lane.b32.xlu0 %v1503, 80
    %v1619 = vpop.permute.xlu0 %1618
    %v1621 = vsel %vm404, %v1617, 0
    %v1624 = vsel %vm404, %v1619, 0
    %1626 = vmatprep.subr.bf16.mxu0 0
    %1627 = vmatpush1.bf16.xpose.msra.mxu0 %v1624
    %1628 = vmatprep.subr.bf16.mxu0 0
    %1629 = vmatpush1.bf16.xpose.msra.mxu0 0
    %1630 = vmatprep.subr.bf16.mxu0 0
    %1631 = vmatpush1.bf16.xpose.msra.mxu0 0
    %1632 = vmatprep.subr.bf16.mxu0 0
    %1633 = vmatpush1.bf16.xpose.msra.mxu0 0
    %1634 = vmatprep.subr.bf16.mxu0 0
    %1635 = vmatpush1.bf16.xpose.msra.mxu0 0
    %1636 = vmatprep.subr.bf16.mxu0 0
    %1637 = vmatpush1.bf16.xpose.msra.mxu0 0
    %1638 = vmatprep.subr.bf16.mxu0 0
    %1639 = vmatpush1.bf16.xpose.msra.mxu0 0
    %1640 = vmatprep.subr.bf16.mxu0 0
    %1641 = vmatpush1.bf16.xpose.msra.mxu0 0
    %1642 = vmatprep.subr.bf16.mxu0 0
    %1643 = vmatpush1.bf16.xpose.msra.mxu0 0
    %1644 = vmatprep.subr.bf16.mxu0 0
    %1645 = vmatpush1.bf16.xpose.msra.mxu0 0
    %1646 = vmatprep.subr.bf16.mxu0 0
    %1647 = vmatpush1.bf16.xpose.msra.mxu0 0
    %1648 = vmatprep.subr.bf16.mxu0 0
    %1649 = vmatpush1.bf16.xpose.msra.mxu0 0
    %1650 = vmatprep.subr.bf16.mxu0 0
    %1651 = vmatpush1.bf16.xpose.msra.mxu0 0
    %1652 = vmatprep.subr.bf16.mxu0 0
    %1653 = vmatpush1.bf16.xpose.msra.mxu0 0
    %1654 = vmatprep.subr.bf16.mxu0 0
    %1655 = vmatpush1.bf16.xpose.msra.mxu0 0
    %1656 = vmatprep.subr.bf16.mxu0 0
    %1657 = vmatpush1.bf16.xpose.msra.mxu0 0
    %1658 = vmatprep.mubr.bf16.mxu0 0
    %1659 = vmatmul.mubr.bf16.gmra.mrb[0].mxu0 %v1621
    %v1660 = vpop.f32.mrb[0].mxu0
    %v1661 = vadd.f32 0.0, %v1660
    %v1662 = vpop.f32.mrb[0].mxu0
    %v1663 = vpop.f32.mrb[0].mxu0
    %v1664 = vpop.f32.mrb[0].mxu0
    %1665 = vdwg.mxu0
    %v1666 = vmul.f32 %v1661, 0.25
    %v1667 = vadd.f32 %v1666, %v692
    %v1668 = vsel %vm457, %v1667, -inf
    %1669 = vmax.xlane.f32.xlu0 %v1668
    %v1670 = vpop.xlane.xlu0 %1669
    %v1671 = vsub.f32 %v1667, %v1670
    %v1672 = vmul.f32 %v1671, 1.442695
    %v1673 = vpow.pop %v1672
    %v1674 = vsel %vm457, %v1673, 0.0
    %1675 = vadd.xlane.f32.xlu0 %v1674
    %v1676 = vpop.xlane.xlu0 %1675
    %v1677 = vrcp.pop %v1676
    %v1678 = vmul.f32 %v1673, %v1677
    %v1679 = vpack.c.bf16 %v1678, %v1678
    %1680 = vrot.lane.b32.xlu0 %v1503, 48
    %v1681 = vpop.permute.xlu0 %1680
    %v1683 = vsel %vm457, %v1679, 0
    %v1686 = vsel %vm475, %v1681, 0
    %1688 = vmatprep.subr.bf16.mxu0 0
    %1689 = vmatpush1.bf16.msra.mxu0 %v1686
    %1690 = vmatprep.subr.bf16.mxu0 0
    %1691 = vmatpush1.bf16.msra.mxu0 0
    %1692 = vmatprep.subr.bf16.mxu0 0
    %1693 = vmatpush1.bf16.msra.mxu0 0
    %1694 = vmatprep.subr.bf16.mxu0 0
    %1695 = vmatpush1.bf16.msra.mxu0 0
    %1696 = vmatprep.subr.bf16.mxu0 0
    %1697 = vmatpush1.bf16.msra.mxu0 0
    %1698 = vmatprep.subr.bf16.mxu0 0
    %1699 = vmatpush1.bf16.msra.mxu0 0
    %1700 = vmatprep.subr.bf16.mxu0 0
    %1701 = vmatpush1.bf16.msra.mxu0 0
    %1702 = vmatprep.subr.bf16.mxu0 0
    %1703 = vmatpush1.bf16.msra.mxu0 0
    %1704 = vmatprep.subr.bf16.mxu0 0
    %1705 = vmatpush1.bf16.msra.mxu0 0
    %1706 = vmatprep.subr.bf16.mxu0 0
    %1707 = vmatpush1.bf16.msra.mxu0 0
    %1708 = vmatprep.subr.bf16.mxu0 0
    %1709 = vmatpush1.bf16.msra.mxu0 0
    %1710 = vmatprep.subr.bf16.mxu0 0
    %1711 = vmatpush1.bf16.msra.mxu0 0
    %1712 = vmatprep.subr.bf16.mxu0 0
    %1713 = vmatpush1.bf16.msra.mxu0 0
    %1714 = vmatprep.subr.bf16.mxu0 0
    %1715 = vmatpush1.bf16.msra.mxu0 0
    %1716 = vmatprep.subr.bf16.mxu0 0
    %1717 = vmatpush1.bf16.msra.mxu0 0
    %1718 = vmatprep.subr.bf16.mxu0 0
    %1719 = vmatpush1.bf16.msra.mxu0 0
    %1720 = vmatprep.mubr.bf16.mxu0 0
    %1721 = vmatmul.mubr.bf16.gmra.mrb[0].mxu0 %v1683
    %v1722 = vpop.f32.mrb[0].mxu0
    %v1723 = vadd.f32 0.0, %v1722
    %v1724 = vpop.f32.mrb[0].mxu0
    %v1725 = vpop.f32.mrb[0].mxu0
    %v1726 = vpop.f32.mrb[0].mxu0
    %1727 = vdwg.mxu0
    %1729 = vrot.lane.b32.xlu0 %v1723, 16
    %v1730 = vpop.permute.xlu0 %1729
    %1732 = vst.msk [vmem:[#allocation2 + $0x8] sm:$0xff] %vm636, %v1730
    %v1733 = vld [vmem:[#allocation2] sm:$0xff]
    %v1734 = vld [vmem:[#allocation2 + $0x8] sm:$0xff]
    %v1735 = vpack.c.bf16 %v1734, %v1733
    %v1737 = vlaneseq
    %v1738 = vshrl.u32 %v1737, 7
    %v1739 = vsub.s32 0, %v1738
    %v1740 = vrot.slane %v1191, %v1739
    %v1746 = vunpack.c.l.b16 %v1187
    %v1747 = vunpack.c.l.b16 %v1188
    %v1748 = vunpack.c.l.b16 %v1189
    %v1749 = vunpack.c.l.b16 %v1190
    %v1750 = vpack.c.b16 %v1747, %v1746
    %v1751 = vpack.c.b16 %v1749, %v1748
    %v1755 = vsel %vm265, %v1735, 0
    %1757 = vmatprep.subr.bf16.mxu0 0
    %1758 = vmatpush1.bf16.msra.mxu0 %v1750
    %1759 = vmatprep.subr.bf16.mxu0 0
    %1760 = vmatpush1.bf16.msra.mxu0 %v1751
    %1761 = vmatprep.subr.bf16.mxu0 0
    %1762 = vmatpush1.bf16.msra.mxu0 0
    %1763 = vmatprep.subr.bf16.mxu0 0
    %1764 = vmatpush1.bf16.msra.mxu0 0
    %1765 = vmatprep.subr.bf16.mxu0 0
    %1766 = vmatpush1.bf16.msra.mxu0 0
    %1767 = vmatprep.subr.bf16.mxu0 0
    %1768 = vmatpush1.bf16.msra.mxu0 0
    %1769 = vmatprep.subr.bf16.mxu0 0
    %1770 = vmatpush1.bf16.msra.mxu0 0
    %1771 = vmatprep.subr.bf16.mxu0 0
    %1772 = vmatpush1.bf16.msra.mxu0 0
    %1773 = vmatprep.subr.bf16.mxu0 0
    %1774 = vmatpush1.bf16.msra.mxu0 0
    %1775 = vmatprep.subr.bf16.mxu0 0
    %1776 = vmatpush1.bf16.msra.mxu0 0
    %1777 = vmatprep.subr.bf16.mxu0 0
    %1778 = vmatpush1.bf16.msra.mxu0 0
    %1779 = vmatprep.subr.bf16.mxu0 0
    %1780 = vmatpush1.bf16.msra.mxu0 0
    %1781 = vmatprep.subr.bf16.mxu0 0
    %1782 = vmatpush1.bf16.msra.mxu0 0
    %1783 = vmatprep.subr.bf16.mxu0 0
    %1784 = vmatpush1.bf16.msra.mxu0 0
    %1785 = vmatprep.subr.bf16.mxu0 0
    %1786 = vmatpush1.bf16.msra.mxu0 0
    %1787 = vmatprep.subr.bf16.mxu0 0
    %1788 = vmatpush1.bf16.msra.mxu0 0
    %1789 = vmatprep.mubr.bf16.mxu0 0
    %1790 = vmatmul.mubr.bf16.gmra.mrb[0].mxu0 %v1755
    %v1791 = vpop.f32.mrb[0].mxu0
    %v1792 = vadd.f32 %v1740, %v1791
    %v1793 = vpop.f32.mrb[0].mxu0
    %v1794 = vpop.f32.mrb[0].mxu0
    %v1795 = vadd.f32 %v1740, %v1794
    %v1796 = vpop.f32.mrb[0].mxu0
    %1797 = vdwg.mxu0
    %v1798 = vadd.f32 %v1792, %v1180
    %v1799 = vadd.f32 %v1795, %v1181
    %v1800 = vsel %vm265, %v1798, 0.0
    %1801 = vadd.xlane.f32.xlu0 %v1800
    %v1802 = vpop.xlane.xlu0 %1801
    %v1803 = vsel %vm265, %v1799, 0.0
    %1804 = vadd.xlane.f32.xlu0 %v1803
    %v1805 = vpop.xlane.xlu0 %1804
    %v1806 = vmul.f32 %v1802, %v272
    %v1807 = vmul.f32 %v1805, %v272
    %v1808 = vsub.f32 %v1798, %v1806
    %v1809 = vsub.f32 %v1799, %v1807
    %v1810 = vmul.f32 %v1808, %v1808
    %v1811 = vmul.f32 %v1809, %v1809
    %v1812 = vsel %vm265, %v1810, 0.0
    %1813 = vadd.xlane.f32.xlu0 %v1812
    %v1814 = vpop.xlane.xlu0 %1813
    %v1815 = vsel %vm265, %v1811, 0.0
    %1816 = vadd.xlane.f32.xlu0 %v1815
    %v1817 = vpop.xlane.xlu0 %1816
    %v1818 = vmul.f32 %v1814, %v272
    %v1819 = vmul.f32 %v1817, %v272
    %v1820 = vadd.f32 %v1818, 1e-12
    %v1821 = vadd.f32 %v1819, 1e-12
    %v1822 = vrsqrt.pop %v1820
    %v1823 = vrsqrt.pop %v1821
    %v1824 = vmul.f32 %v1808, %v1822
    %v1825 = vmul.f32 %v1809, %v1823
    %v1827 = vlaneseq
    %v1828 = vshrl.u32 %v1827, 7
    %v1829 = vsub.s32 0, %v1828
    %v1830 = vrot.slane %v1192, %v1829
    %v1832 = vmul.f32 %v1824, %v1830
    %v1833 = vmul.f32 %v1825, %v1830
    %v1835 = vlaneseq
    %v1836 = vshrl.u32 %v1835, 7
    %v1837 = vsub.s32 0, %v1836
    %v1838 = vrot.slane %v1193, %v1837
    %v1840 = vadd.f32 %v1832, %v1838
    %v1841 = vadd.f32 %v1833, %v1838
    %v1842 = vpack.c.bf16 %v1841, %v1840
    %v1844 = vlaneseq
    %v1845 = vshrl.u32 %v1844, 7
    %v1846 = vsub.s32 0, %v1845
    %v1847 = vrot.slane %v1198, %v1846
    %v1853 = vunpack.c.l.b16 %v1194
    %v1854 = vunpack.c.l.b16 %v1195
    %v1855 = vunpack.c.l.b16 %v1196
    %v1856 = vunpack.c.l.b16 %v1197
    %v1857 = vpack.c.b16 %v1854, %v1853
    %v1858 = vpack.c.b16 %v1856, %v1855
    %v1862 = vsel %vm265, %v1842, 0
    %1864 = vmatprep.subr.bf16.mxu0 0
    %1865 = vmatpush1.bf16.msra.mxu0 %v1857
    %1866 = vmatprep.subr.bf16.mxu0 0
    %1867 = vmatpush1.bf16.msra.mxu0 %v1858
    %1868 = vmatprep.subr.bf16.mxu0 0
    %1869 = vmatpush1.bf16.msra.mxu0 0
    %1870 = vmatprep.subr.bf16.mxu0 0
    %1871 = vmatpush1.bf16.msra.mxu0 0
    %1872 = vmatprep.subr.bf16.mxu0 0
    %1873 = vmatpush1.bf16.msra.mxu0 0
    %1874 = vmatprep.subr.bf16.mxu0 0
    %1875 = vmatpush1.bf16.msra.mxu0 0
    %1876 = vmatprep.subr.bf16.mxu0 0
    %1877 = vmatpush1.bf16.msra.mxu0 0
    %1878 = vmatprep.subr.bf16.mxu0 0
    %1879 = vmatpush1.bf16.msra.mxu0 0
    %1880 = vmatprep.subr.bf16.mxu0 0
    %1881 = vmatpush1.bf16.msra.mxu0 0
    %1882 = vmatprep.subr.bf16.mxu0 0
    %1883 = vmatpush1.bf16.msra.mxu0 0
    %1884 = vmatprep.subr.bf16.mxu0 0
    %1885 = vmatpush1.bf16.msra.mxu0 0
    %1886 = vmatprep.subr.bf16.mxu0 0
    %1887 = vmatpush1.bf16.msra.mxu0 0
    %1888 = vmatprep.subr.bf16.mxu0 0
    %1889 = vmatpush1.bf16.msra.mxu0 0
    %1890 = vmatprep.subr.bf16.mxu0 0
    %1891 = vmatpush1.bf16.msra.mxu0 0
    %1892 = vmatprep.subr.bf16.mxu0 0
    %1893 = vmatpush1.bf16.msra.mxu0 0
    %1894 = vmatprep.subr.bf16.mxu0 0
    %1895 = vmatpush1.bf16.msra.mxu0 0
    %1896 = vmatprep.mubr.bf16.mxu0 0
    %1897 = vmatmul.mubr.bf16.gmra.mrb[0].mxu0 %v1862
    %v1898 = vpop.f32.mrb[0].mxu0
    %v1899 = vadd.f32 %v1847, %v1898
    %v1900 = vpop.f32.mrb[0].mxu0
    %v1901 = vpop.f32.mrb[0].mxu0
    %v1902 = vadd.f32 %v1847, %v1901
    %v1903 = vpop.f32.mrb[0].mxu0
    %1904 = vdwg.mxu0
    %v1905 = vmul.f32 %v1899, 0.5
    %v1906 = vmul.f32 %v1902, 0.5
    %v1907 = vmul.f32 %v1899, 0.044715
    %v1908 = vmul.f32 %v1902, 0.044715
    %v1909 = vmul.f32 %v1907, %v1899
    %v1910 = vmul.f32 %v1908, %v1902
    %v1911 = vmul.f32 %v1909, %v1899
    %v1912 = vmul.f32 %v1910, %v1902
    %v1913 = vadd.f32 %v1899, %v1911
    %v1914 = vadd.f32 %v1902, %v1912
    %v1915 = vmul.f32 %v1913, 0.7978846
    %v1916 = vmul.f32 %v1914, 0.7978846
    %v1917 = vtanh.pop %v1915
    %v1918 = vtanh.pop %v1916
    %v1919 = vadd.f32 %v1917, 1.0
    %v1920 = vadd.f32 %v1918, 1.0
    %v1921 = vmul.f32 %v1905, %v1919
    %v1922 = vmul.f32 %v1906, %v1920
    %v1923 = vpack.c.bf16 %v1922, %v1921
    %v1925 = vlaneseq
    %v1926 = vshrl.u32 %v1925, 7
    %v1927 = vsub.s32 0, %v1926
    %v1928 = vrot.slane %v1207, %v1927
    %v1938 = vunpack.c.l.b16 %v1199
    %v1939 = vunpack.c.l.b16 %v1200
    %v1940 = vunpack.c.l.b16 %v1201
    %v1941 = vunpack.c.l.b16 %v1202
    %v1942 = vunpack.c.l.b16 %v1203
    %v1943 = vunpack.c.l.b16 %v1204
    %v1944 = vunpack.c.l.b16 %v1205
    %v1945 = vunpack.c.l.b16 %v1206
    %v1946 = vpack.c.b16 %v1939, %v1938
    %v1947 = vpack.c.b16 %v1941, %v1940
    %v1948 = vpack.c.b16 %v1943, %v1942
    %v1949 = vpack.c.b16 %v1945, %v1944
    %v1955 = vsel %vm1093, %v1923, 0
    %1957 = vmatprep.subr.bf16.mxu0 0
    %1958 = vmatpush1.bf16.msra.mxu0 %v1946
    %1959 = vmatprep.subr.bf16.mxu0 0
    %1960 = vmatpush1.bf16.msra.mxu0 %v1947
    %1961 = vmatprep.subr.bf16.mxu0 0
    %1962 = vmatpush1.bf16.msra.mxu0 %v1948
    %1963 = vmatprep.subr.bf16.mxu0 0
    %1964 = vmatpush1.bf16.msra.mxu0 %v1949
    %1965 = vmatprep.subr.bf16.mxu0 0
    %1966 = vmatpush1.bf16.msra.mxu0 0
    %1967 = vmatprep.subr.bf16.mxu0 0
    %1968 = vmatpush1.bf16.msra.mxu0 0
    %1969 = vmatprep.subr.bf16.mxu0 0
    %1970 = vmatpush1.bf16.msra.mxu0 0
    %1971 = vmatprep.subr.bf16.mxu0 0
    %1972 = vmatpush1.bf16.msra.mxu0 0
    %1973 = vmatprep.subr.bf16.mxu0 0
    %1974 = vmatpush1.bf16.msra.mxu0 0
    %1975 = vmatprep.subr.bf16.mxu0 0
    %1976 = vmatpush1.bf16.msra.mxu0 0
    %1977 = vmatprep.subr.bf16.mxu0 0
    %1978 = vmatpush1.bf16.msra.mxu0 0
    %1979 = vmatprep.subr.bf16.mxu0 0
    %1980 = vmatpush1.bf16.msra.mxu0 0
    %1981 = vmatprep.subr.bf16.mxu0 0
    %1982 = vmatpush1.bf16.msra.mxu0 0
    %1983 = vmatprep.subr.bf16.mxu0 0
    %1984 = vmatpush1.bf16.msra.mxu0 0
    %1985 = vmatprep.subr.bf16.mxu0 0
    %1986 = vmatpush1.bf16.msra.mxu0 0
    %1987 = vmatprep.subr.bf16.mxu0 0
    %1988 = vmatpush1.bf16.msra.mxu0 0
    %1989 = vmatprep.mubr.bf16.mxu0 0
    %1990 = vmatmul.mubr.bf16.gmra.mrb[0].mxu0 %v1955
    %v1991 = vpop.f32.mrb[0].mxu0
    %v1992 = vadd.f32 %v1928, %v1991
    %v1993 = vpop.f32.mrb[0].mxu0
    %v1994 = vpop.f32.mrb[0].mxu0
    %v1995 = vadd.f32 %v1928, %v1994
    %v1996 = vpop.f32.mrb[0].mxu0
    %1997 = vdwg.mxu0
    %v1998 = vadd.f32 %v1992, %v1840
    %v1999 = vadd.f32 %v1995, %v1841
    %v2000 = vsel %vm265, %v1998, 0.0
    %2001 = vadd.xlane.f32.xlu0 %v2000
    %v2002 = vpop.xlane.xlu0 %2001
    %v2003 = vsel %vm265, %v1999, 0.0
    %2004 = vadd.xlane.f32.xlu0 %v2003
    %v2005 = vpop.xlane.xlu0 %2004
    %v2006 = vmul.f32 %v2002, %v272
    %v2007 = vmul.f32 %v2005, %v272
    %v2008 = vsub.f32 %v1998, %v2006
    %v2009 = vsub.f32 %v1999, %v2007
    %v2010 = vmul.f32 %v2008, %v2008
    %v2011 = vmul.f32 %v2009, %v2009
    %v2012 = vsel %vm265, %v2010, 0.0
    %2013 = vadd.xlane.f32.xlu0 %v2012
    %v2014 = vpop.xlane.xlu0 %2013
    %v2015 = vsel %vm265, %v2011, 0.0
    %2016 = vadd.xlane.f32.xlu0 %v2015
    %v2017 = vpop.xlane.xlu0 %2016
    %v2018 = vmul.f32 %v2014, %v272
    %v2019 = vmul.f32 %v2017, %v272
    %v2020 = vadd.f32 %v2018, 1e-12
    %v2021 = vadd.f32 %v2019, 1e-12
    %v2022 = vrsqrt.pop %v2020
    %v2023 = vrsqrt.pop %v2021
    %v2024 = vmul.f32 %v2008, %v2022
    %v2025 = vmul.f32 %v2009, %v2023
    %v2027 = vlaneseq
    %v2028 = vshrl.u32 %v2027, 7
    %v2029 = vsub.s32 0, %v2028
    %v2030 = vrot.slane %v1208, %v2029
    %v2032 = vmul.f32 %v2024, %v2030
    %v2033 = vmul.f32 %v2025, %v2030
    %v2035 = vlaneseq
    %v2036 = vshrl.u32 %v2035, 7
    %v2037 = vsub.s32 0, %v2036
    %v2038 = vrot.slane %v1209, %v2037
    %v2040 = vadd.f32 %v2032, %v2038
    %v2041 = vadd.f32 %v2033, %v2038
    %v2042 = vpack.c.bf16 %v2041, %v2040
    %v2043 = vld [vmem:[%s61] sm:$0xf]
    %v2044 = vld [vmem:[%s61 + $0x4] sm:$0xf]
    %v2045 = vld [vmem:[%s61 + $0x8] sm:$0xf]
    %v2046 = vld [vmem:[%s61 + $0xc] sm:$0xf]
    %v2047 = vld [vmem:[%s63] sm:$0x1]
    %v2049 = vlaneseq
    %v2050 = vshrl.u32 %v2049, 7
    %v2051 = vsub.s32 0, %v2050
    %v2052 = vrot.slane %v2047, %v2051
    %v2058 = vunpack.c.l.b16 %v2043
    %v2059 = vunpack.c.l.b16 %v2044
    %v2060 = vunpack.c.l.b16 %v2045
    %v2061 = vunpack.c.l.b16 %v2046
    %v2062 = vpack.c.b16 %v2059, %v2058
    %v2063 = vpack.c.b16 %v2061, %v2060
    %v2067 = vsel %vm265, %v2042, 0
    %2069 = vmatprep.subr.bf16.mxu0 0
    %2070 = vmatpush1.bf16.msra.mxu0 %v2062
    %2071 = vmatprep.subr.bf16.mxu0 0
    %2072 = vmatpush1.bf16.msra.mxu0 %v2063
    %2073 = vmatprep.subr.bf16.mxu0 0
    %2074 = vmatpush1.bf16.msra.mxu0 0
    %2075 = vmatprep.subr.bf16.mxu0 0
    %2076 = vmatpush1.bf16.msra.mxu0 0
    %2077 = vmatprep.subr.bf16.mxu0 0
    %2078 = vmatpush1.bf16.msra.mxu0 0
    %2079 = vmatprep.subr.bf16.mxu0 0
    %2080 = vmatpush1.bf16.msra.mxu0 0
    %2081 = vmatprep.subr.bf16.mxu0 0
    %2082 = vmatpush1.bf16.msra.mxu0 0
    %2083 = vmatprep.subr.bf16.mxu0 0
    %2084 = vmatpush1.bf16.msra.mxu0 0
    %2085 = vmatprep.subr.bf16.mxu0 0
    %2086 = vmatpush1.bf16.msra.mxu0 0
    %2087 = vmatprep.subr.bf16.mxu0 0
    %2088 = vmatpush1.bf16.msra.mxu0 0
    %2089 = vmatprep.subr.bf16.mxu0 0
    %2090 = vmatpush1.bf16.msra.mxu0 0
    %2091 = vmatprep.subr.bf16.mxu0 0
    %2092 = vmatpush1.bf16.msra.mxu0 0
    %2093 = vmatprep.subr.bf16.mxu0 0
    %2094 = vmatpush1.bf16.msra.mxu0 0
    %2095 = vmatprep.subr.bf16.mxu0 0
    %2096 = vmatpush1.bf16.msra.mxu0 0
    %2097 = vmatprep.subr.bf16.mxu0 0
    %2098 = vmatpush1.bf16.msra.mxu0 0
    %2099 = vmatprep.subr.bf16.mxu0 0
    %2100 = vmatpush1.bf16.msra.mxu0 0
    %2101 = vmatprep.mubr.bf16.mxu0 0
    %2102 = vmatmul.mubr.bf16.gmra.mrb[0].mxu0 %v2067
    %v2103 = vpop.f32.mrb[0].mxu0
    %v2104 = vadd.f32 %v2052, %v2103
    %v2105 = vpop.f32.mrb[0].mxu0
    %v2106 = vpop.f32.mrb[0].mxu0
    %v2107 = vadd.f32 %v2052, %v2106
    %v2108 = vpop.f32.mrb[0].mxu0
    %2109 = vdwg.mxu0
    %2110 = vmax.xlane.f32.xlu0 %v2104
    %v2111 = vpop.xlane.xlu0 %2110
    %2112 = vmax.xlane.f32.xlu0 %v2107
    %v2113 = vpop.xlane.xlu0 %2112
    %v2114 = vsub.f32 %v2104, %v2111
    %v2115 = vsub.f32 %v2107, %v2113
    %v2116 = vmul.f32 %v2114, 1.442695
    %v2117 = vpow.pop %v2116
    %v2118 = vmul.f32 %v2115, 1.442695
    %v2119 = vpow.pop %v2118
    %2120 = vadd.xlane.f32.xlu0 %v2117
    %v2121 = vpop.xlane.xlu0 %2120
    %2122 = vadd.xlane.f32.xlu0 %v2119
    %v2123 = vpop.xlane.xlu0 %2122
    %v2124 = vrcp.pop %v2121
    %v2125 = vrcp.pop %v2123
    %v2126 = vmul.f32 %v2117, %v2124
    %v2127 = vmul.f32 %v2119, %v2125
    %2128 = vst [vmem:[#allocation3] sm:$0xff] %v2126
    %2129 = vst [vmem:[#allocation3 + $0x8] sm:$0xff] %v2127
    // Predicated region
    $region130: #{tpu_custom_call.1} parent=1 // pred_check
      _
    $region131: #{tpu_custom_call.1} parent=1 // pred_check_branch
      %2131 = sbr.rel (0) target = $region133
    $region132: #{tpu_custom_call.1} parent=1 // pred_region
      %s2133 = ssub.s32 256, 256
      %2134 = vsyncadd [#allocation4], %s2133
      %s2135 = sshll.u32 [#allocation3], 4
      %s2136 = int_to_ptr.vmem [resolvable:$true] %s2135
      %2141 = dma.vmem_to_hbm [thread:$0]  %s2136, 256, %s65, [#allocation4], 128, 128, 8
    $region133: #{tpu_custom_call.1} parent=1 // pred_fallthru
      _
    // Predicated region
    $region134: #{tpu_custom_call.1} parent=1 // pred_check
      _
    $region135: #{tpu_custom_call.1} parent=1 // pred_check_branch
      %2143 = sbr.rel (0) target = $region137
    $region136: #{tpu_custom_call.1} parent=1 // pred_region
      %2144 = dma.done [#allocation4], 256
    $region137: #{tpu_custom_call.1} parent=1 // pred_fallthru
      _
    %2145 = vsyncpa [#allocation4], 1

</llo_original>
